<compile_context>
chip_gen: v5e
topology: v5e:2x2
jax: 0.10.0
libtpu: 0.0.40
codegen_flags: <defaults>
</compile_context>

<pallas_src>
import functools
import math

import jax
import jax.numpy as jnp
import numpy as np
from jax.experimental import pallas as pl
from jax.experimental.pallas import tpu as pltpu


def _layernorm(x, gamma, beta, eps):
    mean = jnp.mean(x, axis=-1, keepdims=True)
    var = jnp.mean((x - mean) ** 2, axis=-1, keepdims=True)
    return (x - mean) * jax.lax.rsqrt(var + eps) * gamma + beta


def _device_kind():
    try:
        return jax.devices()[0].device_kind.lower()
    except Exception:  # pragma: no cover - defensive
        return ""


def _default_vmem_limit():
    kind = _device_kind()
    if "v5" in kind or "v6" in kind:
        return 100 * 1024 * 1024          # 128 MiB physical VMEM
    return 56 * 1024 * 1024               # v7x: 64 MiB physical, leave headroom


def _default_tq(S):
    kind = _device_kind()
    if "v5" in kind:
        target = 64                        # keep score tiles vreg-resident
    elif "v6" in kind:
        target = 256                       # amortize per-grid-step overhead
    else:
        target = 128                       # v7x / default
    if S <= target:
        return S
    for t in range(target, 7, -1):         # largest divisor of S, sublane-aligned
        if S % t == 0 and t % 8 == 0:
            return t
    return S


# ---------------------------------------------------------------------------
# Fused kernel: out = y + MLP(LN2(y)),  y = x + Attn(LN1(x))
# grid = (batch, q_tiles).  K/V for the full sequence are produced once per
# batch element (q-tile 0) into bf16 head-major VMEM scratch and reused by
# every q tile of that batch element.
# ---------------------------------------------------------------------------
def fused_block_kernel(x_ref,
                       ln1g_ref, ln1b_ref,
                       wq_ref, bq_ref, wkv_ref, bkv_ref, wo_ref, bo_ref,
                       ln2g_ref, ln2b_ref,
                       w1_ref, b1_ref, w2_ref, b2_ref,
                       o_ref,
                       k_sc, v_sc,
                       *, num_heads, head_dim, eps, mxu_dtype):
    D = num_heads * head_dim
    S = x_ref.shape[1]
    tq = o_ref.shape[1]
    qi = pl.program_id(1)

    # ---- once per batch element: LN1 over full sequence + fused K/V --------
    @pl.when(qi == 0)
    def _():
        hf = _layernorm(x_ref[0], ln1g_ref[...], ln1b_ref[...], eps)
        kv = jnp.dot(hf.astype(mxu_dtype), wkv_ref[...],
                     preferred_element_type=jnp.float32) + bkv_ref[...]
        k = kv[:, 0:D].reshape(S, num_heads, head_dim)
        v = kv[:, D:2 * D].reshape(S, num_heads, head_dim)
        # Head-major bf16 scratch, written once; reused by every q tile.
        k_sc[...] = jnp.transpose(k, (1, 0, 2)).astype(mxu_dtype)
        v_sc[...] = jnp.transpose(v, (1, 0, 2)).astype(mxu_dtype)

    # ---- per q-tile: residual input + Q projection --------------------------
    row = pl.multiple_of(qi * tq, tq)
    xt = x_ref[0, pl.ds(row, tq), :]                    # (tq, D) f32 residual

    ht = _layernorm(xt, ln1g_ref[...], ln1b_ref[...], eps)
    q = jnp.dot(ht.astype(mxu_dtype), wq_ref[...],
                preferred_element_type=jnp.float32) + bq_ref[...]
    q = q * (1.0 / math.sqrt(head_dim))                 # softmax scale, once
    qh = q.reshape(tq, num_heads, head_dim)

    # ---- attention: bf16 MXU operands, f32 accumulation / softmax stats ----
    s = jnp.einsum("qhd,hkd->hqk", qh.astype(mxu_dtype), k_sc[...],
                   preferred_element_type=jnp.float32)  # (H, tq, S) f32
    m = jnp.max(s, axis=-1, keepdims=True)
    e = jnp.exp(s - m)                                  # unnormalized probs
    denom = jnp.sum(e, axis=-1, keepdims=True)          # (H, tq, 1)
    # Deferred normalization: PV on unnormalized exp values (bf16), scale the
    # small (tq, H, hd) result instead of the (H, tq, S) probability matrix.
    pv = jnp.einsum("hqk,hkd->qhd", e.astype(mxu_dtype), v_sc[...],
                    preferred_element_type=jnp.float32)  # (tq, H, hd) f32
    inv = pl.reciprocal(denom, approx=True)              # EUP, not VPU divide
    attn = (pv * jnp.transpose(inv, (1, 0, 2))).reshape(tq, D)

    x1 = xt + jnp.dot(attn.astype(mxu_dtype), wo_ref[...],
                      preferred_element_type=jnp.float32) + bo_ref[...]

    # ---- MLP branch ----------------------------------------------------------
    h = _layernorm(x1, ln2g_ref[...], ln2b_ref[...], eps)
    h1 = jnp.dot(h.astype(mxu_dtype), w1_ref[...],
                 preferred_element_type=jnp.float32) + b1_ref[...]
    a = h1 * jax.nn.sigmoid(1.702 * h1)                 # quick_gelu (f32)
    h2 = jnp.dot(a.astype(mxu_dtype), w2_ref[...],
                 preferred_element_type=jnp.float32) + b2_ref[...]

    o_ref[0] = (x1 + h2).astype(o_ref.dtype)            # lane-dense store


# ---------------------------------------------------------------------------
# Wrapper
# ---------------------------------------------------------------------------
def residual_attention_block(x, p, *, num_heads, head_dim, eps=1e-5,
                             tq=None, mxu_dtype=jnp.bfloat16,
                             vmem_limit_bytes=None):
    B, S, D = x.shape
    assert D == num_heads * head_dim
    M = p["w1"].shape[1]

    if tq is None:
        tq = _default_tq(S)
    assert S % tq == 0, "sequence length must be a multiple of the q tile"
    nq = S // tq

    if vmem_limit_bytes is None:
        vmem_limit_bytes = _default_vmem_limit()

    # Weight prep: bf16 matmul weights, fused K/V projection, f32 biases.
    wq = p["wq"].astype(mxu_dtype)
    wkv = jnp.concatenate([p["wk"], p["wv"]], axis=1).astype(mxu_dtype)
    bkv = jnp.concatenate([p["bk"], p["bv"]], axis=1)
    wo = p["wo"].astype(mxu_dtype)
    w1 = p["w1"].astype(mxu_dtype)
    w2 = p["w2"].astype(mxu_dtype)

    def rep(shape):
        # Grid-invariant (weights / biases / LN params): single-buffered —
        # the block index never changes, so double-buffering only doubles VMEM.
        return pl.BlockSpec(shape, lambda b, t: (0, 0),
                            pipeline_mode=pl.Buffered(1))

    x_spec = pl.BlockSpec((1, S, D), lambda b, t: (b, 0, 0))
    out_spec = pl.BlockSpec((1, tq, D), lambda b, t: (b, t, 0))

    kernel = functools.partial(fused_block_kernel, num_heads=num_heads,
                               head_dim=head_dim, eps=eps, mxu_dtype=mxu_dtype)

    return pl.pallas_call(
        kernel,
        out_shape=jax.ShapeDtypeStruct((B, S, D), x.dtype),
        grid=(B, nq),
        in_specs=[x_spec,
                  rep((1, D)), rep((1, D)),              # ln1 gamma, beta
                  rep((D, D)), rep((1, D)),              # wq, bq
                  rep((D, 2 * D)), rep((1, 2 * D)),      # wkv, bkv
                  rep((D, D)), rep((1, D)),              # wo, bo
                  rep((1, D)), rep((1, D)),              # ln2 gamma, beta
                  rep((D, M)), rep((1, M)),              # w1, b1
                  rep((M, D)), rep((1, D))],             # w2, b2
        out_specs=out_spec,
        scratch_shapes=[pltpu.VMEM((num_heads, S, head_dim), mxu_dtype),  # K
                        pltpu.VMEM((num_heads, S, head_dim), mxu_dtype)], # V
        compiler_params=pltpu.CompilerParams(
            dimension_semantics=("parallel", "arbitrary"),
            vmem_limit_bytes=vmem_limit_bytes),
    )(x,
      p["ln1_g"], p["ln1_b"],
      wq, p["bq"], wkv, bkv, wo, p["bo"],
      p["ln2_g"], p["ln2_b"],
      w1, p["b1"], w2, p["b2"])


# ---------------------------------------------------------------------------
# Pure-JAX f32 reference (mirrors the PyTorch forward pass semantics)
# ---------------------------------------------------------------------------
def ref_block(x, p, *, num_heads, head_dim, eps=1e-5):
    B, S, D = x.shape
    h = _layernorm(x, p["ln1_g"][0], p["ln1_b"][0], eps)
    q = h @ p["wq"] + p["bq"][0]
    k = h @ p["wk"] + p["bk"][0]
    v = h @ p["wv"] + p["bv"][0]
    q = q.reshape(B, S, num_heads, head_dim)
    k = k.reshape(B, S, num_heads, head_dim)
    v = v.reshape(B, S, num_heads, head_dim)
    s = jnp.einsum("bqhd,bkhd->bhqk", q / math.sqrt(head_dim), k)
    w = jax.nn.softmax(s.astype(jnp.float32), axis=-1)
    a = jnp.einsum("bhqk,bkhd->bqhd", w, v).reshape(B, S, D)
    x = x + (a @ p["wo"] + p["bo"][0])
    h = _layernorm(x, p["ln2_g"][0], p["ln2_b"][0], eps)
    h1 = h @ p["w1"] + p["b1"][0]
    a = h1 * jax.nn.sigmoid(1.702 * h1)
    return x + (a @ p["w2"] + p["b2"][0])


# ---------------------------------------------------------------------------
if __name__ == "__main__":
    # Small synthetic config consistent with the module:
    #   image_emb_dim=128 (lane-dense), image_num_heads=4, image_head_dim=32,
    #   image_num_key_value_heads=4 (MHA), image_mlp_dim=512, seq=16, batch=2.
    # tq=8 -> 2 q tiles per batch element, exercising the tiled grid path.
    B, S, D = 2, 16, 128
    H, HD = 4, 32
    M = 512
    eps = 1e-5
    init_std = 0.02

    key = jax.random.PRNGKey(0)
    ks = jax.random.split(key, 16)

    p = {
        "ln1_g": 1.0 + 0.1 * jax.random.normal(ks[0], (1, D), jnp.float32),
        "ln1_b": 0.05 * jax.random.normal(ks[1], (1, D), jnp.float32),
        "wq": init_std * jax.random.normal(ks[2], (D, D), jnp.float32),
        "bq": 0.01 * jax.random.normal(ks[3], (1, D), jnp.float32),
        "wk": init_std * jax.random.normal(ks[4], (D, D), jnp.float32),
        "bk": 0.01 * jax.random.normal(ks[5], (1, D), jnp.float32),
        "wv": init_std * jax.random.normal(ks[6], (D, D), jnp.float32),
        "bv": 0.01 * jax.random.normal(ks[7], (1, D), jnp.float32),
        "wo": init_std * jax.random.normal(ks[8], (D, D), jnp.float32),
        "bo": 0.01 * jax.random.normal(ks[9], (1, D), jnp.float32),
        "ln2_g": 1.0 + 0.1 * jax.random.normal(ks[10], (1, D), jnp.float32),
        "ln2_b": 0.05 * jax.random.normal(ks[11], (1, D), jnp.float32),
        "w1": math.sqrt(1.0 / D) * jax.random.truncated_normal(
            ks[12], -2.0, 2.0, (D, M), jnp.float32),
        "b1": 0.01 * jax.random.normal(ks[13], (1, M), jnp.float32),
        "w2": math.sqrt(1.0 / M) * jax.random.truncated_normal(
            ks[14], -2.0, 2.0, (M, D), jnp.float32),
        "b2": 0.01 * jax.random.normal(ks[15], (1, D), jnp.float32),
    }

    x = jax.random.normal(jax.random.PRNGKey(42), (B, S, D), jnp.float32)

    out = residual_attention_block(x, p, num_heads=H, head_dim=HD, eps=eps, tq=8)
    out = jax.block_until_ready(out)

    ref = jax.block_until_ready(ref_block(x, p, num_heads=H, head_dim=HD, eps=eps))
    # Tolerance loosened vs. pure-f32 because MXU matmul inputs (including the
    # attention score / PV operands) are bf16; accumulation, softmax stats,
    # LayerNorm, quick_gelu and residuals remain f32.
    np.testing.assert_allclose(np.asarray(out), np.asarray(ref),
                               rtol=2e-2, atol=2e-2)

    print("KERNEL_OK")
</pallas_src>

<mosaic_0001>
module attributes {stable_mosaic.version = 11 : i64} {
  func.func @fused_block_kernel(%arg0: i32, %arg1: i32, %arg2: memref<1x16x128xf32, #tpu.memory_space<vmem>>, %arg3: memref<1x128xf32, #tpu.memory_space<vmem>>, %arg4: memref<1x128xf32, #tpu.memory_space<vmem>>, %arg5: memref<128x128xbf16, #tpu.memory_space<vmem>>, %arg6: memref<1x128xf32, #tpu.memory_space<vmem>>, %arg7: memref<128x256xbf16, #tpu.memory_space<vmem>>, %arg8: memref<1x256xf32, #tpu.memory_space<vmem>>, %arg9: memref<128x128xbf16, #tpu.memory_space<vmem>>, %arg10: memref<1x128xf32, #tpu.memory_space<vmem>>, %arg11: memref<1x128xf32, #tpu.memory_space<vmem>>, %arg12: memref<1x128xf32, #tpu.memory_space<vmem>>, %arg13: memref<128x512xbf16, #tpu.memory_space<vmem>>, %arg14: memref<1x512xf32, #tpu.memory_space<vmem>>, %arg15: memref<512x128xbf16, #tpu.memory_space<vmem>>, %arg16: memref<1x128xf32, #tpu.memory_space<vmem>>, %arg17: memref<1x8x128xf32, #tpu.memory_space<vmem>>, %arg18: memref<4x16x32xbf16, #tpu.memory_space<vmem>>, %arg19: memref<4x16x32xbf16, #tpu.memory_space<vmem>>) attributes {dimension_semantics = [#tpu.dimension_semantics<parallel>, #tpu.dimension_semantics<arbitrary>], iteration_bounds = array<i64: 2, 2>, scalar_prefetch = 0 : i64, scratch_operands = 2 : i64, tpu.core_type = #tpu.core_type<tc>, window_params = [{transform_indices = @transform_0, window_bounds = array<i64: 1, 16, 128>}, {pipeline_mode = #tpu.pipeline_mode<synchronous>, transform_indices = @transform_1, window_bounds = array<i64: 1, 128>}, {pipeline_mode = #tpu.pipeline_mode<synchronous>, transform_indices = @transform_2, window_bounds = array<i64: 1, 128>}, {pipeline_mode = #tpu.pipeline_mode<synchronous>, transform_indices = @transform_3, window_bounds = array<i64: 128, 128>}, {pipeline_mode = #tpu.pipeline_mode<synchronous>, transform_indices = @transform_4, window_bounds = array<i64: 1, 128>}, {pipeline_mode = #tpu.pipeline_mode<synchronous>, transform_indices = @transform_5, window_bounds = array<i64: 128, 256>}, {pipeline_mode = #tpu.pipeline_mode<synchronous>, transform_indices = @transform_6, window_bounds = array<i64: 1, 256>}, {pipeline_mode = #tpu.pipeline_mode<synchronous>, transform_indices = @transform_7, window_bounds = array<i64: 128, 128>}, {pipeline_mode = #tpu.pipeline_mode<synchronous>, transform_indices = @transform_8, window_bounds = array<i64: 1, 128>}, {pipeline_mode = #tpu.pipeline_mode<synchronous>, transform_indices = @transform_9, window_bounds = array<i64: 1, 128>}, {pipeline_mode = #tpu.pipeline_mode<synchronous>, transform_indices = @transform_10, window_bounds = array<i64: 1, 128>}, {pipeline_mode = #tpu.pipeline_mode<synchronous>, transform_indices = @transform_11, window_bounds = array<i64: 128, 512>}, {pipeline_mode = #tpu.pipeline_mode<synchronous>, transform_indices = @transform_12, window_bounds = array<i64: 1, 512>}, {pipeline_mode = #tpu.pipeline_mode<synchronous>, transform_indices = @transform_13, window_bounds = array<i64: 512, 128>}, {pipeline_mode = #tpu.pipeline_mode<synchronous>, transform_indices = @transform_14, window_bounds = array<i64: 1, 128>}, {transform_indices = @transform_15, window_bounds = array<i64: 1, 8, 128>}]} {
    %c0_i32 = arith.constant 0 : i32
    %0 = arith.cmpi eq, %arg1, %c0_i32 : i32
    %1 = arith.extui %0 : i1 to i32
    %c0_i32_0 = arith.constant 0 : i32
    %2 = arith.cmpi ne, %1, %c0_i32_0 : i32
    scf.if %2 {
      %c0_55 = arith.constant 0 : index
      %c0_56 = arith.constant 0 : index
      %c0_57 = arith.constant 0 : index
      %115 = vector.load %arg2[%c0_55, %c0_56, %c0_57] : memref<1x16x128xf32, #tpu.memory_space<vmem>>, vector<1x16x128xf32>
      %116 = vector.shape_cast %115 : vector<1x16x128xf32> to vector<16x128xf32>
      %c0_58 = arith.constant 0 : index
      %c0_59 = arith.constant 0 : index
      %117 = vector.load %arg3[%c0_58, %c0_59] : memref<1x128xf32, #tpu.memory_space<vmem>>, vector<1x128xf32>
      %c0_60 = arith.constant 0 : index
      %c0_61 = arith.constant 0 : index
      %118 = vector.load %arg4[%c0_60, %c0_61] : memref<1x128xf32, #tpu.memory_space<vmem>>, vector<1x128xf32>
      %cst_62 = arith.constant dense<0.000000e+00> : vector<16xf32>
      %119 = vector.multi_reduction <add>, %116, %cst_62 [1] : vector<16x128xf32> to vector<16xf32>
      %120 = vector.shape_cast %119 : vector<16xf32> to vector<16x1xf32>
      %cst_63 = arith.constant 1.280000e+02 : f32
      %121 = vector.broadcast %cst_63 : f32 to vector<16x1xf32>
      %122 = arith.divf %120, %121 : vector<16x1xf32>
      %123 = vector.broadcast %122 : vector<16x1xf32> to vector<16x128xf32>
      %124 = arith.subf %116, %123 : vector<16x128xf32>
      %125 = arith.mulf %124, %124 : vector<16x128xf32>
      %cst_64 = arith.constant dense<0.000000e+00> : vector<16xf32>
      %126 = vector.multi_reduction <add>, %125, %cst_64 [1] : vector<16x128xf32> to vector<16xf32>
      %127 = vector.shape_cast %126 : vector<16xf32> to vector<16x1xf32>
      %cst_65 = arith.constant 1.280000e+02 : f32
      %128 = vector.broadcast %cst_65 : f32 to vector<16x1xf32>
      %129 = arith.divf %127, %128 : vector<16x1xf32>
      %130 = vector.broadcast %122 : vector<16x1xf32> to vector<16x128xf32>
      %131 = arith.subf %116, %130 : vector<16x128xf32>
      %cst_66 = arith.constant 9.99999974E-6 : f32
      %132 = vector.broadcast %cst_66 : f32 to vector<16x1xf32>
      %133 = arith.addf %129, %132 : vector<16x1xf32>
      %134 = math.rsqrt %133 : vector<16x1xf32>
      %135 = vector.broadcast %134 : vector<16x1xf32> to vector<16x128xf32>
      %136 = arith.mulf %131, %135 : vector<16x128xf32>
      %137 = vector.broadcast %117 : vector<1x128xf32> to vector<16x128xf32>
      %138 = arith.mulf %136, %137 : vector<16x128xf32>
      %139 = vector.broadcast %118 : vector<1x128xf32> to vector<16x128xf32>
      %140 = arith.addf %138, %139 : vector<16x128xf32>
      %141 = arith.truncf %140 : vector<16x128xf32> to vector<16x128xbf16>
      %c0_67 = arith.constant 0 : index
      %c0_68 = arith.constant 0 : index
      %142 = vector.load %arg7[%c0_67, %c0_68] : memref<128x256xbf16, #tpu.memory_space<vmem>>, vector<128x256xbf16>
      %cst_69 = arith.constant dense<0.000000e+00> : vector<16x256xf32>
      %143 = tpu.matmul %141, %142, %cst_69 {dimension_numbers = #tpu.dot_dimension_numbers<[1], [0], [0], [1], [0, 0, 1, 1], [], []>} : vector<16x128xbf16>, vector<128x256xbf16>, vector<16x256xf32> -> vector<16x256xf32>
      %c0_70 = arith.constant 0 : index
      %c0_71 = arith.constant 0 : index
      %144 = vector.load %arg8[%c0_70, %c0_71] : memref<1x256xf32, #tpu.memory_space<vmem>>, vector<1x256xf32>
      %145 = vector.broadcast %144 : vector<1x256xf32> to vector<16x256xf32>
      %146 = arith.addf %143, %145 : vector<16x256xf32>
      %147 = vector.extract_strided_slice %146 {offsets = [0, 0], sizes = [16, 128], strides = [1, 1]} : vector<16x256xf32> to vector<16x128xf32>
      %148 = vector.shape_cast %147 : vector<16x128xf32> to vector<16x4x32xf32>
      %149 = vector.extract_strided_slice %146 {offsets = [0, 128], sizes = [16, 128], strides = [1, 1]} : vector<16x256xf32> to vector<16x128xf32>
      %150 = vector.shape_cast %149 : vector<16x128xf32> to vector<16x4x32xf32>
      %151 = tpu.transpose %148, [1, 0, 2] : vector<16x4x32xf32> -> vector<4x16x32xf32>
      %152 = arith.truncf %151 : vector<4x16x32xf32> to vector<4x16x32xbf16>
      %c0_72 = arith.constant 0 : index
      %c0_73 = arith.constant 0 : index
      %c0_74 = arith.constant 0 : index
      %153 = vector.load %arg18[%c0_72, %c0_73, %c0_74] : memref<4x16x32xbf16, #tpu.memory_space<vmem>>, vector<4x16x32xbf16>
      tpu.vector_store %arg18[%c0_72, %c0_73, %c0_74], %152 {strides = array<i32>} : memref<4x16x32xbf16, #tpu.memory_space<vmem>>, vector<4x16x32xbf16>,
      %154 = tpu.transpose %150, [1, 0, 2] : vector<16x4x32xf32> -> vector<4x16x32xf32>
      %155 = arith.truncf %154 : vector<4x16x32xf32> to vector<4x16x32xbf16>
      %c0_75 = arith.constant 0 : index
      %c0_76 = arith.constant 0 : index
      %c0_77 = arith.constant 0 : index
      %156 = vector.load %arg19[%c0_75, %c0_76, %c0_77] : memref<4x16x32xbf16, #tpu.memory_space<vmem>>, vector<4x16x32xbf16>
      tpu.vector_store %arg19[%c0_75, %c0_76, %c0_77], %155 {strides = array<i32>} : memref<4x16x32xbf16, #tpu.memory_space<vmem>>, vector<4x16x32xbf16>,
    } else {
    }
    %c8_i32 = arith.constant 8 : i32
    %3 = arith.muli %arg1, %c8_i32 : i32
    %4 = tpu.assume_multiple %3, 8 : i32
    %c0 = arith.constant 0 : index
    %5 = arith.index_cast %4 : i32 to index
    %c0_1 = arith.constant 0 : index
    %6 = vector.load %arg2[%c0, %5, %c0_1] : memref<1x16x128xf32, #tpu.memory_space<vmem>>, vector<1x8x128xf32>
    %7 = vector.shape_cast %6 : vector<1x8x128xf32> to vector<8x128xf32>
    %c0_2 = arith.constant 0 : index
    %c0_3 = arith.constant 0 : index
    %8 = vector.load %arg3[%c0_2, %c0_3] : memref<1x128xf32, #tpu.memory_space<vmem>>, vector<1x128xf32>
    %c0_4 = arith.constant 0 : index
    %c0_5 = arith.constant 0 : index
    %9 = vector.load %arg4[%c0_4, %c0_5] : memref<1x128xf32, #tpu.memory_space<vmem>>, vector<1x128xf32>
    %cst = arith.constant dense<0.000000e+00> : vector<8xf32>
    %10 = vector.multi_reduction <add>, %7, %cst [1] : vector<8x128xf32> to vector<8xf32>
    %11 = vector.shape_cast %10 : vector<8xf32> to vector<8x1xf32>
    %cst_6 = arith.constant 1.280000e+02 : f32
    %12 = vector.broadcast %cst_6 : f32 to vector<8x1xf32>
    %13 = arith.divf %11, %12 : vector<8x1xf32>
    %14 = vector.broadcast %13 : vector<8x1xf32> to vector<8x128xf32>
    %15 = arith.subf %7, %14 : vector<8x128xf32>
    %16 = arith.mulf %15, %15 : vector<8x128xf32>
    %cst_7 = arith.constant dense<0.000000e+00> : vector<8xf32>
    %17 = vector.multi_reduction <add>, %16, %cst_7 [1] : vector<8x128xf32> to vector<8xf32>
    %18 = vector.shape_cast %17 : vector<8xf32> to vector<8x1xf32>
    %cst_8 = arith.constant 1.280000e+02 : f32
    %19 = vector.broadcast %cst_8 : f32 to vector<8x1xf32>
    %20 = arith.divf %18, %19 : vector<8x1xf32>
    %21 = vector.broadcast %13 : vector<8x1xf32> to vector<8x128xf32>
    %22 = arith.subf %7, %21 : vector<8x128xf32>
    %cst_9 = arith.constant 9.99999974E-6 : f32
    %23 = vector.broadcast %cst_9 : f32 to vector<8x1xf32>
    %24 = arith.addf %20, %23 : vector<8x1xf32>
    %25 = math.rsqrt %24 : vector<8x1xf32>
    %26 = vector.broadcast %25 : vector<8x1xf32> to vector<8x128xf32>
    %27 = arith.mulf %22, %26 : vector<8x128xf32>
    %28 = vector.broadcast %8 : vector<1x128xf32> to vector<8x128xf32>
    %29 = arith.mulf %27, %28 : vector<8x128xf32>
    %30 = vector.broadcast %9 : vector<1x128xf32> to vector<8x128xf32>
    %31 = arith.addf %29, %30 : vector<8x128xf32>
    %32 = arith.truncf %31 : vector<8x128xf32> to vector<8x128xbf16>
    %c0_10 = arith.constant 0 : index
    %c0_11 = arith.constant 0 : index
    %33 = vector.load %arg5[%c0_10, %c0_11] : memref<128x128xbf16, #tpu.memory_space<vmem>>, vector<128x128xbf16>
    %cst_12 = arith.constant dense<0.000000e+00> : vector<8x128xf32>
    %34 = tpu.matmul %32, %33, %cst_12 {dimension_numbers = #tpu.dot_dimension_numbers<[1], [0], [0], [1], [0, 0, 1, 1], [], []>} : vector<8x128xbf16>, vector<128x128xbf16>, vector<8x128xf32> -> vector<8x128xf32>
    %c0_13 = arith.constant 0 : index
    %c0_14 = arith.constant 0 : index
    %35 = vector.load %arg6[%c0_13, %c0_14] : memref<1x128xf32, #tpu.memory_space<vmem>>, vector<1x128xf32>
    %36 = vector.broadcast %35 : vector<1x128xf32> to vector<8x128xf32>
    %37 = arith.addf %34, %36 : vector<8x128xf32>
    %cst_15 = arith.constant 0.176776692 : f32
    %38 = vector.broadcast %cst_15 : f32 to vector<8x128xf32>
    %39 = arith.mulf %37, %38 : vector<8x128xf32>
    %40 = vector.shape_cast %39 : vector<8x128xf32> to vector<8x4x32xf32>
    %41 = arith.truncf %40 : vector<8x4x32xf32> to vector<8x4x32xbf16>
    %c0_16 = arith.constant 0 : index
    %c0_17 = arith.constant 0 : index
    %c0_18 = arith.constant 0 : index
    %42 = vector.load %arg18[%c0_16, %c0_17, %c0_18] : memref<4x16x32xbf16, #tpu.memory_space<vmem>>, vector<4x16x32xbf16>
    "tpu.trace_start"() <{level = 10 : i32, message = "qhd,hkd->hqk"}> : () -> ()
    %cst_19 = arith.constant dense<0.000000e+00> : vector<4x8x16xf32>
    %43 = tpu.matmul %41, %42, %cst_19 {dimension_numbers = #tpu.dot_dimension_numbers<[2], [2], [0], [1], [0, 1, 0, 0, 1, 1], [1], [0]>} : vector<8x4x32xbf16>, vector<4x16x32xbf16>, vector<4x8x16xf32> -> vector<4x8x16xf32>
    "tpu.trace_stop"() : () -> ()
    %cst_20 = arith.constant dense<0xFF800000> : vector<4x8xf32>
    %44 = vector.multi_reduction <maximumf>, %43, %cst_20 [2] : vector<4x8x16xf32> to vector<4x8xf32>
    %45 = vector.shape_cast %44 : vector<4x8xf32> to vector<4x8x1xf32>
    %46 = vector.broadcast %45 : vector<4x8x1xf32> to vector<4x8x16xf32>
    %47 = arith.subf %43, %46 : vector<4x8x16xf32>
    %48 = math.exp %47 : vector<4x8x16xf32>
    %cst_21 = arith.constant dense<0.000000e+00> : vector<4x8xf32>
    %49 = vector.multi_reduction <add>, %48, %cst_21 [2] : vector<4x8x16xf32> to vector<4x8xf32>
    %50 = vector.shape_cast %49 : vector<4x8xf32> to vector<4x8x1xf32>
    %51 = arith.truncf %48 : vector<4x8x16xf32> to vector<4x8x16xbf16>
    %c0_22 = arith.constant 0 : index
    %c0_23 = arith.constant 0 : index
    %c0_24 = arith.constant 0 : index
    %52 = vector.load %arg19[%c0_22, %c0_23, %c0_24] : memref<4x16x32xbf16, #tpu.memory_space<vmem>>, vector<4x16x32xbf16>
    "tpu.trace_start"() <{level = 10 : i32, message = "hqk,hkd->qhd"}> : () -> ()
    %cst_25 = arith.constant dense<0.000000e+00> : vector<4x32x8xf32>
    %53 = tpu.matmul %52, %51, %cst_25 {dimension_numbers = #tpu.dot_dimension_numbers<[1], [2], [2], [1], [0, 0, 0, 2, 1, 1], [0], [0]>} : vector<4x16x32xbf16>, vector<4x8x16xbf16>, vector<4x32x8xf32> -> vector<4x32x8xf32>
    %54 = tpu.transpose %53, [2, 0, 1] : vector<4x32x8xf32> -> vector<8x4x32xf32>
    "tpu.trace_stop"() : () -> ()
    %55 = tpu.reciprocal %50 {approx = true} : vector<4x8x1xf32> -> vector<4x8x1xf32>
    %56 = tpu.transpose %55, [1, 0, 2] : vector<4x8x1xf32> -> vector<8x4x1xf32>
    %57 = vector.broadcast %56 : vector<8x4x1xf32> to vector<8x4x32xf32>
    %58 = arith.mulf %54, %57 : vector<8x4x32xf32>
    %59 = vector.shape_cast %58 : vector<8x4x32xf32> to vector<8x128xf32>
    %60 = arith.truncf %59 : vector<8x128xf32> to vector<8x128xbf16>
    %c0_26 = arith.constant 0 : index
    %c0_27 = arith.constant 0 : index
    %61 = vector.load %arg9[%c0_26, %c0_27] : memref<128x128xbf16, #tpu.memory_space<vmem>>, vector<128x128xbf16>
    %cst_28 = arith.constant dense<0.000000e+00> : vector<8x128xf32>
    %62 = tpu.matmul %60, %61, %cst_28 {dimension_numbers = #tpu.dot_dimension_numbers<[1], [0], [0], [1], [0, 0, 1, 1], [], []>} : vector<8x128xbf16>, vector<128x128xbf16>, vector<8x128xf32> -> vector<8x128xf32>
    %63 = arith.addf %7, %62 : vector<8x128xf32>
    %c0_29 = arith.constant 0 : index
    %c0_30 = arith.constant 0 : index
    %64 = vector.load %arg10[%c0_29, %c0_30] : memref<1x128xf32, #tpu.memory_space<vmem>>, vector<1x128xf32>
    %65 = vector.broadcast %64 : vector<1x128xf32> to vector<8x128xf32>
    %66 = arith.addf %63, %65 : vector<8x128xf32>
    %c0_31 = arith.constant 0 : index
    %c0_32 = arith.constant 0 : index
    %67 = vector.load %arg11[%c0_31, %c0_32] : memref<1x128xf32, #tpu.memory_space<vmem>>, vector<1x128xf32>
    %c0_33 = arith.constant 0 : index
    %c0_34 = arith.constant 0 : index
    %68 = vector.load %arg12[%c0_33, %c0_34] : memref<1x128xf32, #tpu.memory_space<vmem>>, vector<1x128xf32>
    %cst_35 = arith.constant dense<0.000000e+00> : vector<8xf32>
    %69 = vector.multi_reduction <add>, %66, %cst_35 [1] : vector<8x128xf32> to vector<8xf32>
    %70 = vector.shape_cast %69 : vector<8xf32> to vector<8x1xf32>
    %cst_36 = arith.constant 1.280000e+02 : f32
    %71 = vector.broadcast %cst_36 : f32 to vector<8x1xf32>
    %72 = arith.divf %70, %71 : vector<8x1xf32>
    %73 = vector.broadcast %72 : vector<8x1xf32> to vector<8x128xf32>
    %74 = arith.subf %66, %73 : vector<8x128xf32>
    %75 = arith.mulf %74, %74 : vector<8x128xf32>
    %cst_37 = arith.constant dense<0.000000e+00> : vector<8xf32>
    %76 = vector.multi_reduction <add>, %75, %cst_37 [1] : vector<8x128xf32> to vector<8xf32>
    %77 = vector.shape_cast %76 : vector<8xf32> to vector<8x1xf32>
    %cst_38 = arith.constant 1.280000e+02 : f32
    %78 = vector.broadcast %cst_38 : f32 to vector<8x1xf32>
    %79 = arith.divf %77, %78 : vector<8x1xf32>
    %80 = vector.broadcast %72 : vector<8x1xf32> to vector<8x128xf32>
    %81 = arith.subf %66, %80 : vector<8x128xf32>
    %cst_39 = arith.constant 9.99999974E-6 : f32
    %82 = vector.broadcast %cst_39 : f32 to vector<8x1xf32>
    %83 = arith.addf %79, %82 : vector<8x1xf32>
    %84 = math.rsqrt %83 : vector<8x1xf32>
    %85 = vector.broadcast %84 : vector<8x1xf32> to vector<8x128xf32>
    %86 = arith.mulf %81, %85 : vector<8x128xf32>
    %87 = vector.broadcast %67 : vector<1x128xf32> to vector<8x128xf32>
    %88 = arith.mulf %86, %87 : vector<8x128xf32>
    %89 = vector.broadcast %68 : vector<1x128xf32> to vector<8x128xf32>
    %90 = arith.addf %88, %89 : vector<8x128xf32>
    %91 = arith.truncf %90 : vector<8x128xf32> to vector<8x128xbf16>
    %c0_40 = arith.constant 0 : index
    %c0_41 = arith.constant 0 : index
    %92 = vector.load %arg13[%c0_40, %c0_41] : memref<128x512xbf16, #tpu.memory_space<vmem>>, vector<128x512xbf16>
    %cst_42 = arith.constant dense<0.000000e+00> : vector<8x512xf32>
    %93 = tpu.matmul %91, %92, %cst_42 {dimension_numbers = #tpu.dot_dimension_numbers<[1], [0], [0], [1], [0, 0, 1, 1], [], []>} : vector<8x128xbf16>, vector<128x512xbf16>, vector<8x512xf32> -> vector<8x512xf32>
    %c0_43 = arith.constant 0 : index
    %c0_44 = arith.constant 0 : index
    %94 = vector.load %arg14[%c0_43, %c0_44] : memref<1x512xf32, #tpu.memory_space<vmem>>, vector<1x512xf32>
    %95 = vector.broadcast %94 : vector<1x512xf32> to vector<8x512xf32>
    %96 = arith.addf %93, %95 : vector<8x512xf32>
    %cst_45 = arith.constant 1.702000e+00 : f32
    %97 = vector.broadcast %cst_45 : f32 to vector<8x512xf32>
    %98 = arith.mulf %97, %96 : vector<8x512xf32>
    %99 = arith.negf %98 : vector<8x512xf32>
    %100 = math.exp %99 : vector<8x512xf32>
    %cst_46 = arith.constant 1.000000e+00 : f32
    %101 = vector.broadcast %cst_46 : f32 to vector<8x512xf32>
    %102 = arith.addf %101, %100 : vector<8x512xf32>
    %103 = arith.divf %101, %102 : vector<8x512xf32>
    %104 = arith.mulf %96, %103 : vector<8x512xf32>
    %105 = arith.truncf %104 : vector<8x512xf32> to vector<8x512xbf16>
    %c0_47 = arith.constant 0 : index
    %c0_48 = arith.constant 0 : index
    %106 = vector.load %arg15[%c0_47, %c0_48] : memref<512x128xbf16, #tpu.memory_space<vmem>>, vector<512x128xbf16>
    %cst_49 = arith.constant dense<0.000000e+00> : vector<8x128xf32>
    %107 = tpu.matmul %105, %106, %cst_49 {dimension_numbers = #tpu.dot_dimension_numbers<[1], [0], [0], [1], [0, 0, 1, 1], [], []>} : vector<8x512xbf16>, vector<512x128xbf16>, vector<8x128xf32> -> vector<8x128xf32>
    %c0_50 = arith.constant 0 : index
    %c0_51 = arith.constant 0 : index
    %108 = vector.load %arg16[%c0_50, %c0_51] : memref<1x128xf32, #tpu.memory_space<vmem>>, vector<1x128xf32>
    %109 = vector.broadcast %108 : vector<1x128xf32> to vector<8x128xf32>
    %110 = arith.addf %107, %109 : vector<8x128xf32>
    %111 = arith.addf %66, %110 : vector<8x128xf32>
    %c0_52 = arith.constant 0 : index
    %c0_53 = arith.constant 0 : index
    %c0_54 = arith.constant 0 : index
    %112 = vector.load %arg17[%c0_52, %c0_53, %c0_54] : memref<1x8x128xf32, #tpu.memory_space<vmem>>, vector<1x8x128xf32>
    %113 = vector.shape_cast %112 : vector<1x8x128xf32> to vector<8x128xf32>
    %114 = vector.shape_cast %111 : vector<8x128xf32> to vector<1x8x128xf32>
    tpu.vector_store %arg17[%c0_52, %c0_53, %c0_54], %114 {strides = array<i32>} : memref<1x8x128xf32, #tpu.memory_space<vmem>>, vector<1x8x128xf32>,
    return
  }
  func.func @transform_0(%arg0: i32, %arg1: i32) -> (i32, i32, i32) {
    %c0_i32 = arith.constant 0 : i32
    %c0_i32_0 = arith.constant 0 : i32
    %c0_i32_1 = arith.constant 0 : i32
    return %arg0, %c0_i32, %c0_i32_0 : i32, i32, i32
  }
  func.func @transform_1(%arg0: i32, %arg1: i32) -> (i32, i32) {
    %c0_i32 = arith.constant 0 : i32
    %c0_i32_0 = arith.constant 0 : i32
    %c0_i32_1 = arith.constant 0 : i32
    return %c0_i32, %c0_i32_0 : i32, i32
  }
  func.func @transform_2(%arg0: i32, %arg1: i32) -> (i32, i32) {
    %c0_i32 = arith.constant 0 : i32
    %c0_i32_0 = arith.constant 0 : i32
    %c0_i32_1 = arith.constant 0 : i32
    return %c0_i32, %c0_i32_0 : i32, i32
  }
  func.func @transform_3(%arg0: i32, %arg1: i32) -> (i32, i32) {
    %c0_i32 = arith.constant 0 : i32
    %c0_i32_0 = arith.constant 0 : i32
    %c0_i32_1 = arith.constant 0 : i32
    return %c0_i32, %c0_i32_0 : i32, i32
  }
  func.func @transform_4(%arg0: i32, %arg1: i32) -> (i32, i32) {
    %c0_i32 = arith.constant 0 : i32
    %c0_i32_0 = arith.constant 0 : i32
    %c0_i32_1 = arith.constant 0 : i32
    return %c0_i32, %c0_i32_0 : i32, i32
  }
  func.func @transform_5(%arg0: i32, %arg1: i32) -> (i32, i32) {
    %c0_i32 = arith.constant 0 : i32
    %c0_i32_0 = arith.constant 0 : i32
    %c0_i32_1 = arith.constant 0 : i32
    return %c0_i32, %c0_i32_0 : i32, i32
  }
  func.func @transform_6(%arg0: i32, %arg1: i32) -> (i32, i32) {
    %c0_i32 = arith.constant 0 : i32
    %c0_i32_0 = arith.constant 0 : i32
    %c0_i32_1 = arith.constant 0 : i32
    return %c0_i32, %c0_i32_0 : i32, i32
  }
  func.func @transform_7(%arg0: i32, %arg1: i32) -> (i32, i32) {
    %c0_i32 = arith.constant 0 : i32
    %c0_i32_0 = arith.constant 0 : i32
    %c0_i32_1 = arith.constant 0 : i32
    return %c0_i32, %c0_i32_0 : i32, i32
  }
  func.func @transform_8(%arg0: i32, %arg1: i32) -> (i32, i32) {
    %c0_i32 = arith.constant 0 : i32
    %c0_i32_0 = arith.constant 0 : i32
    %c0_i32_1 = arith.constant 0 : i32
    return %c0_i32, %c0_i32_0 : i32, i32
  }
  func.func @transform_9(%arg0: i32, %arg1: i32) -> (i32, i32) {
    %c0_i32 = arith.constant 0 : i32
    %c0_i32_0 = arith.constant 0 : i32
    %c0_i32_1 = arith.constant 0 : i32
    return %c0_i32, %c0_i32_0 : i32, i32
  }
  func.func @transform_10(%arg0: i32, %arg1: i32) -> (i32, i32) {
    %c0_i32 = arith.constant 0 : i32
    %c0_i32_0 = arith.constant 0 : i32
    %c0_i32_1 = arith.constant 0 : i32
    return %c0_i32, %c0_i32_0 : i32, i32
  }
  func.func @transform_11(%arg0: i32, %arg1: i32) -> (i32, i32) {
    %c0_i32 = arith.constant 0 : i32
    %c0_i32_0 = arith.constant 0 : i32
    %c0_i32_1 = arith.constant 0 : i32
    return %c0_i32, %c0_i32_0 : i32, i32
  }
  func.func @transform_12(%arg0: i32, %arg1: i32) -> (i32, i32) {
    %c0_i32 = arith.constant 0 : i32
    %c0_i32_0 = arith.constant 0 : i32
    %c0_i32_1 = arith.constant 0 : i32
    return %c0_i32, %c0_i32_0 : i32, i32
  }
  func.func @transform_13(%arg0: i32, %arg1: i32) -> (i32, i32) {
    %c0_i32 = arith.constant 0 : i32
    %c0_i32_0 = arith.constant 0 : i32
    %c0_i32_1 = arith.constant 0 : i32
    return %c0_i32, %c0_i32_0 : i32, i32
  }
  func.func @transform_14(%arg0: i32, %arg1: i32) -> (i32, i32) {
    %c0_i32 = arith.constant 0 : i32
    %c0_i32_0 = arith.constant 0 : i32
    %c0_i32_1 = arith.constant 0 : i32
    return %c0_i32, %c0_i32_0 : i32, i32
  }
  func.func @transform_15(%arg0: i32, %arg1: i32) -> (i32, i32, i32) {
    %c0_i32 = arith.constant 0 : i32
    %c0_i32_0 = arith.constant 0 : i32
    return %arg0, %arg1, %c0_i32 : i32, i32, i32
  }
}

</mosaic_0001>

<llo_original>
// kernel: tpu_custom_call.1
$region0: #{tpu_custom_call.1}
  #allocation0 [shape = 'u32[]', space=smem, size = 0x4, offset = 0x4, fixed_abs, tag = 'smem constant byte address 0x4 - core index']
  #allocation1 [shape = 'u32[72,128]{1,0:T(1,128)}', space=vmem, size = 0x9000, scoped, tag = 'internal scratch']
  #allocation2 [shape = 'bf16[4,16,32]{2,1,0:T(8,128)(2,1)}', space=vmem, size = 0x4000, scoped, tag = 'scratch operand']
  #allocation3 [shape = 'bf16[4,16,32]{2,1,0:T(8,128)(2,1)}', space=vmem, size = 0x4000, scoped, tag = 'scratch operand']
  %s0 = inlined_call_operand.hbm [shape: f32[2,16,128], index: 0, kind: input, shape index: {}]
  %s1 = inlined_call_operand.hbm [shape: f32[1,128], index: 1, kind: input, shape index: {}]
  %s2 = inlined_call_operand.vmem [shape: f32[1,128], index: 2, kind: input, shape index: {}]
  %s3 = inlined_call_operand.hbm [shape: bf16[128,128], index: 3, kind: input, shape index: {}]
  %s4 = inlined_call_operand.hbm [shape: f32[1,128], index: 4, kind: input, shape index: {}]
  %s5 = inlined_call_operand.hbm [shape: bf16[128,256], index: 5, kind: input, shape index: {}]
  %s6 = inlined_call_operand.vmem [shape: f32[1,256], index: 6, kind: input, shape index: {}]
  %s7 = inlined_call_operand.hbm [shape: bf16[128,128], index: 7, kind: input, shape index: {}]
  %s8 = inlined_call_operand.hbm [shape: f32[1,128], index: 8, kind: input, shape index: {}]
  %s9 = inlined_call_operand.vmem [shape: f32[1,128], index: 9, kind: input, shape index: {}]
  %s10 = inlined_call_operand.vmem [shape: f32[1,128], index: 10, kind: input, shape index: {}]
  %s11 = inlined_call_operand.hbm [shape: bf16[128,512], index: 11, kind: input, shape index: {}]
  %s12 = inlined_call_operand.vmem [shape: f32[1,512], index: 12, kind: input, shape index: {}]
  %s13 = inlined_call_operand.hbm [shape: bf16[512,128], index: 13, kind: input, shape index: {}]
  %s14 = inlined_call_operand.vmem [shape: f32[1,128], index: 14, kind: input, shape index: {}]
  %s15 = inlined_call_operand.hbm [shape: f32[2,16,128], index: 15, kind: output, shape index: {}]
  %s16 = sld [smem:[#allocation0]]
  $region133: #{tpu_custom_call.1} parent=0
    _
  %s18 = ssub.s32 1, %s16
  %s19 = scalar_select 0, %s18, %s16
  $region1: #{tpu_custom_call.1} parent=0
    #allocation4 [shape = 'u8[16384]{0}', space=vmem, size = 0x4000, scoped, tag = 'input window, operand 0']
    #allocation5 [shape = 's32[2]{0}', space=sflag, size = 0x8, scoped, tag = 'scoped memory for tpu_custom_call.1']
    #allocation6 [shape = 's32[2]{0}', space=sflag, size = 0x8, scoped, tag = 'scoped memory for tpu_custom_call.1']
    #allocation7 [shape = 'u8[512]{0}', space=vmem, size = 0x400, scoped, tag = 'input window, operand 1, single buffered']
    #allocation8 [shape = 's32[1]{0}', space=sflag, size = 0x4, scoped, tag = 'scoped memory for tpu_custom_call.1']
    #allocation9 [shape = 'u8[32768]{0}', space=vmem, size = 0x8000, scoped, tag = 'input window, operand 3, single buffered']
    #allocation10 [shape = 'u8[512]{0}', space=vmem, size = 0x400, scoped, tag = 'input window, operand 4, single buffered']
    #allocation11 [shape = 's32[1]{0}', space=sflag, size = 0x4, scoped, tag = 'scoped memory for tpu_custom_call.1']
    #allocation12 [shape = 'u8[65536]{0}', space=vmem, size = 0x10000, scoped, tag = 'input window, operand 5, single buffered']
    #allocation13 [shape = 'u8[32768]{0}', space=vmem, size = 0x8000, scoped, tag = 'input window, operand 7, single buffered']
    #allocation14 [shape = 's32[1]{0}', space=sflag, size = 0x4, scoped, tag = 'scoped memory for tpu_custom_call.1']
    #allocation15 [shape = 'u8[512]{0}', space=vmem, size = 0x400, scoped, tag = 'input window, operand 8, single buffered']
    #allocation16 [shape = 'u8[131072]{0}', space=vmem, size = 0x20000, scoped, tag = 'input window, operand 11, single buffered']
    #allocation17 [shape = 's32[1]{0}', space=sflag, size = 0x4, scoped, tag = 'scoped memory for tpu_custom_call.1']
    #allocation18 [shape = 'u8[131072]{0}', space=vmem, size = 0x20000, scoped, tag = 'input window, operand 13, single buffered']
    #allocation19 [shape = 'u8[8192]{0}', space=vmem, size = 0x2000, scoped, tag = 'output window, operand 0']
    %20 = vsyncpa [#allocation5], 0
    %s21 = scalar_lea.sflag [#allocation5], 1
    %22 = vsyncpa %s21, 0
    %23 = vsyncpa [#allocation8], 0
    %24 = vsyncpa [#allocation11], 0
    %25 = vsyncpa [#allocation14], 0
    %26 = vsyncpa [#allocation17], 0
    %27 = vsyncpa [#allocation6], 0
    %s28 = scalar_lea.sflag [#allocation6], 1
    %29 = vsyncpa %s28, 0
    loop: start=0, step=1, limit=6
    $region2: #{tpu_custom_call.1} parent=1 // loop_pre_header
      _
    $region3: #{tpu_custom_call.1} parent=1 // loop_header
      %s31 = sphi 0, %s35
      %p32 = scmp.ge.s32.totalorder %s31, 6
      %s38 = sphi 0, %s50
      %s39 = sphi 0, %s46
      %s40 = sphi 0, %s38
      %s41 = sphi 0, %s39
      %s42 = sphi 0, %s40
      %s43 = sphi 0, %s41
      %s53 = sphi 0, %s55
      %s56 = sphi 0, %s53
      %s57 = sphi 0, %s56
      %s73 = sphi 0, %s57
      %s77 = sphi 0, %s77
      %s79 = sphi 0, %s77
      %s80 = sphi 0, %s79
      %s94 = sphi 0, %s80
      %s98 = sphi 0, %s98
      %s100 = sphi 0, %s98
      %s101 = sphi 0, %s100
      %s115 = sphi 0, %s101
      %s119 = sphi 0, %s119
      %s121 = sphi 0, %s119
      %s122 = sphi 0, %s121
      %s136 = sphi 0, %s122
      %s140 = sphi 0, %s140
      %s142 = sphi 0, %s140
      %s143 = sphi 0, %s142
      %s157 = sphi 0, %s143
      %s161 = sphi 0, %s161
      %s163 = sphi 0, %s161
      %s164 = sphi 0, %s163
      %s178 = sphi 0, %s164
      %s182 = sphi 0, %s182
      %s184 = sphi 0, %s182
      %s185 = sphi 0, %s184
      %s199 = sphi 0, %s185
      %s203 = sphi 0, %s203
      %s205 = sphi 0, %s203
      %s206 = sphi 0, %s205
      %s220 = sphi 0, %s206
      %s224 = sphi 0, %s224
      %s226 = sphi 0, %s224
      %s227 = sphi 0, %s226
      %s241 = sphi 0, %s227
      %s245 = sphi 0, %s245
      %s247 = sphi 0, %s245
      %s248 = sphi 0, %s247
      %s262 = sphi 0, %s248
      %s266 = sphi 0, %s266
      %s268 = sphi 0, %s266
      %s269 = sphi 0, %s268
      %s283 = sphi 0, %s269
      %s287 = sphi 0, %s287
      %s289 = sphi 0, %s287
      %s290 = sphi 0, %s289
      %s304 = sphi 0, %s290
      %s308 = sphi 0, %s308
      %s310 = sphi 0, %s308
      %s311 = sphi 0, %s310
      %s325 = sphi 0, %s311
      %s329 = sphi 0, %s329
      %s331 = sphi 0, %s329
      %s332 = sphi 0, %s331
      %s346 = sphi 0, %s332
      %s350 = sphi 0, %s350
      %s352 = sphi 0, %s350
      %s353 = sphi 0, %s352
      %s367 = sphi 0, %s353
      %s375 = sphi 0, %s377
      %s378 = sphi 0, %s375
      %s379 = sphi 0, %s378
      %s395 = sphi 0, %s379
    $region4: #{tpu_custom_call.1} parent=1 // loop_header_branch
      %34 = sbr.rel (%p32) target = $region8
    $region5: #{tpu_custom_call.1} parent=1 // loop_body
      %s36 = ssub.s32 %s31, 1
      %s37 = ssub.s32 %s31, 2
      %s44 = sadd.s32 1, %s39
      %p45 = scmp.ge.s32.totalorder %s44, 2
      %s46 = scalar_select %p45, 0, %s44
      %s47 = sadd.s32 1, %s38
      %s48 = scalar_select %p45, %s47, %s38
      %p49 = scmp.ge.s32.totalorder %s48, 2
      %s50 = scalar_select %p49, 0, %s48
      %s51 = ssub.s32 %s38, %s50
      %p52 = scmp.eq.s32.totalorder %s51, 0
      %s54 = sadd.s32 %s53, 1
      %s55 = scalar_select %p52, %s53, %s54
      %p58 = pneg %p52
      %p59 = scmp.eq.s32.totalorder %s31, 3
      %p60 = por %p58, %p59
      %p61 = scmp.ne.s32.totalorder %s53, %s56
      %p62 = scmp.eq.s32.totalorder %s31, 0
      %p63 = por %p61, %p62
      %p64 = scmp.ne.s32.totalorder %s53, %s56
      %p65 = scmp.eq.s32.totalorder %s36, 3
      %p66 = por %p64, %p65
      %p67 = scmp.ne.s32.totalorder %s56, %s57
      %p68 = scmp.eq.s32.totalorder %s36, 0
      %p69 = por %p67, %p68
      %p70 = scmp.ne.s32.totalorder %s56, %s57
      %p71 = scmp.eq.s32.totalorder %s37, 3
      %p72 = por %p70, %p71
      %p74 = scmp.ne.s32.totalorder %s57, %s73
      %p75 = scmp.eq.s32.totalorder %s37, 0
      %p76 = por %p74, %p75
      %s78 = sadd.s32 %s77, 1
      %p81 = scmp.eq.s32.totalorder %s31, 3
      %p82 = scmp.ne.s32.totalorder %s77, %s79
      %p83 = scmp.eq.s32.totalorder %s31, 0
      %p84 = por %p82, %p83
      %p85 = scmp.ne.s32.totalorder %s77, %s79
      %p86 = scmp.eq.s32.totalorder %s36, 3
      %p87 = por %p85, %p86
      %p88 = scmp.ne.s32.totalorder %s79, %s80
      %p89 = scmp.eq.s32.totalorder %s36, 0
      %p90 = por %p88, %p89
      %p91 = scmp.ne.s32.totalorder %s79, %s80
      %p92 = scmp.eq.s32.totalorder %s37, 3
      %p93 = por %p91, %p92
      %p95 = scmp.ne.s32.totalorder %s80, %s94
      %p96 = scmp.eq.s32.totalorder %s37, 0
      %p97 = por %p95, %p96
      %s99 = sadd.s32 %s98, 1
      %p102 = scmp.eq.s32.totalorder %s31, 3
      %p103 = scmp.ne.s32.totalorder %s98, %s100
      %p104 = scmp.eq.s32.totalorder %s31, 0
      %p105 = por %p103, %p104
      %p106 = scmp.ne.s32.totalorder %s98, %s100
      %p107 = scmp.eq.s32.totalorder %s36, 3
      %p108 = por %p106, %p107
      %p109 = scmp.ne.s32.totalorder %s100, %s101
      %p110 = scmp.eq.s32.totalorder %s36, 0
      %p111 = por %p109, %p110
      %p112 = scmp.ne.s32.totalorder %s100, %s101
      %p113 = scmp.eq.s32.totalorder %s37, 3
      %p114 = por %p112, %p113
      %p116 = scmp.ne.s32.totalorder %s101, %s115
      %p117 = scmp.eq.s32.totalorder %s37, 0
      %p118 = por %p116, %p117
      %s120 = sadd.s32 %s119, 1
      %p123 = scmp.eq.s32.totalorder %s31, 3
      %p124 = scmp.ne.s32.totalorder %s119, %s121
      %p125 = scmp.eq.s32.totalorder %s31, 0
      %p126 = por %p124, %p125
      %p127 = scmp.ne.s32.totalorder %s119, %s121
      %p128 = scmp.eq.s32.totalorder %s36, 3
      %p129 = por %p127, %p128
      %p130 = scmp.ne.s32.totalorder %s121, %s122
      %p131 = scmp.eq.s32.totalorder %s36, 0
      %p132 = por %p130, %p131
      %p133 = scmp.ne.s32.totalorder %s121, %s122
      %p134 = scmp.eq.s32.totalorder %s37, 3
      %p135 = por %p133, %p134
      %p137 = scmp.ne.s32.totalorder %s122, %s136
      %p138 = scmp.eq.s32.totalorder %s37, 0
      %p139 = por %p137, %p138
      %s141 = sadd.s32 %s140, 1
      %p144 = scmp.eq.s32.totalorder %s31, 3
      %p145 = scmp.ne.s32.totalorder %s140, %s142
      %p146 = scmp.eq.s32.totalorder %s31, 0
      %p147 = por %p145, %p146
      %p148 = scmp.ne.s32.totalorder %s140, %s142
      %p149 = scmp.eq.s32.totalorder %s36, 3
      %p150 = por %p148, %p149
      %p151 = scmp.ne.s32.totalorder %s142, %s143
      %p152 = scmp.eq.s32.totalorder %s36, 0
      %p153 = por %p151, %p152
      %p154 = scmp.ne.s32.totalorder %s142, %s143
      %p155 = scmp.eq.s32.totalorder %s37, 3
      %p156 = por %p154, %p155
      %p158 = scmp.ne.s32.totalorder %s143, %s157
      %p159 = scmp.eq.s32.totalorder %s37, 0
      %p160 = por %p158, %p159
      %s162 = sadd.s32 %s161, 1
      %p165 = scmp.eq.s32.totalorder %s31, 3
      %p166 = scmp.ne.s32.totalorder %s161, %s163
      %p167 = scmp.eq.s32.totalorder %s31, 0
      %p168 = por %p166, %p167
      %p169 = scmp.ne.s32.totalorder %s161, %s163
      %p170 = scmp.eq.s32.totalorder %s36, 3
      %p171 = por %p169, %p170
      %p172 = scmp.ne.s32.totalorder %s163, %s164
      %p173 = scmp.eq.s32.totalorder %s36, 0
      %p174 = por %p172, %p173
      %p175 = scmp.ne.s32.totalorder %s163, %s164
      %p176 = scmp.eq.s32.totalorder %s37, 3
      %p177 = por %p175, %p176
      %p179 = scmp.ne.s32.totalorder %s164, %s178
      %p180 = scmp.eq.s32.totalorder %s37, 0
      %p181 = por %p179, %p180
      %s183 = sadd.s32 %s182, 1
      %p186 = scmp.eq.s32.totalorder %s31, 3
      %p187 = scmp.ne.s32.totalorder %s182, %s184
      %p188 = scmp.eq.s32.totalorder %s31, 0
      %p189 = por %p187, %p188
      %p190 = scmp.ne.s32.totalorder %s182, %s184
      %p191 = scmp.eq.s32.totalorder %s36, 3
      %p192 = por %p190, %p191
      %p193 = scmp.ne.s32.totalorder %s184, %s185
      %p194 = scmp.eq.s32.totalorder %s36, 0
      %p195 = por %p193, %p194
      %p196 = scmp.ne.s32.totalorder %s184, %s185
      %p197 = scmp.eq.s32.totalorder %s37, 3
      %p198 = por %p196, %p197
      %p200 = scmp.ne.s32.totalorder %s185, %s199
      %p201 = scmp.eq.s32.totalorder %s37, 0
      %p202 = por %p200, %p201
      %s204 = sadd.s32 %s203, 1
      %p207 = scmp.eq.s32.totalorder %s31, 3
      %p208 = scmp.ne.s32.totalorder %s203, %s205
      %p209 = scmp.eq.s32.totalorder %s31, 0
      %p210 = por %p208, %p209
      %p211 = scmp.ne.s32.totalorder %s203, %s205
      %p212 = scmp.eq.s32.totalorder %s36, 3
      %p213 = por %p211, %p212
      %p214 = scmp.ne.s32.totalorder %s205, %s206
      %p215 = scmp.eq.s32.totalorder %s36, 0
      %p216 = por %p214, %p215
      %p217 = scmp.ne.s32.totalorder %s205, %s206
      %p218 = scmp.eq.s32.totalorder %s37, 3
      %p219 = por %p217, %p218
      %p221 = scmp.ne.s32.totalorder %s206, %s220
      %p222 = scmp.eq.s32.totalorder %s37, 0
      %p223 = por %p221, %p222
      %s225 = sadd.s32 %s224, 1
      %p228 = scmp.eq.s32.totalorder %s31, 3
      %p229 = scmp.ne.s32.totalorder %s224, %s226
      %p230 = scmp.eq.s32.totalorder %s31, 0
      %p231 = por %p229, %p230
      %p232 = scmp.ne.s32.totalorder %s224, %s226
      %p233 = scmp.eq.s32.totalorder %s36, 3
      %p234 = por %p232, %p233
      %p235 = scmp.ne.s32.totalorder %s226, %s227
      %p236 = scmp.eq.s32.totalorder %s36, 0
      %p237 = por %p235, %p236
      %p238 = scmp.ne.s32.totalorder %s226, %s227
      %p239 = scmp.eq.s32.totalorder %s37, 3
      %p240 = por %p238, %p239
      %p242 = scmp.ne.s32.totalorder %s227, %s241
      %p243 = scmp.eq.s32.totalorder %s37, 0
      %p244 = por %p242, %p243
      %s246 = sadd.s32 %s245, 1
      %p249 = scmp.eq.s32.totalorder %s31, 3
      %p250 = scmp.ne.s32.totalorder %s245, %s247
      %p251 = scmp.eq.s32.totalorder %s31, 0
      %p252 = por %p250, %p251
      %p253 = scmp.ne.s32.totalorder %s245, %s247
      %p254 = scmp.eq.s32.totalorder %s36, 3
      %p255 = por %p253, %p254
      %p256 = scmp.ne.s32.totalorder %s247, %s248
      %p257 = scmp.eq.s32.totalorder %s36, 0
      %p258 = por %p256, %p257
      %p259 = scmp.ne.s32.totalorder %s247, %s248
      %p260 = scmp.eq.s32.totalorder %s37, 3
      %p261 = por %p259, %p260
      %p263 = scmp.ne.s32.totalorder %s248, %s262
      %p264 = scmp.eq.s32.totalorder %s37, 0
      %p265 = por %p263, %p264
      %s267 = sadd.s32 %s266, 1
      %p270 = scmp.eq.s32.totalorder %s31, 3
      %p271 = scmp.ne.s32.totalorder %s266, %s268
      %p272 = scmp.eq.s32.totalorder %s31, 0
      %p273 = por %p271, %p272
      %p274 = scmp.ne.s32.totalorder %s266, %s268
      %p275 = scmp.eq.s32.totalorder %s36, 3
      %p276 = por %p274, %p275
      %p277 = scmp.ne.s32.totalorder %s268, %s269
      %p278 = scmp.eq.s32.totalorder %s36, 0
      %p279 = por %p277, %p278
      %p280 = scmp.ne.s32.totalorder %s268, %s269
      %p281 = scmp.eq.s32.totalorder %s37, 3
      %p282 = por %p280, %p281
      %p284 = scmp.ne.s32.totalorder %s269, %s283
      %p285 = scmp.eq.s32.totalorder %s37, 0
      %p286 = por %p284, %p285
      %s288 = sadd.s32 %s287, 1
      %p291 = scmp.eq.s32.totalorder %s31, 3
      %p292 = scmp.ne.s32.totalorder %s287, %s289
      %p293 = scmp.eq.s32.totalorder %s31, 0
      %p294 = por %p292, %p293
      %p295 = scmp.ne.s32.totalorder %s287, %s289
      %p296 = scmp.eq.s32.totalorder %s36, 3
      %p297 = por %p295, %p296
      %p298 = scmp.ne.s32.totalorder %s289, %s290
      %p299 = scmp.eq.s32.totalorder %s36, 0
      %p300 = por %p298, %p299
      %p301 = scmp.ne.s32.totalorder %s289, %s290
      %p302 = scmp.eq.s32.totalorder %s37, 3
      %p303 = por %p301, %p302
      %p305 = scmp.ne.s32.totalorder %s290, %s304
      %p306 = scmp.eq.s32.totalorder %s37, 0
      %p307 = por %p305, %p306
      %s309 = sadd.s32 %s308, 1
      %p312 = scmp.eq.s32.totalorder %s31, 3
      %p313 = scmp.ne.s32.totalorder %s308, %s310
      %p314 = scmp.eq.s32.totalorder %s31, 0
      %p315 = por %p313, %p314
      %p316 = scmp.ne.s32.totalorder %s308, %s310
      %p317 = scmp.eq.s32.totalorder %s36, 3
      %p318 = por %p316, %p317
      %p319 = scmp.ne.s32.totalorder %s310, %s311
      %p320 = scmp.eq.s32.totalorder %s36, 0
      %p321 = por %p319, %p320
      %p322 = scmp.ne.s32.totalorder %s310, %s311
      %p323 = scmp.eq.s32.totalorder %s37, 3
      %p324 = por %p322, %p323
      %p326 = scmp.ne.s32.totalorder %s311, %s325
      %p327 = scmp.eq.s32.totalorder %s37, 0
      %p328 = por %p326, %p327
      %s330 = sadd.s32 %s329, 1
      %p333 = scmp.eq.s32.totalorder %s31, 3
      %p334 = scmp.ne.s32.totalorder %s329, %s331
      %p335 = scmp.eq.s32.totalorder %s31, 0
      %p336 = por %p334, %p335
      %p337 = scmp.ne.s32.totalorder %s329, %s331
      %p338 = scmp.eq.s32.totalorder %s36, 3
      %p339 = por %p337, %p338
      %p340 = scmp.ne.s32.totalorder %s331, %s332
      %p341 = scmp.eq.s32.totalorder %s36, 0
      %p342 = por %p340, %p341
      %p343 = scmp.ne.s32.totalorder %s331, %s332
      %p344 = scmp.eq.s32.totalorder %s37, 3
      %p345 = por %p343, %p344
      %p347 = scmp.ne.s32.totalorder %s332, %s346
      %p348 = scmp.eq.s32.totalorder %s37, 0
      %p349 = por %p347, %p348
      %s351 = sadd.s32 %s350, 1
      %p354 = scmp.eq.s32.totalorder %s31, 3
      %p355 = scmp.ne.s32.totalorder %s350, %s352
      %p356 = scmp.eq.s32.totalorder %s31, 0
      %p357 = por %p355, %p356
      %p358 = scmp.ne.s32.totalorder %s350, %s352
      %p359 = scmp.eq.s32.totalorder %s36, 3
      %p360 = por %p358, %p359
      %p361 = scmp.ne.s32.totalorder %s352, %s353
      %p362 = scmp.eq.s32.totalorder %s36, 0
      %p363 = por %p361, %p362
      %p364 = scmp.ne.s32.totalorder %s352, %s353
      %p365 = scmp.eq.s32.totalorder %s37, 3
      %p366 = por %p364, %p365
      %p368 = scmp.ne.s32.totalorder %s353, %s367
      %p369 = scmp.eq.s32.totalorder %s37, 0
      %p370 = por %p368, %p369
      %s371 = ssub.s32 %s38, %s50
      %s372 = ssub.s32 %s39, %s46
      %s373 = sor.u32 %s371, %s372
      %p374 = scmp.eq.s32.totalorder %s373, 0
      %s376 = sadd.s32 %s375, 1
      %s377 = scalar_select %p374, %s375, %s376
      %p380 = pneg %p374
      %p381 = scmp.eq.s32.totalorder %s31, 3
      %p382 = por %p380, %p381
      %p383 = scmp.ne.s32.totalorder %s375, %s378
      %p384 = scmp.eq.s32.totalorder %s31, 0
      %p385 = por %p383, %p384
      %p386 = scmp.ne.s32.totalorder %s375, %s378
      %p387 = scmp.eq.s32.totalorder %s36, 3
      %p388 = por %p386, %p387
      %p389 = scmp.ne.s32.totalorder %s378, %s379
      %p390 = scmp.eq.s32.totalorder %s36, 0
      %p391 = por %p389, %p390
      %p392 = scmp.ne.s32.totalorder %s378, %s379
      %p393 = scmp.eq.s32.totalorder %s37, 3
      %p394 = por %p392, %p393
      %p396 = scmp.ne.s32.totalorder %s379, %s395
      %p397 = scmp.eq.s32.totalorder %s37, 0
      %p398 = por %p396, %p397
      %p399 = scmp.le.s32.totalorder 1, %s31
      %p400 = scmp.lt.s32.totalorder %s31, 5
      %p401 = pnand %p399, %p400
      %p402 = pneg %p401
      // Predicated region
      $region9: #{tpu_custom_call.1} parent=5 // pred_check
        _
      $region10: #{tpu_custom_call.1} parent=5 // pred_check_branch
        %404 = sbr.rel (%p401) target = $region12
      $region11: #{tpu_custom_call.1} parent=5 // pred_region
        %s405 = ssub.s32 %s31, 1
        // Predicated region
        $region13: #{tpu_custom_call.1} parent=11 // pred_check
          %p406 = pneg %p90
        $region14: #{tpu_custom_call.1} parent=11 // pred_check_branch
          %408 = sbr.rel (%p406) target = $region16
        $region15: #{tpu_custom_call.1} parent=11 // pred_region
          %410 = vsyncadd [#allocation8], 0
          %s412 = sshll.u32 %s1, 4
          %s413 = int_to_ptr.hbm [resolvable:$true] %s412
          %s414 = sshll.u32 [#allocation7], 4
          %s415 = int_to_ptr.vmem [resolvable:$true] %s414
          %417 = dma.hbm_to_vmem [thread:$0]  %s413, 16, %s415, [#allocation8]
        $region16: #{tpu_custom_call.1} parent=11 // pred_fallthru
          _
        // Predicated region
        $region17: #{tpu_custom_call.1} parent=11 // pred_check
          %p418 = pneg %p111
        $region18: #{tpu_custom_call.1} parent=11 // pred_check_branch
          %420 = sbr.rel (%p418) target = $region20
        $region19: #{tpu_custom_call.1} parent=11 // pred_region
          _
        $region20: #{tpu_custom_call.1} parent=11 // pred_fallthru
          _
        // Predicated region
        $region21: #{tpu_custom_call.1} parent=11 // pred_check
          %p421 = pneg %p132
        $region22: #{tpu_custom_call.1} parent=11 // pred_check_branch
          %423 = sbr.rel (%p421) target = $region24
        $region23: #{tpu_custom_call.1} parent=11 // pred_region
          %425 = vsyncadd [#allocation8], 0
          %s426 = sshll.u32 %s3, 4
          %s427 = int_to_ptr.hbm [resolvable:$true] %s426
          %s428 = sshll.u32 [#allocation9], 4
          %s429 = int_to_ptr.vmem [resolvable:$true] %s428
          %434 = dma.hbm_to_vmem [thread:$0]  %s427, 1024, %s429, [#allocation8], 64, 64, 4
        $region24: #{tpu_custom_call.1} parent=11 // pred_fallthru
          _
        // Predicated region
        $region25: #{tpu_custom_call.1} parent=11 // pred_check
          %p435 = pneg %p153
        $region26: #{tpu_custom_call.1} parent=11 // pred_check_branch
          %437 = sbr.rel (%p435) target = $region28
        $region27: #{tpu_custom_call.1} parent=11 // pred_region
          %439 = vsyncadd [#allocation11], 0
          %s441 = sshll.u32 %s4, 4
          %s442 = int_to_ptr.hbm [resolvable:$true] %s441
          %s443 = sshll.u32 [#allocation10], 4
          %s444 = int_to_ptr.vmem [resolvable:$true] %s443
          %446 = dma.hbm_to_vmem [thread:$0]  %s442, 16, %s444, [#allocation11]
        $region28: #{tpu_custom_call.1} parent=11 // pred_fallthru
          _
        // Predicated region
        $region29: #{tpu_custom_call.1} parent=11 // pred_check
          %p447 = pneg %p174
        $region30: #{tpu_custom_call.1} parent=11 // pred_check_branch
          %449 = sbr.rel (%p447) target = $region32
        $region31: #{tpu_custom_call.1} parent=11 // pred_region
          %451 = vsyncadd [#allocation11], 0
          %s452 = sshll.u32 %s5, 4
          %s453 = int_to_ptr.hbm [resolvable:$true] %s452
          %s454 = sshll.u32 [#allocation12], 4
          %s455 = int_to_ptr.vmem [resolvable:$true] %s454
          %460 = dma.hbm_to_vmem [thread:$0]  %s453, 2048, %s455, [#allocation11], 128, 128, 8
        $region32: #{tpu_custom_call.1} parent=11 // pred_fallthru
          _
        // Predicated region
        $region33: #{tpu_custom_call.1} parent=11 // pred_check
          %p461 = pneg %p195
        $region34: #{tpu_custom_call.1} parent=11 // pred_check_branch
          %463 = sbr.rel (%p461) target = $region36
        $region35: #{tpu_custom_call.1} parent=11 // pred_region
          _
        $region36: #{tpu_custom_call.1} parent=11 // pred_fallthru
          _
        // Predicated region
        $region37: #{tpu_custom_call.1} parent=11 // pred_check
          %p464 = pneg %p216
        $region38: #{tpu_custom_call.1} parent=11 // pred_check_branch
          %466 = sbr.rel (%p464) target = $region40
        $region39: #{tpu_custom_call.1} parent=11 // pred_region
          %468 = vsyncadd [#allocation14], 0
          %s469 = sshll.u32 %s7, 4
          %s470 = int_to_ptr.hbm [resolvable:$true] %s469
          %s471 = sshll.u32 [#allocation13], 4
          %s472 = int_to_ptr.vmem [resolvable:$true] %s471
          %477 = dma.hbm_to_vmem [thread:$0]  %s470, 1024, %s472, [#allocation14], 64, 64, 4
        $region40: #{tpu_custom_call.1} parent=11 // pred_fallthru
          _
        // Predicated region
        $region41: #{tpu_custom_call.1} parent=11 // pred_check
          %p478 = pneg %p237
        $region42: #{tpu_custom_call.1} parent=11 // pred_check_branch
          %480 = sbr.rel (%p478) target = $region44
        $region43: #{tpu_custom_call.1} parent=11 // pred_region
          %482 = vsyncadd [#allocation14], 0
          %s484 = sshll.u32 %s8, 4
          %s485 = int_to_ptr.hbm [resolvable:$true] %s484
          %s486 = sshll.u32 [#allocation15], 4
          %s487 = int_to_ptr.vmem [resolvable:$true] %s486
          %489 = dma.hbm_to_vmem [thread:$0]  %s485, 16, %s487, [#allocation14]
        $region44: #{tpu_custom_call.1} parent=11 // pred_fallthru
          _
        // Predicated region
        $region45: #{tpu_custom_call.1} parent=11 // pred_check
          %p490 = pneg %p258
        $region46: #{tpu_custom_call.1} parent=11 // pred_check_branch
          %492 = sbr.rel (%p490) target = $region48
        $region47: #{tpu_custom_call.1} parent=11 // pred_region
          _
        $region48: #{tpu_custom_call.1} parent=11 // pred_fallthru
          _
        // Predicated region
        $region49: #{tpu_custom_call.1} parent=11 // pred_check
          %p493 = pneg %p279
        $region50: #{tpu_custom_call.1} parent=11 // pred_check_branch
          %495 = sbr.rel (%p493) target = $region52
        $region51: #{tpu_custom_call.1} parent=11 // pred_region
          _
        $region52: #{tpu_custom_call.1} parent=11 // pred_fallthru
          _
        // Predicated region
        $region53: #{tpu_custom_call.1} parent=11 // pred_check
          %p496 = pneg %p300
        $region54: #{tpu_custom_call.1} parent=11 // pred_check_branch
          %498 = sbr.rel (%p496) target = $region56
        $region55: #{tpu_custom_call.1} parent=11 // pred_region
          %500 = vsyncadd [#allocation17], 0
          %s501 = sshll.u32 %s11, 4
          %s502 = int_to_ptr.hbm [resolvable:$true] %s501
          %s503 = sshll.u32 [#allocation16], 4
          %s504 = int_to_ptr.vmem [resolvable:$true] %s503
          %509 = dma.hbm_to_vmem [thread:$0]  %s502, 4096, %s504, [#allocation17], 256, 256, 16
        $region56: #{tpu_custom_call.1} parent=11 // pred_fallthru
          _
        // Predicated region
        $region57: #{tpu_custom_call.1} parent=11 // pred_check
          %p510 = pneg %p321
        $region58: #{tpu_custom_call.1} parent=11 // pred_check_branch
          %512 = sbr.rel (%p510) target = $region60
        $region59: #{tpu_custom_call.1} parent=11 // pred_region
          _
        $region60: #{tpu_custom_call.1} parent=11 // pred_fallthru
          _
        // Predicated region
        $region61: #{tpu_custom_call.1} parent=11 // pred_check
          %p513 = pneg %p342
        $region62: #{tpu_custom_call.1} parent=11 // pred_check_branch
          %515 = sbr.rel (%p513) target = $region64
        $region63: #{tpu_custom_call.1} parent=11 // pred_region
          %517 = vsyncadd [#allocation17], 0
          %s518 = sshll.u32 %s13, 4
          %s519 = int_to_ptr.hbm [resolvable:$true] %s518
          %s520 = sshll.u32 [#allocation18], 4
          %s521 = int_to_ptr.vmem [resolvable:$true] %s520
          %526 = dma.hbm_to_vmem [thread:$0]  %s519, 4096, %s521, [#allocation17], 64, 64, 4
        $region64: #{tpu_custom_call.1} parent=11 // pred_fallthru
          _
        // Predicated region
        $region65: #{tpu_custom_call.1} parent=11 // pred_check
          %p527 = pneg %p363
        $region66: #{tpu_custom_call.1} parent=11 // pred_check_branch
          %529 = sbr.rel (%p527) target = $region68
        $region67: #{tpu_custom_call.1} parent=11 // pred_region
          _
        $region68: #{tpu_custom_call.1} parent=11 // pred_fallthru
          _
      $region12: #{tpu_custom_call.1} parent=5 // pred_fallthru
        _
      %p530 = scmp.lt.s32.totalorder %s31, 4
      // Predicated region
      $region69: #{tpu_custom_call.1} parent=5 // pred_check
        %p531 = pneg %p530
      $region70: #{tpu_custom_call.1} parent=5 // pred_check_branch
        %533 = sbr.rel (%p531) target = $region72
      $region71: #{tpu_custom_call.1} parent=5 // pred_region
        // Predicated region
        $region73: #{tpu_custom_call.1} parent=71 // pred_check
          %p534 = pneg %p63
        $region74: #{tpu_custom_call.1} parent=71 // pred_check_branch
          %536 = sbr.rel (%p534) target = $region76
        $region75: #{tpu_custom_call.1} parent=71 // pred_region
          %s537 = sand.u32 %s53, 1
          %s538 = scalar_lea.sflag [#allocation5], %s537
          %s539 = sand.u32 %s53, 1
          %s540 = smul.addr %s539, 16
          %s541 = scalar_lea.vmem [#allocation4], %s540
          %543 = vsyncadd %s538, 0
          %s544 = smul.addr %s38, 2
          %s545 = smul.addr %s544, 8
          %s546 = scalar_lea.hbm %s0, %s545
          %s547 = sshll.u32 %s546, 4
          %s548 = int_to_ptr.hbm [resolvable:$true] %s547
          %s549 = sshll.u32 %s541, 4
          %s550 = int_to_ptr.vmem [resolvable:$true] %s549
          %555 = dma.hbm_to_vmem [thread:$0]  %s548, 256, %s550, %s538, 128, 128, 8
        $region76: #{tpu_custom_call.1} parent=71 // pred_fallthru
          _
      $region72: #{tpu_custom_call.1} parent=5 // pred_fallthru
        _
      %p556 = scmp.le.s32.totalorder 1, %s31
      %p557 = scmp.lt.s32.totalorder %s31, 5
      %p558 = pnand %p556, %p557
      %p559 = pneg %p558
      // Predicated region
      $region77: #{tpu_custom_call.1} parent=5 // pred_check
        _
      $region78: #{tpu_custom_call.1} parent=5 // pred_check_branch
        %561 = sbr.rel (%p558) target = $region80
      $region79: #{tpu_custom_call.1} parent=5 // pred_region
        %s562 = ssub.s32 %s31, 1
        %s563 = sand.u32 %s56, 1
        %s564 = scalar_lea.sflag [#allocation5], %s563
        %s565 = sand.u32 %s56, 1
        %s566 = smul.addr %s565, 16
        %s567 = scalar_lea.vmem [#allocation4], %s566
        // Predicated region
        $region81: #{tpu_custom_call.1} parent=79 // pred_check
          %p568 = pneg %p69
        $region82: #{tpu_custom_call.1} parent=79 // pred_check_branch
          %570 = sbr.rel (%p568) target = $region84
        $region83: #{tpu_custom_call.1} parent=79 // pred_region
          %572 = dma.done %s564, 256
        $region84: #{tpu_custom_call.1} parent=79 // pred_fallthru
          _
        // Predicated region
        $region85: #{tpu_custom_call.1} parent=79 // pred_check
          %p573 = pneg %p90
        $region86: #{tpu_custom_call.1} parent=79 // pred_check_branch
          %575 = sbr.rel (%p573) target = $region88
        $region87: #{tpu_custom_call.1} parent=79 // pred_region
          %577 = dma.done [#allocation8], 16
        $region88: #{tpu_custom_call.1} parent=79 // pred_fallthru
          _
        // Predicated region
        $region89: #{tpu_custom_call.1} parent=79 // pred_check
          %p578 = pneg %p132
        $region90: #{tpu_custom_call.1} parent=79 // pred_check_branch
          %580 = sbr.rel (%p578) target = $region92
        $region91: #{tpu_custom_call.1} parent=79 // pred_region
          %582 = dma.done [#allocation8], 1024
        $region92: #{tpu_custom_call.1} parent=79 // pred_fallthru
          _
        // Predicated region
        $region93: #{tpu_custom_call.1} parent=79 // pred_check
          %p583 = pneg %p153
        $region94: #{tpu_custom_call.1} parent=79 // pred_check_branch
          %585 = sbr.rel (%p583) target = $region96
        $region95: #{tpu_custom_call.1} parent=79 // pred_region
          %587 = dma.done [#allocation11], 16
        $region96: #{tpu_custom_call.1} parent=79 // pred_fallthru
          _
        // Predicated region
        $region97: #{tpu_custom_call.1} parent=79 // pred_check
          %p588 = pneg %p174
        $region98: #{tpu_custom_call.1} parent=79 // pred_check_branch
          %590 = sbr.rel (%p588) target = $region100
        $region99: #{tpu_custom_call.1} parent=79 // pred_region
          %592 = dma.done [#allocation11], 2048
        $region100: #{tpu_custom_call.1} parent=79 // pred_fallthru
          _
        // Predicated region
        $region101: #{tpu_custom_call.1} parent=79 // pred_check
          %p593 = pneg %p216
        $region102: #{tpu_custom_call.1} parent=79 // pred_check_branch
          %595 = sbr.rel (%p593) target = $region104
        $region103: #{tpu_custom_call.1} parent=79 // pred_region
          %597 = dma.done [#allocation14], 1024
        $region104: #{tpu_custom_call.1} parent=79 // pred_fallthru
          _
        // Predicated region
        $region105: #{tpu_custom_call.1} parent=79 // pred_check
          %p598 = pneg %p237
        $region106: #{tpu_custom_call.1} parent=79 // pred_check_branch
          %600 = sbr.rel (%p598) target = $region108
        $region107: #{tpu_custom_call.1} parent=79 // pred_region
          %602 = dma.done [#allocation14], 16
        $region108: #{tpu_custom_call.1} parent=79 // pred_fallthru
          _
        // Predicated region
        $region109: #{tpu_custom_call.1} parent=79 // pred_check
          %p603 = pneg %p300
        $region110: #{tpu_custom_call.1} parent=79 // pred_check_branch
          %605 = sbr.rel (%p603) target = $region112
        $region111: #{tpu_custom_call.1} parent=79 // pred_region
          %607 = dma.done [#allocation17], 4096
        $region112: #{tpu_custom_call.1} parent=79 // pred_fallthru
          _
        // Predicated region
        $region113: #{tpu_custom_call.1} parent=79 // pred_check
          %p608 = pneg %p342
        $region114: #{tpu_custom_call.1} parent=79 // pred_check_branch
          %610 = sbr.rel (%p608) target = $region116
        $region115: #{tpu_custom_call.1} parent=79 // pred_region
          %612 = dma.done [#allocation17], 4096
        $region116: #{tpu_custom_call.1} parent=79 // pred_fallthru
          _
        %s613 = sand.u32 %s56, 1
        %s614 = scalar_lea.sflag [#allocation5], %s613
        %s615 = sand.u32 %s56, 1
        %s616 = smul.addr %s615, 16
        %s617 = scalar_lea.vmem [#allocation4], %s616
        %p618 = pneg %p69
        %p619 = pneg %p66
        %p620 = pneg %p90
        %p621 = pneg %p87
        %p622 = pneg %p111
        %p623 = pneg %p108
        %p624 = pneg %p132
        %p625 = pneg %p129
        %p626 = pneg %p153
        %p627 = pneg %p150
        %p628 = pneg %p174
        %p629 = pneg %p171
        %p630 = pneg %p195
        %p631 = pneg %p192
        %p632 = pneg %p216
        %p633 = pneg %p213
        %p634 = pneg %p237
        %p635 = pneg %p234
        %p636 = pneg %p258
        %p637 = pneg %p255
        %p638 = pneg %p279
        %p639 = pneg %p276
        %p640 = pneg %p300
        %p641 = pneg %p297
        %p642 = pneg %p321
        %p643 = pneg %p318
        %p644 = pneg %p342
        %p645 = pneg %p339
        %p646 = pneg %p363
        %p647 = pneg %p360
        %p648 = pneg %p391
        %p649 = pneg %p388
        %s650 = sand.u32 %s378, 1
        %s651 = scalar_lea.sflag [#allocation6], %s650
        %s652 = sand.u32 %s378, 1
        %s653 = smul.addr %s652, 8
        %s654 = scalar_lea.vmem [#allocation19], %s653
        %p656 = scmp.eq.s32.totalorder %s41, 0
        // Predicated region
        $region117: #{tpu_custom_call.1} parent=79 // pred_check
          %p657 = pneg %p656
        $region118: #{tpu_custom_call.1} parent=79 // pred_check_branch
          %659 = sbr.rel (%p657) target = $region120
        $region119: #{tpu_custom_call.1} parent=79 // pred_region
          %v660 = vld [vmem:[%s567] sm:$0xff]
          %v661 = vld [vmem:[%s567 + $0x8] sm:$0xff]
          %v662 = vld [vmem:[#allocation7] sm:$0x1]
          %v663 = vld [vmem:[%s2] sm:$0x1]
          %664 = vadd.xlane.f32.xlu0 %v660
          %v665 = vpop.xlane.xlu0 %664
          %666 = vadd.xlane.f32.xlu0 %v661
          %v667 = vpop.xlane.xlu0 %666
          %v668 = vrcp.pop 128.0
          %v669 = vmul.f32 128.0, %v668
          %v670 = vsub.f32 1.0, %v669
          %v671 = vmul.f32 %v668, %v670
          %v672 = vadd.f32 %v668, %v671
          %vm673 = vweird.f32 %v668
          %v674 = vsel %vm673, %v668, %v672
          %v675 = vmul.f32 %v665, %v674
          %v676 = vmul.f32 %v667, %v674
          %v677 = vsub.f32 %v660, %v675
          %v678 = vsub.f32 %v661, %v676
          %v679 = vmul.f32 %v677, %v677
          %v680 = vmul.f32 %v678, %v678
          %681 = vadd.xlane.f32.xlu0 %v679
          %v682 = vpop.xlane.xlu0 %681
          %683 = vadd.xlane.f32.xlu0 %v680
          %v684 = vpop.xlane.xlu0 %683
          %v685 = vmul.f32 %v682, %v674
          %v686 = vmul.f32 %v684, %v674
          %v687 = vadd.f32 %v685, 1e-05
          %v688 = vadd.f32 %v686, 1e-05
          %v689 = vrsqrt.pop %v687
          %v690 = vmul.f32 %v689, %v687
          %v691 = vmul.f32 %v690, %v689
          %v692 = vmul.f32 0.5, %v691
          %v693 = vsub.f32 1.5, %v692
          %v694 = vmul.f32 %v689, %v693
          %vm695 = vweird.f32 %v687
          %vm696 = vweird.f32 %v689
          %vm697 = vmor %vm695, %vm696
          %v698 = vsel %vm697, %v689, %v694
          %v699 = vrsqrt.pop %v688
          %v700 = vmul.f32 %v699, %v688
          %v701 = vmul.f32 %v700, %v699
          %v702 = vmul.f32 0.5, %v701
          %v703 = vsub.f32 1.5, %v702
          %v704 = vmul.f32 %v699, %v703
          %vm705 = vweird.f32 %v688
          %vm706 = vweird.f32 %v699
          %vm707 = vmor %vm705, %vm706
          %v708 = vsel %vm707, %v699, %v704
          %v709 = vmul.f32 %v677, %v698
          %v710 = vmul.f32 %v678, %v708
          %v712 = vperm.slane %v662, 0
          %v714 = vmul.f32 %v709, %v712
          %v715 = vmul.f32 %v710, %v712
          %v717 = vperm.slane %v663, 0
          %v719 = vadd.f32 %v714, %v717
          %v720 = vadd.f32 %v715, %v717
          %v721 = vpack.c.bf16 %v720, %v719
          %v722 = vld [vmem:[#allocation12] sm:$0xff]
          %v723 = vld [vmem:[#allocation12 + $0x8] sm:$0xff]
          %v724 = vld [vmem:[#allocation12 + $0x10] sm:$0xff]
          %v725 = vld [vmem:[#allocation12 + $0x18] sm:$0xff]
          %v726 = vld [vmem:[#allocation12 + $0x20] sm:$0xff]
          %v727 = vld [vmem:[#allocation12 + $0x28] sm:$0xff]
          %v728 = vld [vmem:[#allocation12 + $0x30] sm:$0xff]
          %v729 = vld [vmem:[#allocation12 + $0x38] sm:$0xff]
          %v730 = vld [vmem:[#allocation12 + $0x40] sm:$0xff]
          %v731 = vld [vmem:[#allocation12 + $0x48] sm:$0xff]
          %v732 = vld [vmem:[#allocation12 + $0x50] sm:$0xff]
          %v733 = vld [vmem:[#allocation12 + $0x58] sm:$0xff]
          %v734 = vld [vmem:[#allocation12 + $0x60] sm:$0xff]
          %v735 = vld [vmem:[#allocation12 + $0x68] sm:$0xff]
          %v736 = vld [vmem:[#allocation12 + $0x70] sm:$0xff]
          %v737 = vld [vmem:[#allocation12 + $0x78] sm:$0xff]
          %v738 = vld [vmem:[%s6] sm:$0x3]
          %v740 = vperm.slane %v738, 0
          %v741 = vperm.slane %v738, 1
          %v760 = vunpack.c.l.b16 %v722
          %v761 = vunpack.c.h.b16 %v722
          %v762 = vunpack.c.l.b16 %v723
          %v763 = vunpack.c.h.b16 %v723
          %v764 = vunpack.c.l.b16 %v724
          %v765 = vunpack.c.h.b16 %v724
          %v766 = vunpack.c.l.b16 %v725
          %v767 = vunpack.c.h.b16 %v725
          %v768 = vunpack.c.l.b16 %v726
          %v769 = vunpack.c.h.b16 %v726
          %v770 = vunpack.c.l.b16 %v727
          %v771 = vunpack.c.h.b16 %v727
          %v772 = vunpack.c.l.b16 %v728
          %v773 = vunpack.c.h.b16 %v728
          %v774 = vunpack.c.l.b16 %v729
          %v775 = vunpack.c.h.b16 %v729
          %v776 = vunpack.c.l.b16 %v730
          %v777 = vunpack.c.h.b16 %v730
          %v778 = vunpack.c.l.b16 %v731
          %v779 = vunpack.c.h.b16 %v731
          %v780 = vunpack.c.l.b16 %v732
          %v781 = vunpack.c.h.b16 %v732
          %v782 = vunpack.c.l.b16 %v733
          %v783 = vunpack.c.h.b16 %v733
          %v784 = vunpack.c.l.b16 %v734
          %v785 = vunpack.c.h.b16 %v734
          %v786 = vunpack.c.l.b16 %v735
          %v787 = vunpack.c.h.b16 %v735
          %v788 = vunpack.c.l.b16 %v736
          %v789 = vunpack.c.h.b16 %v736
          %v790 = vunpack.c.l.b16 %v737
          %v791 = vunpack.c.h.b16 %v737
          %v792 = vpack.c.b16 %v762, %v760
          %v793 = vpack.c.b16 %v763, %v761
          %v794 = vpack.c.b16 %v766, %v764
          %v795 = vpack.c.b16 %v767, %v765
          %v796 = vpack.c.b16 %v770, %v768
          %v797 = vpack.c.b16 %v771, %v769
          %v798 = vpack.c.b16 %v774, %v772
          %v799 = vpack.c.b16 %v775, %v773
          %v800 = vpack.c.b16 %v778, %v776
          %v801 = vpack.c.b16 %v779, %v777
          %v802 = vpack.c.b16 %v782, %v780
          %v803 = vpack.c.b16 %v783, %v781
          %v804 = vpack.c.b16 %v786, %v784
          %v805 = vpack.c.b16 %v787, %v785
          %v806 = vpack.c.b16 %v790, %v788
          %v807 = vpack.c.b16 %v791, %v789
          %824 = vmatpush.bf16.msra.mxu0 %v806
          %825 = vmatpush.bf16.msra.mxu0 %v804
          %826 = vmatpush.bf16.msra.mxu0 %v802
          %827 = vmatpush.bf16.msra.mxu0 %v800
          %828 = vmatpush.bf16.msra.mxu0 %v798
          %829 = vmatpush.bf16.msra.mxu0 %v796
          %830 = vmatpush.bf16.msra.mxu0 %v794
          %831 = vmatpush.bf16.msra.mxu0 %v792
          %832 = vmatmul.bf16.gmra.mxu0 %v721
          %v833 = vpop.f32.mrf.mxu0
          %v834 = vadd.f32 %v740, %v833
          %v835 = vpop.f32.mrf.mxu0
          %v836 = vadd.f32 %v740, %v835
          %837 = vdwg.mxu0
          %838 = vmatpush.bf16.msra.mxu0 %v807
          %839 = vmatpush.bf16.msra.mxu0 %v805
          %840 = vmatpush.bf16.msra.mxu0 %v803
          %841 = vmatpush.bf16.msra.mxu0 %v801
          %842 = vmatpush.bf16.msra.mxu0 %v799
          %843 = vmatpush.bf16.msra.mxu0 %v797
          %844 = vmatpush.bf16.msra.mxu0 %v795
          %845 = vmatpush.bf16.msra.mxu0 %v793
          %846 = vmatmul.bf16.gmra.mxu0 %v721
          %v847 = vpop.f32.mrf.mxu0
          %v848 = vadd.f32 %v741, %v847
          %v849 = vpop.f32.mrf.mxu0
          %v850 = vadd.f32 %v741, %v849
          %851 = vdwg.mxu0
          %854 = vrot.lane.b32.xlu0 %v834, 96
          %v855 = vpop.permute.xlu0 %854
          %856 = vrot.lane.b32.xlu0 %v836, 96
          %v857 = vpop.permute.xlu0 %856
          %860 = vrot.lane.b32.xlu0 %v834, 64
          %v861 = vpop.permute.xlu0 %860
          %862 = vrot.lane.b32.xlu0 %v836, 64
          %v863 = vpop.permute.xlu0 %862
          %866 = vrot.lane.b32.xlu0 %v834, 32
          %v867 = vpop.permute.xlu0 %866
          %868 = vrot.lane.b32.xlu0 %v836, 32
          %v869 = vpop.permute.xlu0 %868
          %v872 = vrot.slane %v861, 4
          %vm873 = vcmask 1047556
          %v874 = vsel %vm873, %v872, %v834
          %v875 = vrot.slane %v834, 4
          %v876 = vsel %vm873, %v861, %v875
          %v878 = vunpack.c.l.s4 1983009808
          %v879 = vunpack.c.0.s8 %v878
          %v880 = vperm.slane %v874, %v879
          %v882 = vunpack.c.l.s4 1983009808
          %v883 = vunpack.c.0.s8 %v882
          %v884 = vperm.slane %v876, %v883
          %v885 = vrot.slane %v867, 4
          %v886 = vsel %vm873, %v885, %v855
          %v887 = vrot.slane %v855, 4
          %v888 = vsel %vm873, %v867, %v887
          %v890 = vunpack.c.l.s4 1983009808
          %v891 = vunpack.c.0.s8 %v890
          %v892 = vperm.slane %v886, %v891
          %v894 = vunpack.c.l.s4 1983009808
          %v895 = vunpack.c.0.s8 %v894
          %v896 = vperm.slane %v888, %v895
          %v897 = vrot.slane %v892, 4
          %v898 = vsel %vm873, %v897, %v880
          %v899 = vrot.slane %v880, 4
          %v900 = vsel %vm873, %v892, %v899
          %v902 = vunpack.c.l.s4 1934713408
          %v903 = vunpack.c.0.s8 %v902
          %v904 = vperm.slane %v898, %v903
          %v906 = vunpack.c.l.s4 1934713408
          %v907 = vunpack.c.0.s8 %v906
          %v908 = vperm.slane %v900, %v907
          %v909 = vrot.slane %v896, 4
          %v910 = vsel %vm873, %v909, %v884
          %v911 = vrot.slane %v884, 4
          %v912 = vsel %vm873, %v896, %v911
          %v914 = vunpack.c.l.s4 1934713408
          %v915 = vunpack.c.0.s8 %v914
          %v916 = vperm.slane %v910, %v915
          %v918 = vunpack.c.l.s4 1934713408
          %v919 = vunpack.c.0.s8 %v918
          %v920 = vperm.slane %v912, %v919
          %v921 = vrot.slane %v904, 4
          %v922 = vsel %vm873, 0.0, %v921
          %v923 = vrot.slane %v908, 4
          %v924 = vsel %vm873, 0.0, %v923
          %v925 = vrot.slane %v916, 4
          %v926 = vsel %vm873, 0.0, %v925
          %v927 = vrot.slane %v920, 4
          %v928 = vsel %vm873, 0.0, %v927
          %v929 = vrot.slane %v863, 4
          %v930 = vsel %vm873, %v929, %v836
          %v931 = vrot.slane %v836, 4
          %v932 = vsel %vm873, %v863, %v931
          %v934 = vunpack.c.l.s4 1983009808
          %v935 = vunpack.c.0.s8 %v934
          %v936 = vperm.slane %v930, %v935
          %v938 = vunpack.c.l.s4 1983009808
          %v939 = vunpack.c.0.s8 %v938
          %v940 = vperm.slane %v932, %v939
          %v941 = vrot.slane %v869, 4
          %v942 = vsel %vm873, %v941, %v857
          %v943 = vrot.slane %v857, 4
          %v944 = vsel %vm873, %v869, %v943
          %v946 = vunpack.c.l.s4 1983009808
          %v947 = vunpack.c.0.s8 %v946
          %v948 = vperm.slane %v942, %v947
          %v950 = vunpack.c.l.s4 1983009808
          %v951 = vunpack.c.0.s8 %v950
          %v952 = vperm.slane %v944, %v951
          %v953 = vrot.slane %v948, 4
          %v954 = vsel %vm873, %v953, %v936
          %v955 = vrot.slane %v936, 4
          %v956 = vsel %vm873, %v948, %v955
          %v958 = vunpack.c.l.s4 1934713408
          %v959 = vunpack.c.0.s8 %v958
          %v960 = vperm.slane %v954, %v959
          %v962 = vunpack.c.l.s4 1934713408
          %v963 = vunpack.c.0.s8 %v962
          %v964 = vperm.slane %v956, %v963
          %v965 = vrot.slane %v952, 4
          %v966 = vsel %vm873, %v965, %v940
          %v967 = vrot.slane %v940, 4
          %v968 = vsel %vm873, %v952, %v967
          %v970 = vunpack.c.l.s4 1934713408
          %v971 = vunpack.c.0.s8 %v970
          %v972 = vperm.slane %v966, %v971
          %v974 = vunpack.c.l.s4 1934713408
          %v975 = vunpack.c.0.s8 %v974
          %v976 = vperm.slane %v968, %v975
          %v977 = vrot.slane %v960, 4
          %v978 = vsel %vm873, 0.0, %v977
          %v979 = vrot.slane %v964, 4
          %v980 = vsel %vm873, 0.0, %v979
          %v981 = vrot.slane %v972, 4
          %v982 = vsel %vm873, 0.0, %v981
          %v983 = vrot.slane %v976, 4
          %v984 = vsel %vm873, 0.0, %v983
          %987 = vrot.lane.b32.xlu0 %v848, 96
          %v988 = vpop.permute.xlu0 %987
          %989 = vrot.lane.b32.xlu0 %v850, 96
          %v990 = vpop.permute.xlu0 %989
          %993 = vrot.lane.b32.xlu0 %v848, 64
          %v994 = vpop.permute.xlu0 %993
          %995 = vrot.lane.b32.xlu0 %v850, 64
          %v996 = vpop.permute.xlu0 %995
          %999 = vrot.lane.b32.xlu0 %v848, 32
          %v1000 = vpop.permute.xlu0 %999
          %1001 = vrot.lane.b32.xlu0 %v850, 32
          %v1002 = vpop.permute.xlu0 %1001
          %v1005 = vrot.slane %v994, 4
          %v1006 = vsel %vm873, %v1005, %v848
          %v1007 = vrot.slane %v848, 4
          %v1008 = vsel %vm873, %v994, %v1007
          %v1010 = vunpack.c.l.s4 1983009808
          %v1011 = vunpack.c.0.s8 %v1010
          %v1012 = vperm.slane %v1006, %v1011
          %v1014 = vunpack.c.l.s4 1983009808
          %v1015 = vunpack.c.0.s8 %v1014
          %v1016 = vperm.slane %v1008, %v1015
          %v1017 = vrot.slane %v1000, 4
          %v1018 = vsel %vm873, %v1017, %v988
          %v1019 = vrot.slane %v988, 4
          %v1020 = vsel %vm873, %v1000, %v1019
          %v1022 = vunpack.c.l.s4 1983009808
          %v1023 = vunpack.c.0.s8 %v1022
          %v1024 = vperm.slane %v1018, %v1023
          %v1026 = vunpack.c.l.s4 1983009808
          %v1027 = vunpack.c.0.s8 %v1026
          %v1028 = vperm.slane %v1020, %v1027
          %v1029 = vrot.slane %v1024, 4
          %v1030 = vsel %vm873, %v1029, %v1012
          %v1031 = vrot.slane %v1012, 4
          %v1032 = vsel %vm873, %v1024, %v1031
          %v1034 = vunpack.c.l.s4 1934713408
          %v1035 = vunpack.c.0.s8 %v1034
          %v1036 = vperm.slane %v1030, %v1035
          %v1038 = vunpack.c.l.s4 1934713408
          %v1039 = vunpack.c.0.s8 %v1038
          %v1040 = vperm.slane %v1032, %v1039
          %v1041 = vrot.slane %v1028, 4
          %v1042 = vsel %vm873, %v1041, %v1016
          %v1043 = vrot.slane %v1016, 4
          %v1044 = vsel %vm873, %v1028, %v1043
          %v1046 = vunpack.c.l.s4 1934713408
          %v1047 = vunpack.c.0.s8 %v1046
          %v1048 = vperm.slane %v1042, %v1047
          %v1050 = vunpack.c.l.s4 1934713408
          %v1051 = vunpack.c.0.s8 %v1050
          %v1052 = vperm.slane %v1044, %v1051
          %v1053 = vrot.slane %v1036, 4
          %v1054 = vsel %vm873, 0.0, %v1053
          %v1055 = vrot.slane %v1040, 4
          %v1056 = vsel %vm873, 0.0, %v1055
          %v1057 = vrot.slane %v1048, 4
          %v1058 = vsel %vm873, 0.0, %v1057
          %v1059 = vrot.slane %v1052, 4
          %v1060 = vsel %vm873, 0.0, %v1059
          %v1061 = vrot.slane %v996, 4
          %v1062 = vsel %vm873, %v1061, %v850
          %v1063 = vrot.slane %v850, 4
          %v1064 = vsel %vm873, %v996, %v1063
          %v1066 = vunpack.c.l.s4 1983009808
          %v1067 = vunpack.c.0.s8 %v1066
          %v1068 = vperm.slane %v1062, %v1067
          %v1070 = vunpack.c.l.s4 1983009808
          %v1071 = vunpack.c.0.s8 %v1070
          %v1072 = vperm.slane %v1064, %v1071
          %v1073 = vrot.slane %v1002, 4
          %v1074 = vsel %vm873, %v1073, %v990
          %v1075 = vrot.slane %v990, 4
          %v1076 = vsel %vm873, %v1002, %v1075
          %v1078 = vunpack.c.l.s4 1983009808
          %v1079 = vunpack.c.0.s8 %v1078
          %v1080 = vperm.slane %v1074, %v1079
          %v1082 = vunpack.c.l.s4 1983009808
          %v1083 = vunpack.c.0.s8 %v1082
          %v1084 = vperm.slane %v1076, %v1083
          %v1085 = vrot.slane %v1080, 4
          %v1086 = vsel %vm873, %v1085, %v1068
          %v1087 = vrot.slane %v1068, 4
          %v1088 = vsel %vm873, %v1080, %v1087
          %v1090 = vunpack.c.l.s4 1934713408
          %v1091 = vunpack.c.0.s8 %v1090
          %v1092 = vperm.slane %v1086, %v1091
          %v1094 = vunpack.c.l.s4 1934713408
          %v1095 = vunpack.c.0.s8 %v1094
          %v1096 = vperm.slane %v1088, %v1095
          %v1097 = vrot.slane %v1084, 4
          %v1098 = vsel %vm873, %v1097, %v1072
          %v1099 = vrot.slane %v1072, 4
          %v1100 = vsel %vm873, %v1084, %v1099
          %v1102 = vunpack.c.l.s4 1934713408
          %v1103 = vunpack.c.0.s8 %v1102
          %v1104 = vperm.slane %v1098, %v1103
          %v1106 = vunpack.c.l.s4 1934713408
          %v1107 = vunpack.c.0.s8 %v1106
          %v1108 = vperm.slane %v1100, %v1107
          %v1109 = vrot.slane %v1092, 4
          %v1110 = vsel %vm873, 0.0, %v1109
          %v1111 = vrot.slane %v1096, 4
          %v1112 = vsel %vm873, 0.0, %v1111
          %v1113 = vrot.slane %v1104, 4
          %v1114 = vsel %vm873, 0.0, %v1113
          %v1115 = vrot.slane %v1108, 4
          %v1116 = vsel %vm873, 0.0, %v1115
          %v1117 = vsel %vm873, %v923, %v904
          %v1119 = vunpack.c.l.s4 1983009808
          %v1120 = vunpack.c.0.s8 %v1119
          %v1121 = vperm.slane %v1117, %v1120
          %v1122 = vrot.slane %v924, 4
          %v1123 = vsel %vm873, %v1122, %v922
          %v1125 = vunpack.c.l.s4 1983009808
          %v1126 = vunpack.c.0.s8 %v1125
          %v1127 = vperm.slane %v1123, %v1126
          %v1128 = vsel %vm873, %v927, %v916
          %v1130 = vunpack.c.l.s4 1983009808
          %v1131 = vunpack.c.0.s8 %v1130
          %v1132 = vperm.slane %v1128, %v1131
          %v1133 = vrot.slane %v928, 4
          %v1134 = vsel %vm873, %v1133, %v926
          %v1136 = vunpack.c.l.s4 1983009808
          %v1137 = vunpack.c.0.s8 %v1136
          %v1138 = vperm.slane %v1134, %v1137
          %v1139 = vrot.slane %v1127, 4
          %v1140 = vsel %vm873, %v1139, %v1121
          %v1141 = vrot.slane %v1121, 4
          %v1142 = vsel %vm873, %v1127, %v1141
          %v1144 = vunpack.c.l.s4 1934713408
          %v1145 = vunpack.c.0.s8 %v1144
          %v1146 = vperm.slane %v1140, %v1145
          %v1148 = vunpack.c.l.s4 1934713408
          %v1149 = vunpack.c.0.s8 %v1148
          %v1150 = vperm.slane %v1142, %v1149
          %v1151 = vrot.slane %v1138, 4
          %v1152 = vsel %vm873, %v1151, %v1132
          %v1153 = vrot.slane %v1132, 4
          %v1154 = vsel %vm873, %v1138, %v1153
          %v1156 = vunpack.c.l.s4 1934713408
          %v1157 = vunpack.c.0.s8 %v1156
          %v1158 = vperm.slane %v1152, %v1157
          %v1160 = vunpack.c.l.s4 1934713408
          %v1161 = vunpack.c.0.s8 %v1160
          %v1162 = vperm.slane %v1154, %v1161
          %v1163 = vrot.slane %v1158, 4
          %v1164 = vsel %vm873, %v1163, %v1146
          %v1165 = vrot.slane %v1146, 4
          %v1166 = vsel %vm873, %v1158, %v1165
          %v1167 = vrot.slane %v1162, 4
          %v1168 = vsel %vm873, %v1167, %v1150
          %v1169 = vrot.slane %v1150, 4
          %v1170 = vsel %vm873, %v1162, %v1169
          %v1171 = vsel %vm873, %v979, %v960
          %v1173 = vunpack.c.l.s4 1983009808
          %v1174 = vunpack.c.0.s8 %v1173
          %v1175 = vperm.slane %v1171, %v1174
          %v1176 = vrot.slane %v980, 4
          %v1177 = vsel %vm873, %v1176, %v978
          %v1179 = vunpack.c.l.s4 1983009808
          %v1180 = vunpack.c.0.s8 %v1179
          %v1181 = vperm.slane %v1177, %v1180
          %v1182 = vsel %vm873, %v983, %v972
          %v1184 = vunpack.c.l.s4 1983009808
          %v1185 = vunpack.c.0.s8 %v1184
          %v1186 = vperm.slane %v1182, %v1185
          %v1187 = vrot.slane %v984, 4
          %v1188 = vsel %vm873, %v1187, %v982
          %v1190 = vunpack.c.l.s4 1983009808
          %v1191 = vunpack.c.0.s8 %v1190
          %v1192 = vperm.slane %v1188, %v1191
          %v1193 = vrot.slane %v1181, 4
          %v1194 = vsel %vm873, %v1193, %v1175
          %v1195 = vrot.slane %v1175, 4
          %v1196 = vsel %vm873, %v1181, %v1195
          %v1198 = vunpack.c.l.s4 1934713408
          %v1199 = vunpack.c.0.s8 %v1198
          %v1200 = vperm.slane %v1194, %v1199
          %v1202 = vunpack.c.l.s4 1934713408
          %v1203 = vunpack.c.0.s8 %v1202
          %v1204 = vperm.slane %v1196, %v1203
          %v1205 = vrot.slane %v1192, 4
          %v1206 = vsel %vm873, %v1205, %v1186
          %v1207 = vrot.slane %v1186, 4
          %v1208 = vsel %vm873, %v1192, %v1207
          %v1210 = vunpack.c.l.s4 1934713408
          %v1211 = vunpack.c.0.s8 %v1210
          %v1212 = vperm.slane %v1206, %v1211
          %v1214 = vunpack.c.l.s4 1934713408
          %v1215 = vunpack.c.0.s8 %v1214
          %v1216 = vperm.slane %v1208, %v1215
          %v1217 = vrot.slane %v1212, 4
          %v1218 = vsel %vm873, %v1217, %v1200
          %v1219 = vrot.slane %v1200, 4
          %v1220 = vsel %vm873, %v1212, %v1219
          %v1221 = vrot.slane %v1216, 4
          %v1222 = vsel %vm873, %v1221, %v1204
          %v1223 = vrot.slane %v1204, 4
          %v1224 = vsel %vm873, %v1216, %v1223
          %v1225 = vpack.c.bf16 %v1164, %v1164
          %v1226 = vpack.c.bf16 %v1218, %v1218
          %v1227 = vpack.c.bf16 %v1166, %v1166
          %v1228 = vpack.c.bf16 %v1220, %v1220
          %v1229 = vpack.c.bf16 %v1168, %v1168
          %v1230 = vpack.c.bf16 %v1222, %v1222
          %v1231 = vpack.c.bf16 %v1170, %v1170
          %v1232 = vpack.c.bf16 %v1224, %v1224
          %vm1233 = vcmask 257024
          %1234 = vst.msk [vmem:[#allocation2] sm:$0xf] %vm1233, %v1225
          %1235 = vst.msk [vmem:[#allocation2 + $0x4] sm:$0xf] %vm1233, %v1226
          %1236 = vst.msk [vmem:[#allocation2 + $0x8] sm:$0xf] %vm1233, %v1227
          %1237 = vst.msk [vmem:[#allocation2 + $0xc] sm:$0xf] %vm1233, %v1228
          %1238 = vst.msk [vmem:[#allocation2 + $0x10] sm:$0xf] %vm1233, %v1229
          %1239 = vst.msk [vmem:[#allocation2 + $0x14] sm:$0xf] %vm1233, %v1230
          %1240 = vst.msk [vmem:[#allocation2 + $0x18] sm:$0xf] %vm1233, %v1231
          %1241 = vst.msk [vmem:[#allocation2 + $0x1c] sm:$0xf] %vm1233, %v1232
          %v1242 = vsel %vm873, %v1055, %v1036
          %v1244 = vunpack.c.l.s4 1983009808
          %v1245 = vunpack.c.0.s8 %v1244
          %v1246 = vperm.slane %v1242, %v1245
          %v1247 = vrot.slane %v1056, 4
          %v1248 = vsel %vm873, %v1247, %v1054
          %v1250 = vunpack.c.l.s4 1983009808
          %v1251 = vunpack.c.0.s8 %v1250
          %v1252 = vperm.slane %v1248, %v1251
          %v1253 = vsel %vm873, %v1059, %v1048
          %v1255 = vunpack.c.l.s4 1983009808
          %v1256 = vunpack.c.0.s8 %v1255
          %v1257 = vperm.slane %v1253, %v1256
          %v1258 = vrot.slane %v1060, 4
          %v1259 = vsel %vm873, %v1258, %v1058
          %v1261 = vunpack.c.l.s4 1983009808
          %v1262 = vunpack.c.0.s8 %v1261
          %v1263 = vperm.slane %v1259, %v1262
          %v1264 = vrot.slane %v1252, 4
          %v1265 = vsel %vm873, %v1264, %v1246
          %v1266 = vrot.slane %v1246, 4
          %v1267 = vsel %vm873, %v1252, %v1266
          %v1269 = vunpack.c.l.s4 1934713408
          %v1270 = vunpack.c.0.s8 %v1269
          %v1271 = vperm.slane %v1265, %v1270
          %v1273 = vunpack.c.l.s4 1934713408
          %v1274 = vunpack.c.0.s8 %v1273
          %v1275 = vperm.slane %v1267, %v1274
          %v1276 = vrot.slane %v1263, 4
          %v1277 = vsel %vm873, %v1276, %v1257
          %v1278 = vrot.slane %v1257, 4
          %v1279 = vsel %vm873, %v1263, %v1278
          %v1281 = vunpack.c.l.s4 1934713408
          %v1282 = vunpack.c.0.s8 %v1281
          %v1283 = vperm.slane %v1277, %v1282
          %v1285 = vunpack.c.l.s4 1934713408
          %v1286 = vunpack.c.0.s8 %v1285
          %v1287 = vperm.slane %v1279, %v1286
          %v1288 = vrot.slane %v1283, 4
          %v1289 = vsel %vm873, %v1288, %v1271
          %v1290 = vrot.slane %v1271, 4
          %v1291 = vsel %vm873, %v1283, %v1290
          %v1292 = vrot.slane %v1287, 4
          %v1293 = vsel %vm873, %v1292, %v1275
          %v1294 = vrot.slane %v1275, 4
          %v1295 = vsel %vm873, %v1287, %v1294
          %v1296 = vsel %vm873, %v1111, %v1092
          %v1298 = vunpack.c.l.s4 1983009808
          %v1299 = vunpack.c.0.s8 %v1298
          %v1300 = vperm.slane %v1296, %v1299
          %v1301 = vrot.slane %v1112, 4
          %v1302 = vsel %vm873, %v1301, %v1110
          %v1304 = vunpack.c.l.s4 1983009808
          %v1305 = vunpack.c.0.s8 %v1304
          %v1306 = vperm.slane %v1302, %v1305
          %v1307 = vsel %vm873, %v1115, %v1104
          %v1309 = vunpack.c.l.s4 1983009808
          %v1310 = vunpack.c.0.s8 %v1309
          %v1311 = vperm.slane %v1307, %v1310
          %v1312 = vrot.slane %v1116, 4
          %v1313 = vsel %vm873, %v1312, %v1114
          %v1315 = vunpack.c.l.s4 1983009808
          %v1316 = vunpack.c.0.s8 %v1315
          %v1317 = vperm.slane %v1313, %v1316
          %v1318 = vrot.slane %v1306, 4
          %v1319 = vsel %vm873, %v1318, %v1300
          %v1320 = vrot.slane %v1300, 4
          %v1321 = vsel %vm873, %v1306, %v1320
          %v1323 = vunpack.c.l.s4 1934713408
          %v1324 = vunpack.c.0.s8 %v1323
          %v1325 = vperm.slane %v1319, %v1324
          %v1327 = vunpack.c.l.s4 1934713408
          %v1328 = vunpack.c.0.s8 %v1327
          %v1329 = vperm.slane %v1321, %v1328
          %v1330 = vrot.slane %v1317, 4
          %v1331 = vsel %vm873, %v1330, %v1311
          %v1332 = vrot.slane %v1311, 4
          %v1333 = vsel %vm873, %v1317, %v1332
          %v1335 = vunpack.c.l.s4 1934713408
          %v1336 = vunpack.c.0.s8 %v1335
          %v1337 = vperm.slane %v1331, %v1336
          %v1339 = vunpack.c.l.s4 1934713408
          %v1340 = vunpack.c.0.s8 %v1339
          %v1341 = vperm.slane %v1333, %v1340
          %v1342 = vrot.slane %v1337, 4
          %v1343 = vsel %vm873, %v1342, %v1325
          %v1344 = vrot.slane %v1325, 4
          %v1345 = vsel %vm873, %v1337, %v1344
          %v1346 = vrot.slane %v1341, 4
          %v1347 = vsel %vm873, %v1346, %v1329
          %v1348 = vrot.slane %v1329, 4
          %v1349 = vsel %vm873, %v1341, %v1348
          %v1350 = vpack.c.bf16 %v1289, %v1289
          %v1351 = vpack.c.bf16 %v1343, %v1343
          %v1352 = vpack.c.bf16 %v1291, %v1291
          %v1353 = vpack.c.bf16 %v1345, %v1345
          %v1354 = vpack.c.bf16 %v1293, %v1293
          %v1355 = vpack.c.bf16 %v1347, %v1347
          %v1356 = vpack.c.bf16 %v1295, %v1295
          %v1357 = vpack.c.bf16 %v1349, %v1349
          %1358 = vst.msk [vmem:[#allocation3] sm:$0xf] %vm1233, %v1350
          %1359 = vst.msk [vmem:[#allocation3 + $0x4] sm:$0xf] %vm1233, %v1351
          %1360 = vst.msk [vmem:[#allocation3 + $0x8] sm:$0xf] %vm1233, %v1352
          %1361 = vst.msk [vmem:[#allocation3 + $0xc] sm:$0xf] %vm1233, %v1353
          %1362 = vst.msk [vmem:[#allocation3 + $0x10] sm:$0xf] %vm1233, %v1354
          %1363 = vst.msk [vmem:[#allocation3 + $0x14] sm:$0xf] %vm1233, %v1355
          %1364 = vst.msk [vmem:[#allocation3 + $0x18] sm:$0xf] %vm1233, %v1356
          %1365 = vst.msk [vmem:[#allocation3 + $0x1c] sm:$0xf] %vm1233, %v1357
        $region120: #{tpu_custom_call.1} parent=79 // pred_fallthru
          _
        %s1366 = smul.u32 %s41, 8
        %s1367 = scalar_lea.vmem %s567, %s1366 [#allocation4]
        %v1368 = vld [vmem:[%s1367] sm:$0xff]
        %v1369 = vld [vmem:[#allocation7] sm:$0x1]
        %v1370 = vld [vmem:[%s2] sm:$0x1]
        %1371 = vadd.xlane.f32.xlu0 %v1368
        %v1372 = vpop.xlane.xlu0 %1371
        %v1373 = vrcp.pop 128.0
        %v1374 = vmul.f32 128.0, %v1373
        %v1375 = vsub.f32 1.0, %v1374
        %v1376 = vmul.f32 %v1373, %v1375
        %v1377 = vadd.f32 %v1373, %v1376
        %vm1378 = vweird.f32 %v1373
        %v1379 = vsel %vm1378, %v1373, %v1377
        %v1380 = vmul.f32 %v1372, %v1379
        %v1381 = vsub.f32 %v1368, %v1380
        %v1382 = vmul.f32 %v1381, %v1381
        %1383 = vadd.xlane.f32.xlu0 %v1382
        %v1384 = vpop.xlane.xlu0 %1383
        %v1385 = vmul.f32 %v1384, %v1379
        %v1386 = vadd.f32 %v1385, 1e-05
        %v1387 = vrsqrt.pop %v1386
        %v1388 = vmul.f32 %v1387, %v1386
        %v1389 = vmul.f32 %v1388, %v1387
        %v1390 = vmul.f32 0.5, %v1389
        %v1391 = vsub.f32 1.5, %v1390
        %v1392 = vmul.f32 %v1387, %v1391
        %vm1393 = vweird.f32 %v1386
        %vm1394 = vweird.f32 %v1387
        %vm1395 = vmor %vm1393, %vm1394
        %v1396 = vsel %vm1395, %v1387, %v1392
        %v1397 = vmul.f32 %v1381, %v1396
        %v1399 = vperm.slane %v1369, 0
        %v1401 = vmul.f32 %v1397, %v1399
        %v1403 = vperm.slane %v1370, 0
        %v1405 = vadd.f32 %v1401, %v1403
        %v1406 = vpack.c.bf16 %v1405, %v1405
        %v1407 = vld [vmem:[#allocation9] sm:$0xf]
        %v1408 = vld [vmem:[#allocation9 + $0x4] sm:$0xf]
        %v1409 = vld [vmem:[#allocation9 + $0x8] sm:$0xf]
        %v1410 = vld [vmem:[#allocation9 + $0xc] sm:$0xf]
        %v1411 = vld [vmem:[#allocation9 + $0x10] sm:$0xf]
        %v1412 = vld [vmem:[#allocation9 + $0x14] sm:$0xf]
        %v1413 = vld [vmem:[#allocation9 + $0x18] sm:$0xf]
        %v1414 = vld [vmem:[#allocation9 + $0x1c] sm:$0xf]
        %v1415 = vld [vmem:[#allocation9 + $0x20] sm:$0xf]
        %v1416 = vld [vmem:[#allocation9 + $0x24] sm:$0xf]
        %v1417 = vld [vmem:[#allocation9 + $0x28] sm:$0xf]
        %v1418 = vld [vmem:[#allocation9 + $0x2c] sm:$0xf]
        %v1419 = vld [vmem:[#allocation9 + $0x30] sm:$0xf]
        %v1420 = vld [vmem:[#allocation9 + $0x34] sm:$0xf]
        %v1421 = vld [vmem:[#allocation9 + $0x38] sm:$0xf]
        %v1422 = vld [vmem:[#allocation9 + $0x3c] sm:$0xf]
        %v1423 = vld [vmem:[#allocation10] sm:$0x1]
        %v1425 = vperm.slane %v1423, 0
        %v1443 = vunpack.c.l.b16 %v1407
        %v1444 = vunpack.c.l.b16 %v1408
        %v1445 = vunpack.c.l.b16 %v1409
        %v1446 = vunpack.c.l.b16 %v1410
        %v1447 = vunpack.c.l.b16 %v1411
        %v1448 = vunpack.c.l.b16 %v1412
        %v1449 = vunpack.c.l.b16 %v1413
        %v1450 = vunpack.c.l.b16 %v1414
        %v1451 = vunpack.c.l.b16 %v1415
        %v1452 = vunpack.c.l.b16 %v1416
        %v1453 = vunpack.c.l.b16 %v1417
        %v1454 = vunpack.c.l.b16 %v1418
        %v1455 = vunpack.c.l.b16 %v1419
        %v1456 = vunpack.c.l.b16 %v1420
        %v1457 = vunpack.c.l.b16 %v1421
        %v1458 = vunpack.c.l.b16 %v1422
        %v1459 = vpack.c.b16 %v1444, %v1443
        %v1460 = vpack.c.b16 %v1446, %v1445
        %v1461 = vpack.c.b16 %v1448, %v1447
        %v1462 = vpack.c.b16 %v1450, %v1449
        %v1463 = vpack.c.b16 %v1452, %v1451
        %v1464 = vpack.c.b16 %v1454, %v1453
        %v1465 = vpack.c.b16 %v1456, %v1455
        %v1466 = vpack.c.b16 %v1458, %v1457
        %1475 = vmatpush.bf16.msra.mxu0 %v1466
        %1476 = vmatpush.bf16.msra.mxu0 %v1465
        %1477 = vmatpush.bf16.msra.mxu0 %v1464
        %1478 = vmatpush.bf16.msra.mxu0 %v1463
        %1479 = vmatpush.bf16.msra.mxu0 %v1462
        %1480 = vmatpush.bf16.msra.mxu0 %v1461
        %1481 = vmatpush.bf16.msra.mxu0 %v1460
        %1482 = vmatpush.bf16.msra.mxu0 %v1459
        %1483 = vmatmul.bf16.gmra.mxu0 %v1406
        %v1484 = vpop.f32.mrf.mxu0
        %v1485 = vadd.f32 %v1425, %v1484
        %v1486 = vpop.f32.mrf.mxu0
        %1487 = vdwg.mxu0
        %v1488 = vmul.f32 %v1485, 0.17677669
        %1490 = vrot.lane.b32.xlu0 %v1488, 96
        %v1491 = vpop.permute.xlu0 %1490
        %1493 = vrot.lane.b32.xlu0 %v1488, 64
        %v1494 = vpop.permute.xlu0 %1493
        %1496 = vrot.lane.b32.xlu0 %v1488, 32
        %v1497 = vpop.permute.xlu0 %1496
        %v1499 = vrot.slane %v1494, 4
        %vm1500 = vcmask 1047556
        %v1501 = vsel %vm1500, %v1499, %v1488
        %v1502 = vrot.slane %v1488, 4
        %v1503 = vsel %vm1500, %v1494, %v1502
        %v1505 = vunpack.c.l.s4 1983009808
        %v1506 = vunpack.c.0.s8 %v1505
        %v1507 = vperm.slane %v1501, %v1506
        %v1509 = vunpack.c.l.s4 1983009808
        %v1510 = vunpack.c.0.s8 %v1509
        %v1511 = vperm.slane %v1503, %v1510
        %v1512 = vrot.slane %v1497, 4
        %v1513 = vsel %vm1500, %v1512, %v1491
        %v1514 = vrot.slane %v1491, 4
        %v1515 = vsel %vm1500, %v1497, %v1514
        %v1517 = vunpack.c.l.s4 1983009808
        %v1518 = vunpack.c.0.s8 %v1517
        %v1519 = vperm.slane %v1513, %v1518
        %v1521 = vunpack.c.l.s4 1983009808
        %v1522 = vunpack.c.0.s8 %v1521
        %v1523 = vperm.slane %v1515, %v1522
        %v1524 = vrot.slane %v1519, 4
        %v1525 = vsel %vm1500, %v1524, %v1507
        %v1526 = vrot.slane %v1507, 4
        %v1527 = vsel %vm1500, %v1519, %v1526
        %v1529 = vunpack.c.l.s4 1934713408
        %v1530 = vunpack.c.0.s8 %v1529
        %v1531 = vperm.slane %v1525, %v1530
        %v1533 = vunpack.c.l.s4 1934713408
        %v1534 = vunpack.c.0.s8 %v1533
        %v1535 = vperm.slane %v1527, %v1534
        %v1536 = vrot.slane %v1523, 4
        %v1537 = vsel %vm1500, %v1536, %v1511
        %v1538 = vrot.slane %v1511, 4
        %v1539 = vsel %vm1500, %v1523, %v1538
        %v1541 = vunpack.c.l.s4 1934713408
        %v1542 = vunpack.c.0.s8 %v1541
        %v1543 = vperm.slane %v1537, %v1542
        %v1545 = vunpack.c.l.s4 1934713408
        %v1546 = vunpack.c.0.s8 %v1545
        %v1547 = vperm.slane %v1539, %v1546
        %v1548 = vrot.slane %v1531, 4
        %v1549 = vsel %vm1500, 0.0, %v1548
        %v1550 = vrot.slane %v1535, 4
        %v1551 = vsel %vm1500, 0.0, %v1550
        %v1552 = vrot.slane %v1543, 4
        %v1553 = vsel %vm1500, 0.0, %v1552
        %v1554 = vrot.slane %v1547, 4
        %v1555 = vsel %vm1500, 0.0, %v1554
        %v1556 = vpack.c.bf16 %v1531, %v1531
        %v1557 = vpack.c.bf16 %v1549, %v1549
        %v1558 = vpack.c.bf16 %v1535, %v1535
        %v1559 = vpack.c.bf16 %v1551, %v1551
        %v1560 = vpack.c.bf16 %v1543, %v1543
        %v1561 = vpack.c.bf16 %v1553, %v1553
        %v1562 = vpack.c.bf16 %v1547, %v1547
        %v1563 = vpack.c.bf16 %v1555, %v1555
        %v1564 = vld [vmem:[#allocation2] sm:$0xf]
        %v1565 = vld [vmem:[#allocation2 + $0x4] sm:$0xf]
        %v1566 = vld [vmem:[#allocation2 + $0x8] sm:$0xf]
        %v1567 = vld [vmem:[#allocation2 + $0xc] sm:$0xf]
        %v1568 = vld [vmem:[#allocation2 + $0x10] sm:$0xf]
        %v1569 = vld [vmem:[#allocation2 + $0x14] sm:$0xf]
        %v1570 = vld [vmem:[#allocation2 + $0x18] sm:$0xf]
        %v1571 = vld [vmem:[#allocation2 + $0x1c] sm:$0xf]
        %v1572 = vrot.slane %v1560, 4
        %vm1573 = vcmask 1047556
        %v1574 = vsel %vm1573, %v1572, %v1556
        %v1576 = vunpack.c.l.s4 1983009808
        %v1577 = vunpack.c.0.s8 %v1576
        %v1578 = vperm.slane %v1574, %v1577
        %v1579 = vrot.slane %v1562, 4
        %v1580 = vsel %vm1573, %v1579, %v1558
        %v1582 = vunpack.c.l.s4 1983009808
        %v1583 = vunpack.c.0.s8 %v1582
        %v1584 = vperm.slane %v1580, %v1583
        %v1585 = vrot.slane %v1584, 4
        %v1586 = vsel %vm1573, %v1585, %v1578
        %v1588 = vunpack.c.l.s4 1934713408
        %v1589 = vunpack.c.0.s8 %v1588
        %v1590 = vperm.slane %v1586, %v1589
        %v1591 = vrot.slane %v1590, 4
        %v1592 = vsel %vm1573, 0, %v1591
        %v1593 = vrot.slane %v1561, 4
        %v1594 = vsel %vm1573, %v1593, %v1557
        %v1596 = vunpack.c.l.s4 1983009808
        %v1597 = vunpack.c.0.s8 %v1596
        %v1598 = vperm.slane %v1594, %v1597
        %v1599 = vrot.slane %v1563, 4
        %v1600 = vsel %vm1573, %v1599, %v1559
        %v1602 = vunpack.c.l.s4 1983009808
        %v1603 = vunpack.c.0.s8 %v1602
        %v1604 = vperm.slane %v1600, %v1603
        %v1605 = vrot.slane %v1604, 4
        %v1606 = vsel %vm1573, %v1605, %v1598
        %v1608 = vunpack.c.l.s4 1934713408
        %v1609 = vunpack.c.0.s8 %v1608
        %v1610 = vperm.slane %v1606, %v1609
        %v1611 = vrot.slane %v1610, 4
        %v1612 = vsel %vm1573, 0, %v1611
        %v1615 = vpack.i.b16 %v1610, %v1590
        %v1616 = vshrl.u32 %v1590, 16
        %v1617 = vshrl.u32 %v1610, 16
        %v1618 = vpack.i.b16 %v1617, %v1616
        %v1621 = vpack.i.b16 %v1612, %v1592
        %v1622 = vshrl.u32 %v1592, 16
        %v1623 = vshrl.u32 %v1612, 16
        %v1624 = vpack.i.b16 %v1623, %v1622
        %v1627 = vunpack.c.l.b16 %v1564
        %v1628 = vunpack.c.l.b16 %v1565
        %v1629 = vpack.c.b16 %v1628, %v1627
        %vm1630 = vcmask 261120
        %v1632 = vsel %vm1630, %v1615, 0
        %v1635 = vsel %vm1630, %v1629, 0
        %1637 = vmatpush.bf16.xpose.msra.mxu0 0
        %1638 = vmatpush.bf16.xpose.msra.mxu0 0
        %1639 = vmatpush.bf16.xpose.msra.mxu0 0
        %1640 = vmatpush.bf16.xpose.msra.mxu0 0
        %1641 = vmatpush.bf16.xpose.msra.mxu0 0
        %1642 = vmatpush.bf16.xpose.msra.mxu0 0
        %1643 = vmatpush.bf16.xpose.msra.mxu0 0
        %1644 = vmatpush.bf16.xpose.msra.mxu0 %v1635
        %1645 = vmatmul.bf16.gmra.mxu0 %v1632
        %v1646 = vpop.f32.mrf.mxu0
        %v1647 = vadd.f32 0.0, %v1646
        %v1648 = vpop.f32.mrf.mxu0
        %1649 = vdwg.mxu0
        %v1652 = vunpack.c.l.b16 %v1566
        %v1653 = vunpack.c.l.b16 %v1567
        %v1654 = vpack.c.b16 %v1653, %v1652
        %v1656 = vsel %vm1630, %v1618, 0
        %v1659 = vsel %vm1630, %v1654, 0
        %1661 = vmatpush.bf16.xpose.msra.mxu0 0
        %1662 = vmatpush.bf16.xpose.msra.mxu0 0
        %1663 = vmatpush.bf16.xpose.msra.mxu0 0
        %1664 = vmatpush.bf16.xpose.msra.mxu0 0
        %1665 = vmatpush.bf16.xpose.msra.mxu0 0
        %1666 = vmatpush.bf16.xpose.msra.mxu0 0
        %1667 = vmatpush.bf16.xpose.msra.mxu0 0
        %1668 = vmatpush.bf16.xpose.msra.mxu0 %v1659
        %1669 = vmatmul.bf16.gmra.mxu0 %v1656
        %v1670 = vpop.f32.mrf.mxu0
        %v1671 = vadd.f32 0.0, %v1670
        %v1672 = vpop.f32.mrf.mxu0
        %1673 = vdwg.mxu0
        %v1676 = vunpack.c.l.b16 %v1568
        %v1677 = vunpack.c.l.b16 %v1569
        %v1678 = vpack.c.b16 %v1677, %v1676
        %v1680 = vsel %vm1630, %v1621, 0
        %v1683 = vsel %vm1630, %v1678, 0
        %1685 = vmatpush.bf16.xpose.msra.mxu0 0
        %1686 = vmatpush.bf16.xpose.msra.mxu0 0
        %1687 = vmatpush.bf16.xpose.msra.mxu0 0
        %1688 = vmatpush.bf16.xpose.msra.mxu0 0
        %1689 = vmatpush.bf16.xpose.msra.mxu0 0
        %1690 = vmatpush.bf16.xpose.msra.mxu0 0
        %1691 = vmatpush.bf16.xpose.msra.mxu0 0
        %1692 = vmatpush.bf16.xpose.msra.mxu0 %v1683
        %1693 = vmatmul.bf16.gmra.mxu0 %v1680
        %v1694 = vpop.f32.mrf.mxu0
        %v1695 = vadd.f32 0.0, %v1694
        %v1696 = vpop.f32.mrf.mxu0
        %1697 = vdwg.mxu0
        %v1700 = vunpack.c.l.b16 %v1570
        %v1701 = vunpack.c.l.b16 %v1571
        %v1702 = vpack.c.b16 %v1701, %v1700
        %v1704 = vsel %vm1630, %v1624, 0
        %v1707 = vsel %vm1630, %v1702, 0
        %1709 = vmatpush.bf16.xpose.msra.mxu0 0
        %1710 = vmatpush.bf16.xpose.msra.mxu0 0
        %1711 = vmatpush.bf16.xpose.msra.mxu0 0
        %1712 = vmatpush.bf16.xpose.msra.mxu0 0
        %1713 = vmatpush.bf16.xpose.msra.mxu0 0
        %1714 = vmatpush.bf16.xpose.msra.mxu0 0
        %1715 = vmatpush.bf16.xpose.msra.mxu0 0
        %1716 = vmatpush.bf16.xpose.msra.mxu0 %v1707
        %1717 = vmatmul.bf16.gmra.mxu0 %v1704
        %v1718 = vpop.f32.mrf.mxu0
        %v1719 = vadd.f32 0.0, %v1718
        %v1720 = vpop.f32.mrf.mxu0
        %1721 = vdwg.mxu0
        %vm1722 = vcmask 130048
        %v1723 = vsel %vm1722, %v1647, -inf
        %1724 = vmax.xlane.f32.xlu0 %v1723
        %v1725 = vpop.xlane.xlu0 %1724
        %v1726 = vsel %vm1722, %v1671, -inf
        %1727 = vmax.xlane.f32.xlu0 %v1726
        %v1728 = vpop.xlane.xlu0 %1727
        %v1729 = vsel %vm1722, %v1695, -inf
        %1730 = vmax.xlane.f32.xlu0 %v1729
        %v1731 = vpop.xlane.xlu0 %1730
        %v1732 = vsel %vm1722, %v1719, -inf
        %1733 = vmax.xlane.f32.xlu0 %v1732
        %v1734 = vpop.xlane.xlu0 %1733
        %v1735 = vsub.f32 %v1647, %v1725
        %v1736 = vsub.f32 %v1671, %v1728
        %v1737 = vsub.f32 %v1695, %v1731
        %v1738 = vsub.f32 %v1719, %v1734
        %v1739 = vmul.f32 %v1735, 1.442695
        %v1740 = vpow.pop %v1739
        %v1741 = vmul.f32 %v1736, 1.442695
        %v1742 = vpow.pop %v1741
        %v1743 = vmul.f32 %v1737, 1.442695
        %v1744 = vpow.pop %v1743
        %v1745 = vmul.f32 %v1738, 1.442695
        %v1746 = vpow.pop %v1745
        %v1747 = vsel %vm1722, %v1740, 0.0
        %1748 = vadd.xlane.f32.xlu0 %v1747
        %v1749 = vpop.xlane.xlu0 %1748
        %v1750 = vsel %vm1722, %v1742, 0.0
        %1751 = vadd.xlane.f32.xlu0 %v1750
        %v1752 = vpop.xlane.xlu0 %1751
        %v1753 = vsel %vm1722, %v1744, 0.0
        %1754 = vadd.xlane.f32.xlu0 %v1753
        %v1755 = vpop.xlane.xlu0 %1754
        %v1756 = vsel %vm1722, %v1746, 0.0
        %1757 = vadd.xlane.f32.xlu0 %v1756
        %v1758 = vpop.xlane.xlu0 %1757
        %v1759 = vpack.c.bf16 %v1740, %v1740
        %v1760 = vpack.c.bf16 %v1742, %v1742
        %v1761 = vpack.c.bf16 %v1744, %v1744
        %v1762 = vpack.c.bf16 %v1746, %v1746
        %v1763 = vld [vmem:[#allocation3] sm:$0xf]
        %v1764 = vld [vmem:[#allocation3 + $0x4] sm:$0xf]
        %v1765 = vld [vmem:[#allocation3 + $0x8] sm:$0xf]
        %v1766 = vld [vmem:[#allocation3 + $0xc] sm:$0xf]
        %v1767 = vld [vmem:[#allocation3 + $0x10] sm:$0xf]
        %v1768 = vld [vmem:[#allocation3 + $0x14] sm:$0xf]
        %v1769 = vld [vmem:[#allocation3 + $0x18] sm:$0xf]
        %v1770 = vld [vmem:[#allocation3 + $0x1c] sm:$0xf]
        %v1773 = vunpack.c.l.b16 %v1763
        %v1774 = vunpack.c.l.b16 %v1764
        %v1775 = vpack.c.b16 %v1774, %v1773
        %1777 = vxpose.xlu0.c.b16.start [1/8] %v1775, 128
        %1778 = vxpose.xlu0.c.b16.cont [2/8] 0, 128
        %1779 = vxpose.xlu0.c.b16.cont [3/8] 0, 128
        %1780 = vxpose.xlu0.c.b16.cont [4/8] 0, 128
        %1781 = vxpose.xlu0.c.b16.cont [5/8] 0, 128
        %1782 = vxpose.xlu0.c.b16.cont [6/8] 0, 128
        %1783 = vxpose.xlu0.c.b16.cont [7/8] 0, 128
        %1784 = vxpose.xlu0.c.b16.end [8/8] 0, 128
        %v1785 = vpop.trf.xlu0
        %v1786 = vpop.trf.xlu0
        %v1787 = vpop.trf.xlu0
        %v1788 = vpop.trf.xlu0
        %v1789 = vpop.trf.xlu0
        %v1790 = vpop.trf.xlu0
        %v1791 = vpop.trf.xlu0
        %v1792 = vpop.trf.xlu0
        %v1794 = vsel %vm1722, %v1785, 0
        %v1797 = vsel %vm1722, %v1786, 0
        %v1800 = vsel %vm1722, %v1759, 0
        %1802 = vmatpush.bf16.xpose.msra.mxu0 0
        %1803 = vmatpush.bf16.xpose.msra.mxu0 0
        %1804 = vmatpush.bf16.xpose.msra.mxu0 0
        %1805 = vmatpush.bf16.xpose.msra.mxu0 0
        %1806 = vmatpush.bf16.xpose.msra.mxu0 0
        %1807 = vmatpush.bf16.xpose.msra.mxu0 0
        %1808 = vmatpush.bf16.xpose.msra.mxu0 0
        %1809 = vmatpush.bf16.xpose.msra.mxu0 %v1800
        %1810 = vmatmul.bf16.gmra.mxu0 %v1794
        %v1811 = vpop.f32.mrf.mxu0
        %v1812 = vadd.f32 0.0, %v1811
        %v1813 = vpop.f32.mrf.mxu0
        %v1814 = vadd.f32 0.0, %v1813
        %1815 = vmatmul.bf16.gmra.mxu0 %v1797
        %v1816 = vpop.f32.mrf.mxu0
        %v1817 = vadd.f32 0.0, %v1816
        %v1818 = vpop.f32.mrf.mxu0
        %v1819 = vadd.f32 0.0, %v1818
        %1820 = vdwg.mxu0
        %v1823 = vunpack.c.l.b16 %v1765
        %v1824 = vunpack.c.l.b16 %v1766
        %v1825 = vpack.c.b16 %v1824, %v1823
        %1827 = vxpose.xlu0.c.b16.start [1/8] %v1825, 128
        %1828 = vxpose.xlu0.c.b16.cont [2/8] 0, 128
        %1829 = vxpose.xlu0.c.b16.cont [3/8] 0, 128
        %1830 = vxpose.xlu0.c.b16.cont [4/8] 0, 128
        %1831 = vxpose.xlu0.c.b16.cont [5/8] 0, 128
        %1832 = vxpose.xlu0.c.b16.cont [6/8] 0, 128
        %1833 = vxpose.xlu0.c.b16.cont [7/8] 0, 128
        %1834 = vxpose.xlu0.c.b16.end [8/8] 0, 128
        %v1835 = vpop.trf.xlu0
        %v1836 = vpop.trf.xlu0
        %v1837 = vpop.trf.xlu0
        %v1838 = vpop.trf.xlu0
        %v1839 = vpop.trf.xlu0
        %v1840 = vpop.trf.xlu0
        %v1841 = vpop.trf.xlu0
        %v1842 = vpop.trf.xlu0
        %v1844 = vsel %vm1722, %v1835, 0
        %v1847 = vsel %vm1722, %v1836, 0
        %v1850 = vsel %vm1722, %v1760, 0
        %1852 = vmatpush.bf16.xpose.msra.mxu0 0
        %1853 = vmatpush.bf16.xpose.msra.mxu0 0
        %1854 = vmatpush.bf16.xpose.msra.mxu0 0
        %1855 = vmatpush.bf16.xpose.msra.mxu0 0
        %1856 = vmatpush.bf16.xpose.msra.mxu0 0
        %1857 = vmatpush.bf16.xpose.msra.mxu0 0
        %1858 = vmatpush.bf16.xpose.msra.mxu0 0
        %1859 = vmatpush.bf16.xpose.msra.mxu0 %v1850
        %1860 = vmatmul.bf16.gmra.mxu0 %v1844
        %v1861 = vpop.f32.mrf.mxu0
        %v1862 = vadd.f32 0.0, %v1861
        %v1863 = vpop.f32.mrf.mxu0
        %v1864 = vadd.f32 0.0, %v1863
        %1865 = vmatmul.bf16.gmra.mxu0 %v1847
        %v1866 = vpop.f32.mrf.mxu0
        %v1867 = vadd.f32 0.0, %v1866
        %v1868 = vpop.f32.mrf.mxu0
        %v1869 = vadd.f32 0.0, %v1868
        %1870 = vdwg.mxu0
        %v1873 = vunpack.c.l.b16 %v1767
        %v1874 = vunpack.c.l.b16 %v1768
        %v1875 = vpack.c.b16 %v1874, %v1873
        %1877 = vxpose.xlu0.c.b16.start [1/8] %v1875, 128
        %1878 = vxpose.xlu0.c.b16.cont [2/8] 0, 128
        %1879 = vxpose.xlu0.c.b16.cont [3/8] 0, 128
        %1880 = vxpose.xlu0.c.b16.cont [4/8] 0, 128
        %1881 = vxpose.xlu0.c.b16.cont [5/8] 0, 128
        %1882 = vxpose.xlu0.c.b16.cont [6/8] 0, 128
        %1883 = vxpose.xlu0.c.b16.cont [7/8] 0, 128
        %1884 = vxpose.xlu0.c.b16.end [8/8] 0, 128
        %v1885 = vpop.trf.xlu0
        %v1886 = vpop.trf.xlu0
        %v1887 = vpop.trf.xlu0
        %v1888 = vpop.trf.xlu0
        %v1889 = vpop.trf.xlu0
        %v1890 = vpop.trf.xlu0
        %v1891 = vpop.trf.xlu0
        %v1892 = vpop.trf.xlu0
        %v1894 = vsel %vm1722, %v1885, 0
        %v1897 = vsel %vm1722, %v1886, 0
        %v1900 = vsel %vm1722, %v1761, 0
        %1902 = vmatpush.bf16.xpose.msra.mxu0 0
        %1903 = vmatpush.bf16.xpose.msra.mxu0 0
        %1904 = vmatpush.bf16.xpose.msra.mxu0 0
        %1905 = vmatpush.bf16.xpose.msra.mxu0 0
        %1906 = vmatpush.bf16.xpose.msra.mxu0 0
        %1907 = vmatpush.bf16.xpose.msra.mxu0 0
        %1908 = vmatpush.bf16.xpose.msra.mxu0 0
        %1909 = vmatpush.bf16.xpose.msra.mxu0 %v1900
        %1910 = vmatmul.bf16.gmra.mxu0 %v1894
        %v1911 = vpop.f32.mrf.mxu0
        %v1912 = vadd.f32 0.0, %v1911
        %v1913 = vpop.f32.mrf.mxu0
        %v1914 = vadd.f32 0.0, %v1913
        %1915 = vmatmul.bf16.gmra.mxu0 %v1897
        %v1916 = vpop.f32.mrf.mxu0
        %v1917 = vadd.f32 0.0, %v1916
        %v1918 = vpop.f32.mrf.mxu0
        %v1919 = vadd.f32 0.0, %v1918
        %1920 = vdwg.mxu0
        %v1923 = vunpack.c.l.b16 %v1769
        %v1924 = vunpack.c.l.b16 %v1770
        %v1925 = vpack.c.b16 %v1924, %v1923
        %1927 = vxpose.xlu0.c.b16.start [1/8] %v1925, 128
        %1928 = vxpose.xlu0.c.b16.cont [2/8] 0, 128
        %1929 = vxpose.xlu0.c.b16.cont [3/8] 0, 128
        %1930 = vxpose.xlu0.c.b16.cont [4/8] 0, 128
        %1931 = vxpose.xlu0.c.b16.cont [5/8] 0, 128
        %1932 = vxpose.xlu0.c.b16.cont [6/8] 0, 128
        %1933 = vxpose.xlu0.c.b16.cont [7/8] 0, 128
        %1934 = vxpose.xlu0.c.b16.end [8/8] 0, 128
        %v1935 = vpop.trf.xlu0
        %v1936 = vpop.trf.xlu0
        %v1937 = vpop.trf.xlu0
        %v1938 = vpop.trf.xlu0
        %v1939 = vpop.trf.xlu0
        %v1940 = vpop.trf.xlu0
        %v1941 = vpop.trf.xlu0
        %v1942 = vpop.trf.xlu0
        %v1944 = vsel %vm1722, %v1935, 0
        %v1947 = vsel %vm1722, %v1936, 0
        %v1950 = vsel %vm1722, %v1762, 0
        %1952 = vmatpush.bf16.xpose.msra.mxu0 0
        %1953 = vmatpush.bf16.xpose.msra.mxu0 0
        %1954 = vmatpush.bf16.xpose.msra.mxu0 0
        %1955 = vmatpush.bf16.xpose.msra.mxu0 0
        %1956 = vmatpush.bf16.xpose.msra.mxu0 0
        %1957 = vmatpush.bf16.xpose.msra.mxu0 0
        %1958 = vmatpush.bf16.xpose.msra.mxu0 0
        %1959 = vmatpush.bf16.xpose.msra.mxu0 %v1950
        %1960 = vmatmul.bf16.gmra.mxu0 %v1944
        %v1961 = vpop.f32.mrf.mxu0
        %v1962 = vadd.f32 0.0, %v1961
        %v1963 = vpop.f32.mrf.mxu0
        %v1964 = vadd.f32 0.0, %v1963
        %1965 = vmatmul.bf16.gmra.mxu0 %v1947
        %v1966 = vpop.f32.mrf.mxu0
        %v1967 = vadd.f32 0.0, %v1966
        %v1968 = vpop.f32.mrf.mxu0
        %v1969 = vadd.f32 0.0, %v1968
        %1970 = vdwg.mxu0
        %1971 = vxpose.xlu0.b32.start [1/16] %v1812, 128
        %1972 = vxpose.xlu0.b32.cont [2/16] %v1814, 128
        %1973 = vxpose.xlu0.b32.cont [3/16] %v1817, 128
        %1974 = vxpose.xlu0.b32.cont [4/16] %v1819, 128
        %1975 = vxpose.xlu0.b32.cont [5/16] 0.0, 128
        %1976 = vxpose.xlu0.b32.cont [6/16] 0.0, 128
        %1977 = vxpose.xlu0.b32.cont [7/16] 0.0, 128
        %1978 = vxpose.xlu0.b32.cont [8/16] 0.0, 128
        %1979 = vxpose.xlu0.b32.cont [9/16] 0.0, 128
        %1980 = vxpose.xlu0.b32.cont [10/16] 0.0, 128
        %1981 = vxpose.xlu0.b32.cont [11/16] 0.0, 128
        %1982 = vxpose.xlu0.b32.cont [12/16] 0.0, 128
        %1983 = vxpose.xlu0.b32.cont [13/16] 0.0, 128
        %1984 = vxpose.xlu0.b32.cont [14/16] 0.0, 128
        %1985 = vxpose.xlu0.b32.cont [15/16] 0.0, 128
        %1986 = vxpose.xlu0.b32.end [16/16] 0.0, 128
        %v1987 = vpop.trf.xlu0
        %v1988 = vpop.trf.xlu0
        %v1989 = vpop.trf.xlu0
        %v1990 = vpop.trf.xlu0
        %v1991 = vpop.trf.xlu0
        %v1992 = vpop.trf.xlu0
        %v1993 = vpop.trf.xlu0
        %v1994 = vpop.trf.xlu0
        %v1995 = vpop.trf.xlu0
        %v1996 = vpop.trf.xlu0
        %v1997 = vpop.trf.xlu0
        %v1998 = vpop.trf.xlu0
        %v1999 = vpop.trf.xlu0
        %v2000 = vpop.trf.xlu0
        %v2001 = vpop.trf.xlu0
        %v2002 = vpop.trf.xlu0
        %2003 = vxpose.xlu0.b32.start [1/16] %v1862, 128
        %2004 = vxpose.xlu0.b32.cont [2/16] %v1864, 128
        %2005 = vxpose.xlu0.b32.cont [3/16] %v1867, 128
        %2006 = vxpose.xlu0.b32.cont [4/16] %v1869, 128
        %2007 = vxpose.xlu0.b32.cont [5/16] 0.0, 128
        %2008 = vxpose.xlu0.b32.cont [6/16] 0.0, 128
        %2009 = vxpose.xlu0.b32.cont [7/16] 0.0, 128
        %2010 = vxpose.xlu0.b32.cont [8/16] 0.0, 128
        %2011 = vxpose.xlu0.b32.cont [9/16] 0.0, 128
        %2012 = vxpose.xlu0.b32.cont [10/16] 0.0, 128
        %2013 = vxpose.xlu0.b32.cont [11/16] 0.0, 128
        %2014 = vxpose.xlu0.b32.cont [12/16] 0.0, 128
        %2015 = vxpose.xlu0.b32.cont [13/16] 0.0, 128
        %2016 = vxpose.xlu0.b32.cont [14/16] 0.0, 128
        %2017 = vxpose.xlu0.b32.cont [15/16] 0.0, 128
        %2018 = vxpose.xlu0.b32.end [16/16] 0.0, 128
        %v2019 = vpop.trf.xlu0
        %v2020 = vpop.trf.xlu0
        %v2021 = vpop.trf.xlu0
        %v2022 = vpop.trf.xlu0
        %v2023 = vpop.trf.xlu0
        %v2024 = vpop.trf.xlu0
        %v2025 = vpop.trf.xlu0
        %v2026 = vpop.trf.xlu0
        %v2027 = vpop.trf.xlu0
        %v2028 = vpop.trf.xlu0
        %v2029 = vpop.trf.xlu0
        %v2030 = vpop.trf.xlu0
        %v2031 = vpop.trf.xlu0
        %v2032 = vpop.trf.xlu0
        %v2033 = vpop.trf.xlu0
        %v2034 = vpop.trf.xlu0
        %2035 = vxpose.xlu0.b32.start [1/16] %v1912, 128
        %2036 = vxpose.xlu0.b32.cont [2/16] %v1914, 128
        %2037 = vxpose.xlu0.b32.cont [3/16] %v1917, 128
        %2038 = vxpose.xlu0.b32.cont [4/16] %v1919, 128
        %2039 = vxpose.xlu0.b32.cont [5/16] 0.0, 128
        %2040 = vxpose.xlu0.b32.cont [6/16] 0.0, 128
        %2041 = vxpose.xlu0.b32.cont [7/16] 0.0, 128
        %2042 = vxpose.xlu0.b32.cont [8/16] 0.0, 128
        %2043 = vxpose.xlu0.b32.cont [9/16] 0.0, 128
        %2044 = vxpose.xlu0.b32.cont [10/16] 0.0, 128
        %2045 = vxpose.xlu0.b32.cont [11/16] 0.0, 128
        %2046 = vxpose.xlu0.b32.cont [12/16] 0.0, 128
        %2047 = vxpose.xlu0.b32.cont [13/16] 0.0, 128
        %2048 = vxpose.xlu0.b32.cont [14/16] 0.0, 128
        %2049 = vxpose.xlu0.b32.cont [15/16] 0.0, 128
        %2050 = vxpose.xlu0.b32.end [16/16] 0.0, 128
        %v2051 = vpop.trf.xlu0
        %v2052 = vpop.trf.xlu0
        %v2053 = vpop.trf.xlu0
        %v2054 = vpop.trf.xlu0
        %v2055 = vpop.trf.xlu0
        %v2056 = vpop.trf.xlu0
        %v2057 = vpop.trf.xlu0
        %v2058 = vpop.trf.xlu0
        %v2059 = vpop.trf.xlu0
        %v2060 = vpop.trf.xlu0
        %v2061 = vpop.trf.xlu0
        %v2062 = vpop.trf.xlu0
        %v2063 = vpop.trf.xlu0
        %v2064 = vpop.trf.xlu0
        %v2065 = vpop.trf.xlu0
        %v2066 = vpop.trf.xlu0
        %2067 = vxpose.xlu0.b32.start [1/16] %v1962, 128
        %2068 = vxpose.xlu0.b32.cont [2/16] %v1964, 128
        %2069 = vxpose.xlu0.b32.cont [3/16] %v1967, 128
        %2070 = vxpose.xlu0.b32.cont [4/16] %v1969, 128
        %2071 = vxpose.xlu0.b32.cont [5/16] 0.0, 128
        %2072 = vxpose.xlu0.b32.cont [6/16] 0.0, 128
        %2073 = vxpose.xlu0.b32.cont [7/16] 0.0, 128
        %2074 = vxpose.xlu0.b32.cont [8/16] 0.0, 128
        %2075 = vxpose.xlu0.b32.cont [9/16] 0.0, 128
        %2076 = vxpose.xlu0.b32.cont [10/16] 0.0, 128
        %2077 = vxpose.xlu0.b32.cont [11/16] 0.0, 128
        %2078 = vxpose.xlu0.b32.cont [12/16] 0.0, 128
        %2079 = vxpose.xlu0.b32.cont [13/16] 0.0, 128
        %2080 = vxpose.xlu0.b32.cont [14/16] 0.0, 128
        %2081 = vxpose.xlu0.b32.cont [15/16] 0.0, 128
        %2082 = vxpose.xlu0.b32.end [16/16] 0.0, 128
        %v2083 = vpop.trf.xlu0
        %v2084 = vpop.trf.xlu0
        %v2085 = vpop.trf.xlu0
        %v2086 = vpop.trf.xlu0
        %v2087 = vpop.trf.xlu0
        %v2088 = vpop.trf.xlu0
        %v2089 = vpop.trf.xlu0
        %v2090 = vpop.trf.xlu0
        %v2091 = vpop.trf.xlu0
        %v2092 = vpop.trf.xlu0
        %v2093 = vpop.trf.xlu0
        %v2094 = vpop.trf.xlu0
        %v2095 = vpop.trf.xlu0
        %v2096 = vpop.trf.xlu0
        %v2097 = vpop.trf.xlu0
        %v2098 = vpop.trf.xlu0
        %v2099 = vrot.slane %v2051, 4
        %v2100 = vsel %vm1500, %v2099, %v1987
        %v2101 = vrot.slane %v1987, 4
        %v2102 = vsel %vm1500, %v2051, %v2101
        %v2104 = vunpack.c.l.s4 1983009808
        %v2105 = vunpack.c.0.s8 %v2104
        %v2106 = vperm.slane %v2100, %v2105
        %v2108 = vunpack.c.l.s4 1983009808
        %v2109 = vunpack.c.0.s8 %v2108
        %v2110 = vperm.slane %v2102, %v2109
        %v2111 = vrot.slane %v2083, 4
        %v2112 = vsel %vm1500, %v2111, %v2019
        %v2113 = vrot.slane %v2019, 4
        %v2114 = vsel %vm1500, %v2083, %v2113
        %v2116 = vunpack.c.l.s4 1983009808
        %v2117 = vunpack.c.0.s8 %v2116
        %v2118 = vperm.slane %v2112, %v2117
        %v2120 = vunpack.c.l.s4 1983009808
        %v2121 = vunpack.c.0.s8 %v2120
        %v2122 = vperm.slane %v2114, %v2121
        %v2123 = vrot.slane %v2118, 4
        %v2124 = vsel %vm1500, %v2123, %v2106
        %v2125 = vrot.slane %v2106, 4
        %v2126 = vsel %vm1500, %v2118, %v2125
        %v2128 = vunpack.c.l.s4 1934713408
        %v2129 = vunpack.c.0.s8 %v2128
        %v2130 = vperm.slane %v2124, %v2129
        %v2132 = vunpack.c.l.s4 1934713408
        %v2133 = vunpack.c.0.s8 %v2132
        %v2134 = vperm.slane %v2126, %v2133
        %v2135 = vrot.slane %v2122, 4
        %v2136 = vsel %vm1500, %v2135, %v2110
        %v2137 = vrot.slane %v2110, 4
        %v2138 = vsel %vm1500, %v2122, %v2137
        %v2140 = vunpack.c.l.s4 1934713408
        %v2141 = vunpack.c.0.s8 %v2140
        %v2142 = vperm.slane %v2136, %v2141
        %v2144 = vunpack.c.l.s4 1934713408
        %v2145 = vunpack.c.0.s8 %v2144
        %v2146 = vperm.slane %v2138, %v2145
        %v2147 = vrot.slane %v2130, 4
        %v2148 = vsel %vm1500, 0.0, %v2147
        %v2149 = vrot.slane %v2134, 4
        %v2150 = vsel %vm1500, 0.0, %v2149
        %v2151 = vrot.slane %v2142, 4
        %v2152 = vsel %vm1500, 0.0, %v2151
        %v2153 = vrot.slane %v2146, 4
        %v2154 = vsel %vm1500, 0.0, %v2153
        %v2155 = vrcp.pop %v1749
        %v2156 = vrcp.pop %v1752
        %v2157 = vrcp.pop %v1755
        %v2158 = vrcp.pop %v1758
        %v2159 = vrot.slane %v2157, 4
        %v2160 = vsel %vm1500, %v2159, %v2155
        %v2161 = vrot.slane %v2155, 4
        %v2162 = vsel %vm1500, %v2157, %v2161
        %v2164 = vunpack.c.l.s4 1983009808
        %v2165 = vunpack.c.0.s8 %v2164
        %v2166 = vperm.slane %v2160, %v2165
        %v2168 = vunpack.c.l.s4 1983009808
        %v2169 = vunpack.c.0.s8 %v2168
        %v2170 = vperm.slane %v2162, %v2169
        %v2171 = vrot.slane %v2158, 4
        %v2172 = vsel %vm1500, %v2171, %v2156
        %v2173 = vrot.slane %v2156, 4
        %v2174 = vsel %vm1500, %v2158, %v2173
        %v2176 = vunpack.c.l.s4 1983009808
        %v2177 = vunpack.c.0.s8 %v2176
        %v2178 = vperm.slane %v2172, %v2177
        %v2180 = vunpack.c.l.s4 1983009808
        %v2181 = vunpack.c.0.s8 %v2180
        %v2182 = vperm.slane %v2174, %v2181
        %v2183 = vrot.slane %v2178, 4
        %v2184 = vsel %vm1500, %v2183, %v2166
        %v2185 = vrot.slane %v2166, 4
        %v2186 = vsel %vm1500, %v2178, %v2185
        %v2188 = vunpack.c.l.s4 1934713408
        %v2189 = vunpack.c.0.s8 %v2188
        %v2190 = vperm.slane %v2184, %v2189
        %v2192 = vunpack.c.l.s4 1934713408
        %v2193 = vunpack.c.0.s8 %v2192
        %v2194 = vperm.slane %v2186, %v2193
        %v2195 = vrot.slane %v2182, 4
        %v2196 = vsel %vm1500, %v2195, %v2170
        %v2197 = vrot.slane %v2170, 4
        %v2198 = vsel %vm1500, %v2182, %v2197
        %v2200 = vunpack.c.l.s4 1934713408
        %v2201 = vunpack.c.0.s8 %v2200
        %v2202 = vperm.slane %v2196, %v2201
        %v2204 = vunpack.c.l.s4 1934713408
        %v2205 = vunpack.c.0.s8 %v2204
        %v2206 = vperm.slane %v2198, %v2205
        %v2207 = vrot.slane %v2190, 4
        %v2208 = vsel %vm1500, 0.0, %v2207
        %v2209 = vrot.slane %v2194, 4
        %v2210 = vsel %vm1500, 0.0, %v2209
        %v2211 = vrot.slane %v2202, 4
        %v2212 = vsel %vm1500, 0.0, %v2211
        %v2213 = vrot.slane %v2206, 4
        %v2214 = vsel %vm1500, 0.0, %v2213
        %2216 = vset.pattern.permute.xlu0 0
        %2217 = vperm.xlu0 %2216, %v2190
        %v2218 = vpop.permute.xlu0 %2217
        %2221 = vset.pattern.permute.xlu0 0
        %2222 = vperm.xlu0 %2221, %v2208
        %v2223 = vpop.permute.xlu0 %2222
        %2226 = vset.pattern.permute.xlu0 0
        %2227 = vperm.xlu0 %2226, %v2194
        %v2228 = vpop.permute.xlu0 %2227
        %2231 = vset.pattern.permute.xlu0 0
        %2232 = vperm.xlu0 %2231, %v2210
        %v2233 = vpop.permute.xlu0 %2232
        %2236 = vset.pattern.permute.xlu0 0
        %2237 = vperm.xlu0 %2236, %v2202
        %v2238 = vpop.permute.xlu0 %2237
        %2241 = vset.pattern.permute.xlu0 0
        %2242 = vperm.xlu0 %2241, %v2212
        %v2243 = vpop.permute.xlu0 %2242
        %2246 = vset.pattern.permute.xlu0 0
        %2247 = vperm.xlu0 %2246, %v2206
        %v2248 = vpop.permute.xlu0 %2247
        %2251 = vset.pattern.permute.xlu0 0
        %2252 = vperm.xlu0 %2251, %v2214
        %v2253 = vpop.permute.xlu0 %2252
        %v2255 = vmul.f32 %v2130, %v2218
        %v2256 = vmul.f32 %v2148, %v2223
        %v2257 = vmul.f32 %v2134, %v2228
        %v2258 = vmul.f32 %v2150, %v2233
        %v2259 = vmul.f32 %v2142, %v2238
        %v2260 = vmul.f32 %v2152, %v2243
        %v2261 = vmul.f32 %v2146, %v2248
        %v2262 = vmul.f32 %v2154, %v2253
        %v2263 = vrot.slane %v2257, 4
        %v2264 = vsel %vm1500, %v2263, %v2255
        %v2266 = vunpack.c.l.s4 1983009808
        %v2267 = vunpack.c.0.s8 %v2266
        %v2268 = vperm.slane %v2264, %v2267
        %v2269 = vrot.slane %v2258, 4
        %v2270 = vsel %vm1500, %v2269, %v2256
        %v2272 = vunpack.c.l.s4 1983009808
        %v2273 = vunpack.c.0.s8 %v2272
        %v2274 = vperm.slane %v2270, %v2273
        %v2275 = vrot.slane %v2261, 4
        %v2276 = vsel %vm1500, %v2275, %v2259
        %v2278 = vunpack.c.l.s4 1983009808
        %v2279 = vunpack.c.0.s8 %v2278
        %v2280 = vperm.slane %v2276, %v2279
        %v2281 = vrot.slane %v2262, 4
        %v2282 = vsel %vm1500, %v2281, %v2260
        %v2284 = vunpack.c.l.s4 1983009808
        %v2285 = vunpack.c.0.s8 %v2284
        %v2286 = vperm.slane %v2282, %v2285
        %v2287 = vrot.slane %v2274, 4
        %v2288 = vsel %vm1500, %v2287, %v2268
        %v2289 = vrot.slane %v2268, 4
        %v2290 = vsel %vm1500, %v2274, %v2289
        %v2292 = vunpack.c.l.s4 1934713408
        %v2293 = vunpack.c.0.s8 %v2292
        %v2294 = vperm.slane %v2288, %v2293
        %v2296 = vunpack.c.l.s4 1934713408
        %v2297 = vunpack.c.0.s8 %v2296
        %v2298 = vperm.slane %v2290, %v2297
        %v2299 = vrot.slane %v2286, 4
        %v2300 = vsel %vm1500, %v2299, %v2280
        %v2301 = vrot.slane %v2280, 4
        %v2302 = vsel %vm1500, %v2286, %v2301
        %v2304 = vunpack.c.l.s4 1934713408
        %v2305 = vunpack.c.0.s8 %v2304
        %v2306 = vperm.slane %v2300, %v2305
        %v2308 = vunpack.c.l.s4 1934713408
        %v2309 = vunpack.c.0.s8 %v2308
        %v2310 = vperm.slane %v2302, %v2309
        %v2311 = vrot.slane %v2306, 4
        %v2312 = vsel %vm1500, %v2311, %v2294
        %v2313 = vrot.slane %v2294, 4
        %v2314 = vsel %vm1500, %v2306, %v2313
        %v2315 = vrot.slane %v2310, 4
        %v2316 = vsel %vm1500, %v2315, %v2298
        %v2317 = vrot.slane %v2298, 4
        %v2318 = vsel %vm1500, %v2310, %v2317
        %2320 = vrot.lane.b32.xlu0 %v2314, 32
        %v2321 = vpop.permute.xlu0 %2320
        %2324 = vrot.lane.b32.xlu0 %v2316, 64
        %v2325 = vpop.permute.xlu0 %2324
        %2328 = vrot.lane.b32.xlu0 %v2318, 96
        %v2329 = vpop.permute.xlu0 %2328
        %v2331 = vsel %vm1630, %v2312, %v2321
        %vm2332 = vcmask 523264
        %v2333 = vsel %vm2332, %v2331, %v2325
        %vm2334 = vcmask 785408
        %v2335 = vsel %vm2334, %v2333, %v2329
        %v2336 = vpack.c.bf16 %v2335, %v2335
        %v2337 = vld [vmem:[#allocation13] sm:$0xf]
        %v2338 = vld [vmem:[#allocation13 + $0x4] sm:$0xf]
        %v2339 = vld [vmem:[#allocation13 + $0x8] sm:$0xf]
        %v2340 = vld [vmem:[#allocation13 + $0xc] sm:$0xf]
        %v2341 = vld [vmem:[#allocation13 + $0x10] sm:$0xf]
        %v2342 = vld [vmem:[#allocation13 + $0x14] sm:$0xf]
        %v2343 = vld [vmem:[#allocation13 + $0x18] sm:$0xf]
        %v2344 = vld [vmem:[#allocation13 + $0x1c] sm:$0xf]
        %v2345 = vld [vmem:[#allocation13 + $0x20] sm:$0xf]
        %v2346 = vld [vmem:[#allocation13 + $0x24] sm:$0xf]
        %v2347 = vld [vmem:[#allocation13 + $0x28] sm:$0xf]
        %v2348 = vld [vmem:[#allocation13 + $0x2c] sm:$0xf]
        %v2349 = vld [vmem:[#allocation13 + $0x30] sm:$0xf]
        %v2350 = vld [vmem:[#allocation13 + $0x34] sm:$0xf]
        %v2351 = vld [vmem:[#allocation13 + $0x38] sm:$0xf]
        %v2352 = vld [vmem:[#allocation13 + $0x3c] sm:$0xf]
        %v2369 = vunpack.c.l.b16 %v2337
        %v2370 = vunpack.c.l.b16 %v2338
        %v2371 = vunpack.c.l.b16 %v2339
        %v2372 = vunpack.c.l.b16 %v2340
        %v2373 = vunpack.c.l.b16 %v2341
        %v2374 = vunpack.c.l.b16 %v2342
        %v2375 = vunpack.c.l.b16 %v2343
        %v2376 = vunpack.c.l.b16 %v2344
        %v2377 = vunpack.c.l.b16 %v2345
        %v2378 = vunpack.c.l.b16 %v2346
        %v2379 = vunpack.c.l.b16 %v2347
        %v2380 = vunpack.c.l.b16 %v2348
        %v2381 = vunpack.c.l.b16 %v2349
        %v2382 = vunpack.c.l.b16 %v2350
        %v2383 = vunpack.c.l.b16 %v2351
        %v2384 = vunpack.c.l.b16 %v2352
        %v2385 = vpack.c.b16 %v2370, %v2369
        %v2386 = vpack.c.b16 %v2372, %v2371
        %v2387 = vpack.c.b16 %v2374, %v2373
        %v2388 = vpack.c.b16 %v2376, %v2375
        %v2389 = vpack.c.b16 %v2378, %v2377
        %v2390 = vpack.c.b16 %v2380, %v2379
        %v2391 = vpack.c.b16 %v2382, %v2381
        %v2392 = vpack.c.b16 %v2384, %v2383
        %2401 = vmatpush.bf16.msra.mxu0 %v2392
        %2402 = vmatpush.bf16.msra.mxu0 %v2391
        %2403 = vmatpush.bf16.msra.mxu0 %v2390
        %2404 = vmatpush.bf16.msra.mxu0 %v2389
        %2405 = vmatpush.bf16.msra.mxu0 %v2388
        %2406 = vmatpush.bf16.msra.mxu0 %v2387
        %2407 = vmatpush.bf16.msra.mxu0 %v2386
        %2408 = vmatpush.bf16.msra.mxu0 %v2385
        %2409 = vmatmul.bf16.gmra.mxu0 %v2336
        %v2410 = vpop.f32.mrf.mxu0
        %v2411 = vadd.f32 0.0, %v2410
        %v2412 = vpop.f32.mrf.mxu0
        %2413 = vdwg.mxu0
        %v2414 = vadd.f32 %v1368, %v2411
        %v2415 = vld [vmem:[#allocation15] sm:$0x1]
        %v2417 = vperm.slane %v2415, 0
        %v2419 = vadd.f32 %v2414, %v2417
        %v2420 = vld [vmem:[%s9] sm:$0x1]
        %v2421 = vld [vmem:[%s10] sm:$0x1]
        %2422 = vadd.xlane.f32.xlu0 %v2419
        %v2423 = vpop.xlane.xlu0 %2422
        %v2424 = vmul.f32 %v2423, %v1379
        %v2425 = vsub.f32 %v2419, %v2424
        %v2426 = vmul.f32 %v2425, %v2425
        %2427 = vadd.xlane.f32.xlu0 %v2426
        %v2428 = vpop.xlane.xlu0 %2427
        %v2429 = vmul.f32 %v2428, %v1379
        %v2430 = vadd.f32 %v2429, 1e-05
        %v2431 = vrsqrt.pop %v2430
        %v2432 = vmul.f32 %v2431, %v2430
        %v2433 = vmul.f32 %v2432, %v2431
        %v2434 = vmul.f32 0.5, %v2433
        %v2435 = vsub.f32 1.5, %v2434
        %v2436 = vmul.f32 %v2431, %v2435
        %vm2437 = vweird.f32 %v2430
        %vm2438 = vweird.f32 %v2431
        %vm2439 = vmor %vm2437, %vm2438
        %v2440 = vsel %vm2439, %v2431, %v2436
        %v2441 = vmul.f32 %v2425, %v2440
        %v2443 = vperm.slane %v2420, 0
        %v2445 = vmul.f32 %v2441, %v2443
        %v2447 = vperm.slane %v2421, 0
        %v2449 = vadd.f32 %v2445, %v2447
        %v2450 = vpack.c.bf16 %v2449, %v2449
        %v2451 = vld [vmem:[#allocation16] sm:$0xff]
        %v2452 = vld [vmem:[#allocation16 + $0x8] sm:$0xff]
        %v2453 = vld [vmem:[#allocation16 + $0x10] sm:$0xff]
        %v2454 = vld [vmem:[#allocation16 + $0x18] sm:$0xff]
        %v2455 = vld [vmem:[#allocation16 + $0x20] sm:$0xff]
        %v2456 = vld [vmem:[#allocation16 + $0x28] sm:$0xff]
        %v2457 = vld [vmem:[#allocation16 + $0x30] sm:$0xff]
        %v2458 = vld [vmem:[#allocation16 + $0x38] sm:$0xff]
        %v2459 = vld [vmem:[#allocation16 + $0x40] sm:$0xff]
        %v2460 = vld [vmem:[#allocation16 + $0x48] sm:$0xff]
        %v2461 = vld [vmem:[#allocation16 + $0x50] sm:$0xff]
        %v2462 = vld [vmem:[#allocation16 + $0x58] sm:$0xff]
        %v2463 = vld [vmem:[#allocation16 + $0x60] sm:$0xff]
        %v2464 = vld [vmem:[#allocation16 + $0x68] sm:$0xff]
        %v2465 = vld [vmem:[#allocation16 + $0x70] sm:$0xff]
        %v2466 = vld [vmem:[#allocation16 + $0x78] sm:$0xff]
        %v2467 = vld [vmem:[#allocation16 + $0x80] sm:$0xff]
        %v2468 = vld [vmem:[#allocation16 + $0x88] sm:$0xff]
        %v2469 = vld [vmem:[#allocation16 + $0x90] sm:$0xff]
        %v2470 = vld [vmem:[#allocation16 + $0x98] sm:$0xff]
        %v2471 = vld [vmem:[#allocation16 + $0xa0] sm:$0xff]
        %v2472 = vld [vmem:[#allocation16 + $0xa8] sm:$0xff]
        %v2473 = vld [vmem:[#allocation16 + $0xb0] sm:$0xff]
        %v2474 = vld [vmem:[#allocation16 + $0xb8] sm:$0xff]
        %v2475 = vld [vmem:[#allocation16 + $0xc0] sm:$0xff]
        %v2476 = vld [vmem:[#allocation16 + $0xc8] sm:$0xff]
        %v2477 = vld [vmem:[#allocation16 + $0xd0] sm:$0xff]
        %v2478 = vld [vmem:[#allocation16 + $0xd8] sm:$0xff]
        %v2479 = vld [vmem:[#allocation16 + $0xe0] sm:$0xff]
        %v2480 = vld [vmem:[#allocation16 + $0xe8] sm:$0xff]
        %v2481 = vld [vmem:[#allocation16 + $0xf0] sm:$0xff]
        %v2482 = vld [vmem:[#allocation16 + $0xf8] sm:$0xff]
        %v2483 = vld [vmem:[%s12] sm:$0xf]
        %v2485 = vperm.slane %v2483, 0
        %v2486 = vperm.slane %v2483, 1
        %v2487 = vperm.slane %v2483, 2
        %v2488 = vperm.slane %v2483, 3
        %v2525 = vunpack.c.l.b16 %v2451
        %v2526 = vunpack.c.h.b16 %v2451
        %v2527 = vunpack.c.l.b16 %v2452
        %v2528 = vunpack.c.h.b16 %v2452
        %v2529 = vunpack.c.l.b16 %v2453
        %v2530 = vunpack.c.h.b16 %v2453
        %v2531 = vunpack.c.l.b16 %v2454
        %v2532 = vunpack.c.h.b16 %v2454
        %v2533 = vunpack.c.l.b16 %v2455
        %v2534 = vunpack.c.h.b16 %v2455
        %v2535 = vunpack.c.l.b16 %v2456
        %v2536 = vunpack.c.h.b16 %v2456
        %v2537 = vunpack.c.l.b16 %v2457
        %v2538 = vunpack.c.h.b16 %v2457
        %v2539 = vunpack.c.l.b16 %v2458
        %v2540 = vunpack.c.h.b16 %v2458
        %v2541 = vunpack.c.l.b16 %v2459
        %v2542 = vunpack.c.h.b16 %v2459
        %v2543 = vunpack.c.l.b16 %v2460
        %v2544 = vunpack.c.h.b16 %v2460
        %v2545 = vunpack.c.l.b16 %v2461
        %v2546 = vunpack.c.h.b16 %v2461
        %v2547 = vunpack.c.l.b16 %v2462
        %v2548 = vunpack.c.h.b16 %v2462
        %v2549 = vunpack.c.l.b16 %v2463
        %v2550 = vunpack.c.h.b16 %v2463
        %v2551 = vunpack.c.l.b16 %v2464
        %v2552 = vunpack.c.h.b16 %v2464
        %v2553 = vunpack.c.l.b16 %v2465
        %v2554 = vunpack.c.h.b16 %v2465
        %v2555 = vunpack.c.l.b16 %v2466
        %v2556 = vunpack.c.h.b16 %v2466
        %v2557 = vunpack.c.l.b16 %v2467
        %v2558 = vunpack.c.h.b16 %v2467
        %v2559 = vunpack.c.l.b16 %v2468
        %v2560 = vunpack.c.h.b16 %v2468
        %v2561 = vunpack.c.l.b16 %v2469
        %v2562 = vunpack.c.h.b16 %v2469
        %v2563 = vunpack.c.l.b16 %v2470
        %v2564 = vunpack.c.h.b16 %v2470
        %v2565 = vunpack.c.l.b16 %v2471
        %v2566 = vunpack.c.h.b16 %v2471
        %v2567 = vunpack.c.l.b16 %v2472
        %v2568 = vunpack.c.h.b16 %v2472
        %v2569 = vunpack.c.l.b16 %v2473
        %v2570 = vunpack.c.h.b16 %v2473
        %v2571 = vunpack.c.l.b16 %v2474
        %v2572 = vunpack.c.h.b16 %v2474
        %v2573 = vunpack.c.l.b16 %v2475
        %v2574 = vunpack.c.h.b16 %v2475
        %v2575 = vunpack.c.l.b16 %v2476
        %v2576 = vunpack.c.h.b16 %v2476
        %v2577 = vunpack.c.l.b16 %v2477
        %v2578 = vunpack.c.h.b16 %v2477
        %v2579 = vunpack.c.l.b16 %v2478
        %v2580 = vunpack.c.h.b16 %v2478
        %v2581 = vunpack.c.l.b16 %v2479
        %v2582 = vunpack.c.h.b16 %v2479
        %v2583 = vunpack.c.l.b16 %v2480
        %v2584 = vunpack.c.h.b16 %v2480
        %v2585 = vunpack.c.l.b16 %v2481
        %v2586 = vunpack.c.h.b16 %v2481
        %v2587 = vunpack.c.l.b16 %v2482
        %v2588 = vunpack.c.h.b16 %v2482
        %v2589 = vpack.c.b16 %v2529, %v2525
        %v2590 = vpack.c.b16 %v2530, %v2526
        %v2591 = vpack.c.b16 %v2531, %v2527
        %v2592 = vpack.c.b16 %v2532, %v2528
        %v2593 = vpack.c.b16 %v2537, %v2533
        %v2594 = vpack.c.b16 %v2538, %v2534
        %v2595 = vpack.c.b16 %v2539, %v2535
        %v2596 = vpack.c.b16 %v2540, %v2536
        %v2597 = vpack.c.b16 %v2545, %v2541
        %v2598 = vpack.c.b16 %v2546, %v2542
        %v2599 = vpack.c.b16 %v2547, %v2543
        %v2600 = vpack.c.b16 %v2548, %v2544
        %v2601 = vpack.c.b16 %v2553, %v2549
        %v2602 = vpack.c.b16 %v2554, %v2550
        %v2603 = vpack.c.b16 %v2555, %v2551
        %v2604 = vpack.c.b16 %v2556, %v2552
        %v2605 = vpack.c.b16 %v2561, %v2557
        %v2606 = vpack.c.b16 %v2562, %v2558
        %v2607 = vpack.c.b16 %v2563, %v2559
        %v2608 = vpack.c.b16 %v2564, %v2560
        %v2609 = vpack.c.b16 %v2569, %v2565
        %v2610 = vpack.c.b16 %v2570, %v2566
        %v2611 = vpack.c.b16 %v2571, %v2567
        %v2612 = vpack.c.b16 %v2572, %v2568
        %v2613 = vpack.c.b16 %v2577, %v2573
        %v2614 = vpack.c.b16 %v2578, %v2574
        %v2615 = vpack.c.b16 %v2579, %v2575
        %v2616 = vpack.c.b16 %v2580, %v2576
        %v2617 = vpack.c.b16 %v2585, %v2581
        %v2618 = vpack.c.b16 %v2586, %v2582
        %v2619 = vpack.c.b16 %v2587, %v2583
        %v2620 = vpack.c.b16 %v2588, %v2584
        %2653 = vmatpush.bf16.msra.mxu0 %v2617
        %2654 = vmatpush.bf16.msra.mxu0 %v2613
        %2655 = vmatpush.bf16.msra.mxu0 %v2609
        %2656 = vmatpush.bf16.msra.mxu0 %v2605
        %2657 = vmatpush.bf16.msra.mxu0 %v2601
        %2658 = vmatpush.bf16.msra.mxu0 %v2597
        %2659 = vmatpush.bf16.msra.mxu0 %v2593
        %2660 = vmatpush.bf16.msra.mxu0 %v2589
        %2661 = vmatmul.bf16.gmra.mxu0 %v2450
        %v2662 = vpop.f32.mrf.mxu0
        %v2663 = vadd.f32 %v2485, %v2662
        %v2664 = vpop.f32.mrf.mxu0
        %2665 = vdwg.mxu0
        %2666 = vmatpush.bf16.msra.mxu0 %v2618
        %2667 = vmatpush.bf16.msra.mxu0 %v2614
        %2668 = vmatpush.bf16.msra.mxu0 %v2610
        %2669 = vmatpush.bf16.msra.mxu0 %v2606
        %2670 = vmatpush.bf16.msra.mxu0 %v2602
        %2671 = vmatpush.bf16.msra.mxu0 %v2598
        %2672 = vmatpush.bf16.msra.mxu0 %v2594
        %2673 = vmatpush.bf16.msra.mxu0 %v2590
        %2674 = vmatmul.bf16.gmra.mxu0 %v2450
        %v2675 = vpop.f32.mrf.mxu0
        %v2676 = vadd.f32 %v2486, %v2675
        %v2677 = vpop.f32.mrf.mxu0
        %2678 = vdwg.mxu0
        %2679 = vmatpush.bf16.msra.mxu0 %v2619
        %2680 = vmatpush.bf16.msra.mxu0 %v2615
        %2681 = vmatpush.bf16.msra.mxu0 %v2611
        %2682 = vmatpush.bf16.msra.mxu0 %v2607
        %2683 = vmatpush.bf16.msra.mxu0 %v2603
        %2684 = vmatpush.bf16.msra.mxu0 %v2599
        %2685 = vmatpush.bf16.msra.mxu0 %v2595
        %2686 = vmatpush.bf16.msra.mxu0 %v2591
        %2687 = vmatmul.bf16.gmra.mxu0 %v2450
        %v2688 = vpop.f32.mrf.mxu0
        %v2689 = vadd.f32 %v2487, %v2688
        %v2690 = vpop.f32.mrf.mxu0
        %2691 = vdwg.mxu0
        %2692 = vmatpush.bf16.msra.mxu0 %v2620
        %2693 = vmatpush.bf16.msra.mxu0 %v2616
        %2694 = vmatpush.bf16.msra.mxu0 %v2612
        %2695 = vmatpush.bf16.msra.mxu0 %v2608
        %2696 = vmatpush.bf16.msra.mxu0 %v2604
        %2697 = vmatpush.bf16.msra.mxu0 %v2600
        %2698 = vmatpush.bf16.msra.mxu0 %v2596
        %2699 = vmatpush.bf16.msra.mxu0 %v2592
        %2700 = vmatmul.bf16.gmra.mxu0 %v2450
        %v2701 = vpop.f32.mrf.mxu0
        %v2702 = vadd.f32 %v2488, %v2701
        %v2703 = vpop.f32.mrf.mxu0
        %2704 = vdwg.mxu0
        %v2705 = vmul.f32 %v2663, 1.702
        %v2706 = vmul.f32 %v2676, 1.702
        %v2707 = vmul.f32 %v2689, 1.702
        %v2708 = vmul.f32 %v2702, 1.702
        %v2709 = vxor.u32 %v2705, 2147483648
        %v2710 = vxor.u32 %v2706, 2147483648
        %v2711 = vxor.u32 %v2707, 2147483648
        %v2712 = vxor.u32 %v2708, 2147483648
        %v2713 = vmul.f32 %v2709, 1.442695
        %v2714 = vpow.pop %v2713
        %v2715 = vmul.f32 %v2710, 1.442695
        %v2716 = vpow.pop %v2715
        %v2717 = vmul.f32 %v2711, 1.442695
        %v2718 = vpow.pop %v2717
        %v2719 = vmul.f32 %v2712, 1.442695
        %v2720 = vpow.pop %v2719
        %v2721 = vadd.f32 %v2714, 1.0
        %v2722 = vadd.f32 %v2716, 1.0
        %v2723 = vadd.f32 %v2718, 1.0
        %v2724 = vadd.f32 %v2720, 1.0
        %v2725 = vrcp.pop %v2721
        %v2726 = vmul.f32 %v2721, %v2725
        %v2727 = vsub.f32 1.0, %v2726
        %v2728 = vmul.f32 %v2725, %v2727
        %v2729 = vadd.f32 %v2725, %v2728
        %vm2730 = vweird.f32 %v2721
        %vm2731 = vweird.f32 %v2725
        %vm2732 = vmor %vm2730, %vm2731
        %v2733 = vsel %vm2732, %v2725, %v2729
        %v2734 = vand.u32 2147483647, %v2721
        %vm2735 = vcmp.eq.f32.partialorder %v2734, 8.507059e+37
        %v2736 = vand.u32 %v2721, 2147483648
        %v2737 = vor.u32 1.1754944e-38, %v2736
        %v2738 = vsel %vm2735, %v2737, %v2733
        %v2739 = vmul.f32 1.0, %v2738
        %v2740 = vrcp.pop %v2722
        %v2741 = vmul.f32 %v2722, %v2740
        %v2742 = vsub.f32 1.0, %v2741
        %v2743 = vmul.f32 %v2740, %v2742
        %v2744 = vadd.f32 %v2740, %v2743
        %vm2745 = vweird.f32 %v2722
        %vm2746 = vweird.f32 %v2740
        %vm2747 = vmor %vm2745, %vm2746
        %v2748 = vsel %vm2747, %v2740, %v2744
        %v2749 = vand.u32 2147483647, %v2722
        %vm2750 = vcmp.eq.f32.partialorder %v2749, 8.507059e+37
        %v2751 = vand.u32 %v2722, 2147483648
        %v2752 = vor.u32 1.1754944e-38, %v2751
        %v2753 = vsel %vm2750, %v2752, %v2748
        %v2754 = vmul.f32 1.0, %v2753
        %v2755 = vrcp.pop %v2723
        %v2756 = vmul.f32 %v2723, %v2755
        %v2757 = vsub.f32 1.0, %v2756
        %v2758 = vmul.f32 %v2755, %v2757
        %v2759 = vadd.f32 %v2755, %v2758
        %vm2760 = vweird.f32 %v2723
        %vm2761 = vweird.f32 %v2755
        %vm2762 = vmor %vm2760, %vm2761
        %v2763 = vsel %vm2762, %v2755, %v2759
        %v2764 = vand.u32 2147483647, %v2723
        %vm2765 = vcmp.eq.f32.partialorder %v2764, 8.507059e+37
        %v2766 = vand.u32 %v2723, 2147483648
        %v2767 = vor.u32 1.1754944e-38, %v2766
        %v2768 = vsel %vm2765, %v2767, %v2763
        %v2769 = vmul.f32 1.0, %v2768
        %v2770 = vrcp.pop %v2724
        %v2771 = vmul.f32 %v2724, %v2770
        %v2772 = vsub.f32 1.0, %v2771
        %v2773 = vmul.f32 %v2770, %v2772
        %v2774 = vadd.f32 %v2770, %v2773
        %vm2775 = vweird.f32 %v2724
        %vm2776 = vweird.f32 %v2770
        %vm2777 = vmor %vm2775, %vm2776
        %v2778 = vsel %vm2777, %v2770, %v2774
        %v2779 = vand.u32 2147483647, %v2724
        %vm2780 = vcmp.eq.f32.partialorder %v2779, 8.507059e+37
        %v2781 = vand.u32 %v2724, 2147483648
        %v2782 = vor.u32 1.1754944e-38, %v2781
        %v2783 = vsel %vm2780, %v2782, %v2778
        %v2784 = vmul.f32 1.0, %v2783
        %v2785 = vmul.f32 %v2663, %v2739
        %v2786 = vmul.f32 %v2676, %v2754
        %v2787 = vmul.f32 %v2689, %v2769
        %v2788 = vmul.f32 %v2702, %v2784
        %v2789 = vpack.c.bf16 %v2785, %v2785
        %v2790 = vpack.c.bf16 %v2786, %v2786
        %v2791 = vpack.c.bf16 %v2787, %v2787
        %v2792 = vpack.c.bf16 %v2788, %v2788
        %v2793 = vld [vmem:[#allocation18] sm:$0xf]
        %v2794 = vld [vmem:[#allocation18 + $0x4] sm:$0xf]
        %v2795 = vld [vmem:[#allocation18 + $0x8] sm:$0xf]
        %v2796 = vld [vmem:[#allocation18 + $0xc] sm:$0xf]
        %v2797 = vld [vmem:[#allocation18 + $0x10] sm:$0xf]
        %v2798 = vld [vmem:[#allocation18 + $0x14] sm:$0xf]
        %v2799 = vld [vmem:[#allocation18 + $0x18] sm:$0xf]
        %v2800 = vld [vmem:[#allocation18 + $0x1c] sm:$0xf]
        %v2801 = vld [vmem:[#allocation18 + $0x20] sm:$0xf]
        %v2802 = vld [vmem:[#allocation18 + $0x24] sm:$0xf]
        %v2803 = vld [vmem:[#allocation18 + $0x28] sm:$0xf]
        %v2804 = vld [vmem:[#allocation18 + $0x2c] sm:$0xf]
        %v2805 = vld [vmem:[#allocation18 + $0x30] sm:$0xf]
        %v2806 = vld [vmem:[#allocation18 + $0x34] sm:$0xf]
        %v2807 = vld [vmem:[#allocation18 + $0x38] sm:$0xf]
        %v2808 = vld [vmem:[#allocation18 + $0x3c] sm:$0xf]
        %v2809 = vld [vmem:[#allocation18 + $0x40] sm:$0xf]
        %v2810 = vld [vmem:[#allocation18 + $0x44] sm:$0xf]
        %v2811 = vld [vmem:[#allocation18 + $0x48] sm:$0xf]
        %v2812 = vld [vmem:[#allocation18 + $0x4c] sm:$0xf]
        %v2813 = vld [vmem:[#allocation18 + $0x50] sm:$0xf]
        %v2814 = vld [vmem:[#allocation18 + $0x54] sm:$0xf]
        %v2815 = vld [vmem:[#allocation18 + $0x58] sm:$0xf]
        %v2816 = vld [vmem:[#allocation18 + $0x5c] sm:$0xf]
        %v2817 = vld [vmem:[#allocation18 + $0x60] sm:$0xf]
        %v2818 = vld [vmem:[#allocation18 + $0x64] sm:$0xf]
        %v2819 = vld [vmem:[#allocation18 + $0x68] sm:$0xf]
        %v2820 = vld [vmem:[#allocation18 + $0x6c] sm:$0xf]
        %v2821 = vld [vmem:[#allocation18 + $0x70] sm:$0xf]
        %v2822 = vld [vmem:[#allocation18 + $0x74] sm:$0xf]
        %v2823 = vld [vmem:[#allocation18 + $0x78] sm:$0xf]
        %v2824 = vld [vmem:[#allocation18 + $0x7c] sm:$0xf]
        %v2825 = vld [vmem:[#allocation18 + $0x80] sm:$0xf]
        %v2826 = vld [vmem:[#allocation18 + $0x84] sm:$0xf]
        %v2827 = vld [vmem:[#allocation18 + $0x88] sm:$0xf]
        %v2828 = vld [vmem:[#allocation18 + $0x8c] sm:$0xf]
        %v2829 = vld [vmem:[#allocation18 + $0x90] sm:$0xf]
        %v2830 = vld [vmem:[#allocation18 + $0x94] sm:$0xf]
        %v2831 = vld [vmem:[#allocation18 + $0x98] sm:$0xf]
        %v2832 = vld [vmem:[#allocation18 + $0x9c] sm:$0xf]
        %v2833 = vld [vmem:[#allocation18 + $0xa0] sm:$0xf]
        %v2834 = vld [vmem:[#allocation18 + $0xa4] sm:$0xf]
        %v2835 = vld [vmem:[#allocation18 + $0xa8] sm:$0xf]
        %v2836 = vld [vmem:[#allocation18 + $0xac] sm:$0xf]
        %v2837 = vld [vmem:[#allocation18 + $0xb0] sm:$0xf]
        %v2838 = vld [vmem:[#allocation18 + $0xb4] sm:$0xf]
        %v2839 = vld [vmem:[#allocation18 + $0xb8] sm:$0xf]
        %v2840 = vld [vmem:[#allocation18 + $0xbc] sm:$0xf]
        %v2841 = vld [vmem:[#allocation18 + $0xc0] sm:$0xf]
        %v2842 = vld [vmem:[#allocation18 + $0xc4] sm:$0xf]
        %v2843 = vld [vmem:[#allocation18 + $0xc8] sm:$0xf]
        %v2844 = vld [vmem:[#allocation18 + $0xcc] sm:$0xf]
        %v2845 = vld [vmem:[#allocation18 + $0xd0] sm:$0xf]
        %v2846 = vld [vmem:[#allocation18 + $0xd4] sm:$0xf]
        %v2847 = vld [vmem:[#allocation18 + $0xd8] sm:$0xf]
        %v2848 = vld [vmem:[#allocation18 + $0xdc] sm:$0xf]
        %v2849 = vld [vmem:[#allocation18 + $0xe0] sm:$0xf]
        %v2850 = vld [vmem:[#allocation18 + $0xe4] sm:$0xf]
        %v2851 = vld [vmem:[#allocation18 + $0xe8] sm:$0xf]
        %v2852 = vld [vmem:[#allocation18 + $0xec] sm:$0xf]
        %v2853 = vld [vmem:[#allocation18 + $0xf0] sm:$0xf]
        %v2854 = vld [vmem:[#allocation18 + $0xf4] sm:$0xf]
        %v2855 = vld [vmem:[#allocation18 + $0xf8] sm:$0xf]
        %v2856 = vld [vmem:[#allocation18 + $0xfc] sm:$0xf]
        %v2857 = vld [vmem:[%s14] sm:$0x1]
        %v2859 = vperm.slane %v2857, 0
        %v2925 = vunpack.c.l.b16 %v2793
        %v2926 = vunpack.c.l.b16 %v2794
        %v2927 = vunpack.c.l.b16 %v2795
        %v2928 = vunpack.c.l.b16 %v2796
        %v2929 = vunpack.c.l.b16 %v2797
        %v2930 = vunpack.c.l.b16 %v2798
        %v2931 = vunpack.c.l.b16 %v2799
        %v2932 = vunpack.c.l.b16 %v2800
        %v2933 = vunpack.c.l.b16 %v2801
        %v2934 = vunpack.c.l.b16 %v2802
        %v2935 = vunpack.c.l.b16 %v2803
        %v2936 = vunpack.c.l.b16 %v2804
        %v2937 = vunpack.c.l.b16 %v2805
        %v2938 = vunpack.c.l.b16 %v2806
        %v2939 = vunpack.c.l.b16 %v2807
        %v2940 = vunpack.c.l.b16 %v2808
        %v2941 = vunpack.c.l.b16 %v2809
        %v2942 = vunpack.c.l.b16 %v2810
        %v2943 = vunpack.c.l.b16 %v2811
        %v2944 = vunpack.c.l.b16 %v2812
        %v2945 = vunpack.c.l.b16 %v2813
        %v2946 = vunpack.c.l.b16 %v2814
        %v2947 = vunpack.c.l.b16 %v2815
        %v2948 = vunpack.c.l.b16 %v2816
        %v2949 = vunpack.c.l.b16 %v2817
        %v2950 = vunpack.c.l.b16 %v2818
        %v2951 = vunpack.c.l.b16 %v2819
        %v2952 = vunpack.c.l.b16 %v2820
        %v2953 = vunpack.c.l.b16 %v2821
        %v2954 = vunpack.c.l.b16 %v2822
        %v2955 = vunpack.c.l.b16 %v2823
        %v2956 = vunpack.c.l.b16 %v2824
        %v2957 = vunpack.c.l.b16 %v2825
        %v2958 = vunpack.c.l.b16 %v2826
        %v2959 = vunpack.c.l.b16 %v2827
        %v2960 = vunpack.c.l.b16 %v2828
        %v2961 = vunpack.c.l.b16 %v2829
        %v2962 = vunpack.c.l.b16 %v2830
        %v2963 = vunpack.c.l.b16 %v2831
        %v2964 = vunpack.c.l.b16 %v2832
        %v2965 = vunpack.c.l.b16 %v2833
        %v2966 = vunpack.c.l.b16 %v2834
        %v2967 = vunpack.c.l.b16 %v2835
        %v2968 = vunpack.c.l.b16 %v2836
        %v2969 = vunpack.c.l.b16 %v2837
        %v2970 = vunpack.c.l.b16 %v2838
        %v2971 = vunpack.c.l.b16 %v2839
        %v2972 = vunpack.c.l.b16 %v2840
        %v2973 = vunpack.c.l.b16 %v2841
        %v2974 = vunpack.c.l.b16 %v2842
        %v2975 = vunpack.c.l.b16 %v2843
        %v2976 = vunpack.c.l.b16 %v2844
        %v2977 = vunpack.c.l.b16 %v2845
        %v2978 = vunpack.c.l.b16 %v2846
        %v2979 = vunpack.c.l.b16 %v2847
        %v2980 = vunpack.c.l.b16 %v2848
        %v2981 = vunpack.c.l.b16 %v2849
        %v2982 = vunpack.c.l.b16 %v2850
        %v2983 = vunpack.c.l.b16 %v2851
        %v2984 = vunpack.c.l.b16 %v2852
        %v2985 = vunpack.c.l.b16 %v2853
        %v2986 = vunpack.c.l.b16 %v2854
        %v2987 = vunpack.c.l.b16 %v2855
        %v2988 = vunpack.c.l.b16 %v2856
        %v2989 = vpack.c.b16 %v2926, %v2925
        %v2990 = vpack.c.b16 %v2928, %v2927
        %v2991 = vpack.c.b16 %v2930, %v2929
        %v2992 = vpack.c.b16 %v2932, %v2931
        %v2993 = vpack.c.b16 %v2934, %v2933
        %v2994 = vpack.c.b16 %v2936, %v2935
        %v2995 = vpack.c.b16 %v2938, %v2937
        %v2996 = vpack.c.b16 %v2940, %v2939
        %v2997 = vpack.c.b16 %v2942, %v2941
        %v2998 = vpack.c.b16 %v2944, %v2943
        %v2999 = vpack.c.b16 %v2946, %v2945
        %v3000 = vpack.c.b16 %v2948, %v2947
        %v3001 = vpack.c.b16 %v2950, %v2949
        %v3002 = vpack.c.b16 %v2952, %v2951
        %v3003 = vpack.c.b16 %v2954, %v2953
        %v3004 = vpack.c.b16 %v2956, %v2955
        %v3005 = vpack.c.b16 %v2958, %v2957
        %v3006 = vpack.c.b16 %v2960, %v2959
        %v3007 = vpack.c.b16 %v2962, %v2961
        %v3008 = vpack.c.b16 %v2964, %v2963
        %v3009 = vpack.c.b16 %v2966, %v2965
        %v3010 = vpack.c.b16 %v2968, %v2967
        %v3011 = vpack.c.b16 %v2970, %v2969
        %v3012 = vpack.c.b16 %v2972, %v2971
        %v3013 = vpack.c.b16 %v2974, %v2973
        %v3014 = vpack.c.b16 %v2976, %v2975
        %v3015 = vpack.c.b16 %v2978, %v2977
        %v3016 = vpack.c.b16 %v2980, %v2979
        %v3017 = vpack.c.b16 %v2982, %v2981
        %v3018 = vpack.c.b16 %v2984, %v2983
        %v3019 = vpack.c.b16 %v2986, %v2985
        %v3020 = vpack.c.b16 %v2988, %v2987
        %3053 = vmatpush.bf16.msra.mxu0 %v2996
        %3054 = vmatpush.bf16.msra.mxu0 %v2995
        %3055 = vmatpush.bf16.msra.mxu0 %v2994
        %3056 = vmatpush.bf16.msra.mxu0 %v2993
        %3057 = vmatpush.bf16.msra.mxu0 %v2992
        %3058 = vmatpush.bf16.msra.mxu0 %v2991
        %3059 = vmatpush.bf16.msra.mxu0 %v2990
        %3060 = vmatpush.bf16.msra.mxu0 %v2989
        %3061 = vmatmul.bf16.gmra.mxu0 %v2789
        %v3062 = vpop.f32.mrf.mxu0
        %v3063 = vadd.f32 %v2859, %v3062
        %v3064 = vpop.f32.mrf.mxu0
        %3065 = vdwg.mxu0
        %3066 = vmatpush.bf16.msra.mxu0 %v3004
        %3067 = vmatpush.bf16.msra.mxu0 %v3003
        %3068 = vmatpush.bf16.msra.mxu0 %v3002
        %3069 = vmatpush.bf16.msra.mxu0 %v3001
        %3070 = vmatpush.bf16.msra.mxu0 %v3000
        %3071 = vmatpush.bf16.msra.mxu0 %v2999
        %3072 = vmatpush.bf16.msra.mxu0 %v2998
        %3073 = vmatpush.bf16.msra.mxu0 %v2997
        %3074 = vmatmul.bf16.gmra.mxu0 %v2790
        %v3075 = vpop.f32.mrf.mxu0
        %v3076 = vadd.f32 %v3063, %v3075
        %v3077 = vpop.f32.mrf.mxu0
        %3078 = vdwg.mxu0
        %3079 = vmatpush.bf16.msra.mxu0 %v3012
        %3080 = vmatpush.bf16.msra.mxu0 %v3011
        %3081 = vmatpush.bf16.msra.mxu0 %v3010
        %3082 = vmatpush.bf16.msra.mxu0 %v3009
        %3083 = vmatpush.bf16.msra.mxu0 %v3008
        %3084 = vmatpush.bf16.msra.mxu0 %v3007
        %3085 = vmatpush.bf16.msra.mxu0 %v3006
        %3086 = vmatpush.bf16.msra.mxu0 %v3005
        %3087 = vmatmul.bf16.gmra.mxu0 %v2791
        %v3088 = vpop.f32.mrf.mxu0
        %v3089 = vadd.f32 %v3076, %v3088
        %v3090 = vpop.f32.mrf.mxu0
        %3091 = vdwg.mxu0
        %3092 = vmatpush.bf16.msra.mxu0 %v3020
        %3093 = vmatpush.bf16.msra.mxu0 %v3019
        %3094 = vmatpush.bf16.msra.mxu0 %v3018
        %3095 = vmatpush.bf16.msra.mxu0 %v3017
        %3096 = vmatpush.bf16.msra.mxu0 %v3016
        %3097 = vmatpush.bf16.msra.mxu0 %v3015
        %3098 = vmatpush.bf16.msra.mxu0 %v3014
        %3099 = vmatpush.bf16.msra.mxu0 %v3013
        %3100 = vmatmul.bf16.gmra.mxu0 %v2792
        %v3101 = vpop.f32.mrf.mxu0
        %v3102 = vadd.f32 %v3089, %v3101
        %v3103 = vpop.f32.mrf.mxu0
        %3104 = vdwg.mxu0
        %v3105 = vadd.f32 %v2419, %v3102
        %3106 = vst [vmem:[%s654] sm:$0xff] %v3105
        %s3107 = sand.u32 %s378, 1
        %s3108 = scalar_lea.sflag [#allocation6], %s3107
        %s3109 = sand.u32 %s378, 1
        %s3110 = smul.addr %s3109, 8
        %s3111 = scalar_lea.vmem [#allocation19], %s3110
        // Predicated region
        $region121: #{tpu_custom_call.1} parent=79 // pred_check
          %p3112 = pneg %p388
        $region122: #{tpu_custom_call.1} parent=79 // pred_check_branch
          %3114 = sbr.rel (%p3112) target = $region124
        $region123: #{tpu_custom_call.1} parent=79 // pred_region
          %3116 = vsyncadd %s3108, 0
          %s3117 = smul.addr %s40, 2
          %s3118 = sadd.s32 %s41, %s3117
          %s3119 = smul.addr %s3118, 8
          %s3120 = scalar_lea.hbm %s15, %s3119
          %s3122 = sshll.u32 %s3111, 4
          %s3123 = int_to_ptr.vmem [resolvable:$true] %s3122
          %s3124 = sshll.u32 %s3120, 4
          %s3125 = int_to_ptr.hbm [resolvable:$true] %s3124
          %3127 = dma.vmem_to_hbm [thread:$0]  %s3123, 128, %s3125, %s3108
        $region124: #{tpu_custom_call.1} parent=79 // pred_fallthru
          _
      $region80: #{tpu_custom_call.1} parent=5 // pred_fallthru
        _
      %p3128 = scmp.le.s32.totalorder 2, %s31
      // Predicated region
      $region125: #{tpu_custom_call.1} parent=5 // pred_check
        %p3129 = pneg %p3128
      $region126: #{tpu_custom_call.1} parent=5 // pred_check_branch
        %3131 = sbr.rel (%p3129) target = $region128
      $region127: #{tpu_custom_call.1} parent=5 // pred_region
        %s3132 = ssub.s32 %s31, 2
        // Predicated region
        $region129: #{tpu_custom_call.1} parent=127 // pred_check
          %p3133 = pneg %p394
        $region130: #{tpu_custom_call.1} parent=127 // pred_check_branch
          %3135 = sbr.rel (%p3133) target = $region132
        $region131: #{tpu_custom_call.1} parent=127 // pred_region
          %s3136 = sand.u32 %s379, 1
          %s3137 = scalar_lea.sflag [#allocation6], %s3136
          %s3138 = sand.u32 %s379, 1
          %s3139 = smul.addr %s3138, 8
          %s3140 = scalar_lea.vmem [#allocation19], %s3139
          %3142 = dma.done %s3137, 128
        $region132: #{tpu_custom_call.1} parent=127 // pred_fallthru
          _
      $region128: #{tpu_custom_call.1} parent=5 // pred_fallthru
        _
    $region6: #{tpu_custom_call.1} parent=1 // loop_footer
      %s35 = sadd.s32 1, %s31
    $region7: #{tpu_custom_call.1} parent=1 // loop_footer_branch
      %30 = sbr.rel target = $region3
    $region8: #{tpu_custom_call.1} parent=1 // loop_exit
      _
    %3143 = vsyncpa [#allocation5], 1
    %s3144 = scalar_lea.sflag [#allocation5], 1
    %3145 = vsyncpa %s3144, 1
    %3146 = vsyncpa [#allocation8], 1
    %3147 = vsyncpa [#allocation11], 1
    %3148 = vsyncpa [#allocation14], 1
    %3149 = vsyncpa [#allocation17], 1
    %3150 = vsyncpa [#allocation6], 1
    %s3151 = scalar_lea.sflag [#allocation6], 1
    %3152 = vsyncpa %s3151, 1

</llo_original>
